<compile_context>
chip_gen: v7x
topology: tpu7x:2x2x1
jax: 0.10.0
libtpu: 0.0.40
codegen_flags: <defaults>
</compile_context>

<pallas_src>
import math

import jax
import jax.numpy as jnp
import numpy as np
from jax import lax
from jax.experimental import pallas as pl
from jax.experimental.pallas import tpu as pltpu


def _round_up(x, m):
    return ((x + m - 1) // m) * m


def _ceil_div(a, b):
    # integer ceil(a / b) for b > 0 (a may be negative)
    return -((-a) // b)


def _pick_block_n(n, per_sample_bytes, budget_bytes=8 * 1024 * 1024):
    """Largest divisor of n keeping per-step blocks under budget and (when
    possible) leaving a grid of >= 2 steps so both v7x TensorCores get work."""
    best = 1
    for d in range(1, n + 1):
        if n % d:
            continue
        if d * per_sample_bytes > budget_bytes:
            continue
        if n // d >= 2 or n == 1:
            best = max(best, d)
    return best


def unit_tcn_forward(x, conv_w, conv_b, bn_gamma, bn_beta, bn_mean, bn_var,
                     *, kernel_size=9, stride=1, eps=1e-5, compute_dtype=None):
    N, C_in, T, V = x.shape
    C_out = conv_w.shape[0]
    K = kernel_size
    S = stride
    pad = (K - 1) // 2
    T_out = (T + 2 * pad - K) // S + 1
    TVo = T_out * V

    C_in_p = _round_up(C_in, 8)      # sublane alignment of the contraction dim
    C_out_p = _round_up(C_out, 8)    # sublane alignment of the output channels

    if compute_dtype is None:
        # bf16 MXU operands when activations are bf16 (v6e/v7x fast path),
        # otherwise keep f32 operands (f32 accumulate either way).
        compute_dtype = jnp.bfloat16 if x.dtype == jnp.bfloat16 else jnp.float32

    # ---- glue: fold eval-mode BN into conv weights / bias (done in f32) ----
    f32 = jnp.float32
    scale = bn_gamma.astype(f32) * lax.rsqrt(bn_var.astype(f32) + eps)  # (C_out,)
    bias = (conv_b.astype(f32) - bn_mean.astype(f32)) * scale + bn_beta.astype(f32)

    w = conv_w[..., 0].astype(f32) * scale[:, None, None]     # (C_out, C_in, K)
    w = jnp.transpose(w, (2, 0, 1))                           # (K, C_out, C_in)
    w = jnp.pad(w, ((0, 0), (0, C_out_p - C_out), (0, C_in_p - C_in)))
    w = w.astype(compute_dtype)                               # (K, C_out_p, C_in_p)

    bias_tile = jnp.pad(jnp.broadcast_to(bias[:, None], (C_out, 128)),
                        ((0, C_out_p - C_out), (0, 0)))       # (C_out_p, 128) f32

    # ---- glue: polyphase input slabs (stride==1 -> just x, no pad copy) ----
    xc = x
    if C_in_p != C_in:
        xc = jnp.pad(xc, ((0, 0), (0, C_in_p - C_in), (0, 0), (0, 0)))

    # Phase r holds x[tau] for tau = S*u + r - pad with tau in [0, T); the
    # valid u-window [u0, u0+cnt) is static and yields clamped per-tap ranges.
    phase_meta = []
    for r in range(S):
        q_cnt = max(0, _ceil_div(K - r, S))          # taps with k = q*S + r
        u_lo = _ceil_div(pad - r, S)
        u_hi = _ceil_div(T + pad - r, S)
        u0 = max(0, u_lo)
        u1 = min(T_out - 1 + q_cnt, u_hi)
        phase_meta.append((u0, max(0, u1 - u0), q_cnt))
    L = max(max(cnt for _, cnt, _ in phase_meta), 1)

    slabs = []
    for r, (u0, cnt, _) in enumerate(phase_meta):
        if cnt == 0:
            slabs.append(jnp.zeros((N, C_in_p, L, V), xc.dtype))
            continue
        t0 = S * u0 + r - pad
        slab = xc[:, :, t0:t0 + S * (cnt - 1) + 1:S, :]       # stride-1: == xc
        if cnt < L:
            slab = jnp.pad(slab, ((0, 0), (0, 0), (0, L - cnt), (0, 0)))
        slabs.append(slab)
    x_ph = jnp.stack(slabs, axis=1).reshape(N, S, C_in_p, L * V)
    x_ph = x_ph.astype(compute_dtype)

    # Static tap table: (phase r, weight tap k, dst t range, src slab offset).
    taps = []
    for r, (u0, cnt, q_cnt) in enumerate(phase_meta):
        for q in range(q_cnt):
            k = q * S + r
            t_lo = max(0, u0 - q)
            t_hi = min(T_out, u0 + cnt - q)
            if t_hi <= t_lo:
                continue
            taps.append((r, k, t_lo, t_hi, t_lo + q - u0))

    # ---- choose how many samples to batch per grid step --------------------
    in_isz = jnp.dtype(compute_dtype).itemsize
    out_isz = jnp.dtype(x.dtype).itemsize
    per_sample = 2 * (S * C_in_p * L * V * in_isz + C_out_p * TVo * out_isz)
    Nb = _pick_block_n(N, per_sample)
    grid = (N // Nb,)

    # ---- kernel -------------------------------------------------------------
    def kernel(x_ref, w_ref, b_ref, o_ref, acc_ref):
        bias_col = b_ref[:, 0:1]                               # (C_out_p, 1) f32
        for n in range(Nb):                                    # static unroll
            # accumulator starts at the folded BN bias
            acc_ref[...] = jnp.broadcast_to(bias_col, (C_out_p, TVo))
            for (r, k, t_lo, t_hi, s_lo) in taps:              # static unroll
                cnt = t_hi - t_lo
                acc_ref[:, t_lo * V:t_hi * V] += jnp.dot(
                    w_ref[k],                                  # (C_out_p, C_in_p)
                    x_ref[n, r, :, s_lo * V:(s_lo + cnt) * V], # (C_in_p, cnt*V)
                    preferred_element_type=jnp.float32)
            o_ref[n] = acc_ref[...].astype(o_ref.dtype)

    out = pl.pallas_call(
        kernel,
        out_shape=jax.ShapeDtypeStruct((N, C_out_p, TVo), x.dtype),
        grid_spec=pltpu.PrefetchScalarGridSpec(
            num_scalar_prefetch=0,
            grid=grid,
            in_specs=[
                pl.BlockSpec((Nb, S, C_in_p, L * V), lambda i: (i, 0, 0, 0)),
                pl.BlockSpec((K, C_out_p, C_in_p), lambda i: (0, 0, 0)),
                pl.BlockSpec((C_out_p, 128), lambda i: (0, 0)),
            ],
            out_specs=pl.BlockSpec((Nb, C_out_p, TVo), lambda i: (i, 0, 0)),
            scratch_shapes=[pltpu.VMEM((C_out_p, TVo), jnp.float32)],
        ),
        compiler_params=pltpu.CompilerParams(
            dimension_semantics=("parallel",)),
    )(x_ph, w, bias_tile)

    out = out.reshape(N, C_out_p, T_out, V)
    if C_out_p != C_out:
        out = out[:, :C_out]
    return out


def unit_tcn_ref(x, conv_w, conv_b, bn_gamma, bn_beta, bn_mean, bn_var,
                 *, kernel_size=9, stride=1, eps=1e-5):
    """Plain-JAX reference (mirrors PyTorch NCHW conv + eval-mode BN)."""
    pad = (kernel_size - 1) // 2
    y = lax.conv_general_dilated(
        x.astype(jnp.float32), conv_w.astype(jnp.float32),
        window_strides=(stride, 1), padding=((pad, pad), (0, 0)),
        dimension_numbers=("NCHW", "OIHW", "NCHW"))
    y = y + conv_b.reshape(1, -1, 1, 1)
    g = bn_gamma.reshape(1, -1, 1, 1)
    b = bn_beta.reshape(1, -1, 1, 1)
    m = bn_mean.reshape(1, -1, 1, 1)
    v = bn_var.reshape(1, -1, 1, 1)
    return (y - m) * (g / jnp.sqrt(v + eps)) + b


if __name__ == "__main__":
    # Small shapes consistent with the module: x is (N, C_in, T, V).
    # N=8 so the sample-batching (Nb=4) and the 2-step grid are exercised.
    N, C_in, C_out, T, V = 8, 4, 8, 16, 16
    K = 9

    key = jax.random.PRNGKey(0)
    k_w, k_x = jax.random.split(key)

    # conv_init: kaiming_normal_(mode='fan_out') -> std = sqrt(2 / (C_out*K*1))
    fan_out = C_out * K * 1
    conv_w = jax.random.normal(k_w, (C_out, C_in, K, 1), jnp.float32) * math.sqrt(2.0 / fan_out)
    conv_b = jnp.zeros((C_out,), jnp.float32)          # conv_init: bias = 0
    # bn_init(bn, 1): gamma=1, beta=0; fresh running stats: mean=0, var=1
    bn_gamma = jnp.ones((C_out,), jnp.float32)
    bn_beta = jnp.zeros((C_out,), jnp.float32)
    bn_mean = jnp.zeros((C_out,), jnp.float32)
    bn_var = jnp.ones((C_out,), jnp.float32)
    params = (conv_w, conv_b, bn_gamma, bn_beta, bn_mean, bn_var)

    x = jax.random.normal(k_x, (N, C_in, T, V), jnp.float32)

    # stride=1 (module default), f32 operands
    out1 = jax.block_until_ready(unit_tcn_forward(x, *params, kernel_size=K, stride=1))
    ref1 = jax.block_until_ready(unit_tcn_ref(x, *params, kernel_size=K, stride=1))
    assert out1.shape == ref1.shape == (N, C_out, T, V)
    np.testing.assert_allclose(np.asarray(out1), np.asarray(ref1), rtol=1e-4, atol=1e-4)

    # stride=2 (exercises the polyphase strided path flagged in review)
    out2 = jax.block_until_ready(unit_tcn_forward(x, *params, kernel_size=K, stride=2))
    ref2 = jax.block_until_ready(unit_tcn_ref(x, *params, kernel_size=K, stride=2))
    assert out2.shape == ref2.shape == (N, C_out, (T + 2 * ((K - 1) // 2) - K) // 2 + 1, V)
    np.testing.assert_allclose(np.asarray(out2), np.asarray(ref2), rtol=1e-4, atol=1e-4)

    # bf16 activations -> bf16 MXU operands (f32 accumulate), looser tolerance
    out3 = jax.block_until_ready(
        unit_tcn_forward(x.astype(jnp.bfloat16), *params, kernel_size=K, stride=1))
    assert out3.shape == ref1.shape and out3.dtype == jnp.bfloat16
    np.testing.assert_allclose(np.asarray(out3, dtype=np.float32), np.asarray(ref1),
                               rtol=2e-2, atol=3e-2)

    print("KERNEL_OK")
</pallas_src>

<mosaic_0001>
module attributes {stable_mosaic.version = 11 : i64} {
  func.func @kernel(%arg0: i32, %arg1: memref<4x1x8x256xf32, #tpu.memory_space<vmem>>, %arg2: memref<9x8x8xf32, #tpu.memory_space<vmem>>, %arg3: memref<8x128xf32, #tpu.memory_space<vmem>>, %arg4: memref<4x8x256xf32, #tpu.memory_space<vmem>>, %arg5: memref<8x256xf32, #tpu.memory_space<vmem>>) attributes {dimension_semantics = [#tpu.dimension_semantics<parallel>], iteration_bounds = array<i64: 2>, scalar_prefetch = 0 : i64, scratch_operands = 1 : i64, tpu.core_type = #tpu.core_type<tc>, window_params = [{transform_indices = @transform_0, window_bounds = array<i64: 4, 1, 8, 256>}, {pipeline_mode = #tpu.pipeline_mode<synchronous>, transform_indices = @transform_1, window_bounds = array<i64: 9, 8, 8>}, {pipeline_mode = #tpu.pipeline_mode<synchronous>, transform_indices = @transform_2, window_bounds = array<i64: 8, 128>}, {transform_indices = @transform_3, window_bounds = array<i64: 4, 8, 256>}]} {
    %c0 = arith.constant 0 : index
    %c0_0 = arith.constant 0 : index
    %0 = vector.load %arg3[%c0, %c0_0] : memref<8x128xf32, #tpu.memory_space<vmem>>, vector<8x1xf32>
    %1 = vector.shape_cast %0 : vector<8x1xf32> to vector<8x1xf32>
    %2 = vector.broadcast %1 : vector<8x1xf32> to vector<8x256xf32>
    %c0_1 = arith.constant 0 : index
    %c0_2 = arith.constant 0 : index
    %3 = vector.load %arg5[%c0_1, %c0_2] : memref<8x256xf32, #tpu.memory_space<vmem>>, vector<8x256xf32>
    tpu.vector_store %arg5[%c0_1, %c0_2], %2 {strides = array<i32>} : memref<8x256xf32, #tpu.memory_space<vmem>>, vector<8x256xf32>,
    %c0_3 = arith.constant 0 : index
    %c64 = arith.constant 64 : index
    %4 = vector.load %arg5[%c0_3, %c64] : memref<8x256xf32, #tpu.memory_space<vmem>>, vector<8x192xf32>
    %c0_4 = arith.constant 0 : index
    %c0_5 = arith.constant 0 : index
    %c0_6 = arith.constant 0 : index
    %5 = vector.load %arg2[%c0_4, %c0_5, %c0_6] : memref<9x8x8xf32, #tpu.memory_space<vmem>>, vector<1x8x8xf32>
    %6 = vector.shape_cast %5 : vector<1x8x8xf32> to vector<8x8xf32>
    %c0_7 = arith.constant 0 : index
    %c0_8 = arith.constant 0 : index
    %c0_9 = arith.constant 0 : index
    %c0_10 = arith.constant 0 : index
    %7 = vector.load %arg1[%c0_7, %c0_8, %c0_9, %c0_10] : memref<4x1x8x256xf32, #tpu.memory_space<vmem>>, vector<1x1x8x192xf32>
    %8 = vector.shape_cast %7 : vector<1x1x8x192xf32> to vector<8x192xf32>
    %cst = arith.constant dense<0.000000e+00> : vector<8x192xf32>
    %9 = tpu.matmul %6, %8, %cst {dimension_numbers = #tpu.dot_dimension_numbers<[1], [0], [0], [1], [0, 0, 1, 1], [], []>} : vector<8x8xf32>, vector<8x192xf32>, vector<8x192xf32> -> vector<8x192xf32>
    %10 = arith.addf %4, %9 : vector<8x192xf32>
    %c0_11 = arith.constant 0 : index
    %c64_12 = arith.constant 64 : index
    %11 = vector.load %arg5[%c0_11, %c64_12] : memref<8x256xf32, #tpu.memory_space<vmem>>, vector<8x192xf32>
    tpu.vector_store %arg5[%c0_11, %c64_12], %10 {strides = array<i32>} : memref<8x256xf32, #tpu.memory_space<vmem>>, vector<8x192xf32>,
    %c0_13 = arith.constant 0 : index
    %c48 = arith.constant 48 : index
    %12 = vector.load %arg5[%c0_13, %c48] : memref<8x256xf32, #tpu.memory_space<vmem>>, vector<8x208xf32>
    %c1 = arith.constant 1 : index
    %c0_14 = arith.constant 0 : index
    %c0_15 = arith.constant 0 : index
    %13 = vector.load %arg2[%c1, %c0_14, %c0_15] : memref<9x8x8xf32, #tpu.memory_space<vmem>>, vector<1x8x8xf32>
    %14 = vector.shape_cast %13 : vector<1x8x8xf32> to vector<8x8xf32>
    %c0_16 = arith.constant 0 : index
    %c0_17 = arith.constant 0 : index
    %c0_18 = arith.constant 0 : index
    %c0_19 = arith.constant 0 : index
    %15 = vector.load %arg1[%c0_16, %c0_17, %c0_18, %c0_19] : memref<4x1x8x256xf32, #tpu.memory_space<vmem>>, vector<1x1x8x208xf32>
    %16 = vector.shape_cast %15 : vector<1x1x8x208xf32> to vector<8x208xf32>
    %cst_20 = arith.constant dense<0.000000e+00> : vector<8x208xf32>
    %17 = tpu.matmul %14, %16, %cst_20 {dimension_numbers = #tpu.dot_dimension_numbers<[1], [0], [0], [1], [0, 0, 1, 1], [], []>} : vector<8x8xf32>, vector<8x208xf32>, vector<8x208xf32> -> vector<8x208xf32>
    %18 = arith.addf %12, %17 : vector<8x208xf32>
    %c0_21 = arith.constant 0 : index
    %c48_22 = arith.constant 48 : index
    %19 = vector.load %arg5[%c0_21, %c48_22] : memref<8x256xf32, #tpu.memory_space<vmem>>, vector<8x208xf32>
    tpu.vector_store %arg5[%c0_21, %c48_22], %18 {strides = array<i32>} : memref<8x256xf32, #tpu.memory_space<vmem>>, vector<8x208xf32>,
    %c0_23 = arith.constant 0 : index
    %c32 = arith.constant 32 : index
    %20 = vector.load %arg5[%c0_23, %c32] : memref<8x256xf32, #tpu.memory_space<vmem>>, vector<8x224xf32>
    %c2 = arith.constant 2 : index
    %c0_24 = arith.constant 0 : index
    %c0_25 = arith.constant 0 : index
    %21 = vector.load %arg2[%c2, %c0_24, %c0_25] : memref<9x8x8xf32, #tpu.memory_space<vmem>>, vector<1x8x8xf32>
    %22 = vector.shape_cast %21 : vector<1x8x8xf32> to vector<8x8xf32>
    %c0_26 = arith.constant 0 : index
    %c0_27 = arith.constant 0 : index
    %c0_28 = arith.constant 0 : index
    %c0_29 = arith.constant 0 : index
    %23 = vector.load %arg1[%c0_26, %c0_27, %c0_28, %c0_29] : memref<4x1x8x256xf32, #tpu.memory_space<vmem>>, vector<1x1x8x224xf32>
    %24 = vector.shape_cast %23 : vector<1x1x8x224xf32> to vector<8x224xf32>
    %cst_30 = arith.constant dense<0.000000e+00> : vector<8x224xf32>
    %25 = tpu.matmul %22, %24, %cst_30 {dimension_numbers = #tpu.dot_dimension_numbers<[1], [0], [0], [1], [0, 0, 1, 1], [], []>} : vector<8x8xf32>, vector<8x224xf32>, vector<8x224xf32> -> vector<8x224xf32>
    %26 = arith.addf %20, %25 : vector<8x224xf32>
    %c0_31 = arith.constant 0 : index
    %c32_32 = arith.constant 32 : index
    %27 = vector.load %arg5[%c0_31, %c32_32] : memref<8x256xf32, #tpu.memory_space<vmem>>, vector<8x224xf32>
    tpu.vector_store %arg5[%c0_31, %c32_32], %26 {strides = array<i32>} : memref<8x256xf32, #tpu.memory_space<vmem>>, vector<8x224xf32>,
    %c0_33 = arith.constant 0 : index
    %c16 = arith.constant 16 : index
    %28 = vector.load %arg5[%c0_33, %c16] : memref<8x256xf32, #tpu.memory_space<vmem>>, vector<8x240xf32>
    %c3 = arith.constant 3 : index
    %c0_34 = arith.constant 0 : index
    %c0_35 = arith.constant 0 : index
    %29 = vector.load %arg2[%c3, %c0_34, %c0_35] : memref<9x8x8xf32, #tpu.memory_space<vmem>>, vector<1x8x8xf32>
    %30 = vector.shape_cast %29 : vector<1x8x8xf32> to vector<8x8xf32>
    %c0_36 = arith.constant 0 : index
    %c0_37 = arith.constant 0 : index
    %c0_38 = arith.constant 0 : index
    %c0_39 = arith.constant 0 : index
    %31 = vector.load %arg1[%c0_36, %c0_37, %c0_38, %c0_39] : memref<4x1x8x256xf32, #tpu.memory_space<vmem>>, vector<1x1x8x240xf32>
    %32 = vector.shape_cast %31 : vector<1x1x8x240xf32> to vector<8x240xf32>
    %cst_40 = arith.constant dense<0.000000e+00> : vector<8x240xf32>
    %33 = tpu.matmul %30, %32, %cst_40 {dimension_numbers = #tpu.dot_dimension_numbers<[1], [0], [0], [1], [0, 0, 1, 1], [], []>} : vector<8x8xf32>, vector<8x240xf32>, vector<8x240xf32> -> vector<8x240xf32>
    %34 = arith.addf %28, %33 : vector<8x240xf32>
    %c0_41 = arith.constant 0 : index
    %c16_42 = arith.constant 16 : index
    %35 = vector.load %arg5[%c0_41, %c16_42] : memref<8x256xf32, #tpu.memory_space<vmem>>, vector<8x240xf32>
    tpu.vector_store %arg5[%c0_41, %c16_42], %34 {strides = array<i32>} : memref<8x256xf32, #tpu.memory_space<vmem>>, vector<8x240xf32>,
    %c0_43 = arith.constant 0 : index
    %c0_44 = arith.constant 0 : index
    %36 = vector.load %arg5[%c0_43, %c0_44] : memref<8x256xf32, #tpu.memory_space<vmem>>, vector<8x256xf32>
    %c4 = arith.constant 4 : index
    %c0_45 = arith.constant 0 : index
    %c0_46 = arith.constant 0 : index
    %37 = vector.load %arg2[%c4, %c0_45, %c0_46] : memref<9x8x8xf32, #tpu.memory_space<vmem>>, vector<1x8x8xf32>
    %38 = vector.shape_cast %37 : vector<1x8x8xf32> to vector<8x8xf32>
    %c0_47 = arith.constant 0 : index
    %c0_48 = arith.constant 0 : index
    %c0_49 = arith.constant 0 : index
    %c0_50 = arith.constant 0 : index
    %39 = vector.load %arg1[%c0_47, %c0_48, %c0_49, %c0_50] : memref<4x1x8x256xf32, #tpu.memory_space<vmem>>, vector<1x1x8x256xf32>
    %40 = vector.shape_cast %39 : vector<1x1x8x256xf32> to vector<8x256xf32>
    %cst_51 = arith.constant dense<0.000000e+00> : vector<8x256xf32>
    %41 = tpu.matmul %38, %40, %cst_51 {dimension_numbers = #tpu.dot_dimension_numbers<[1], [0], [0], [1], [0, 0, 1, 1], [], []>} : vector<8x8xf32>, vector<8x256xf32>, vector<8x256xf32> -> vector<8x256xf32>
    %42 = arith.addf %36, %41 : vector<8x256xf32>
    %c0_52 = arith.constant 0 : index
    %c0_53 = arith.constant 0 : index
    %43 = vector.load %arg5[%c0_52, %c0_53] : memref<8x256xf32, #tpu.memory_space<vmem>>, vector<8x256xf32>
    tpu.vector_store %arg5[%c0_52, %c0_53], %42 {strides = array<i32>} : memref<8x256xf32, #tpu.memory_space<vmem>>, vector<8x256xf32>,
    %c0_54 = arith.constant 0 : index
    %c0_55 = arith.constant 0 : index
    %44 = vector.load %arg5[%c0_54, %c0_55] : memref<8x256xf32, #tpu.memory_space<vmem>>, vector<8x240xf32>
    %c5 = arith.constant 5 : index
    %c0_56 = arith.constant 0 : index
    %c0_57 = arith.constant 0 : index
    %45 = vector.load %arg2[%c5, %c0_56, %c0_57] : memref<9x8x8xf32, #tpu.memory_space<vmem>>, vector<1x8x8xf32>
    %46 = vector.shape_cast %45 : vector<1x8x8xf32> to vector<8x8xf32>
    %c0_58 = arith.constant 0 : index
    %c0_59 = arith.constant 0 : index
    %c0_60 = arith.constant 0 : index
    %c16_61 = arith.constant 16 : index
    %47 = vector.load %arg1[%c0_58, %c0_59, %c0_60, %c16_61] : memref<4x1x8x256xf32, #tpu.memory_space<vmem>>, vector<1x1x8x240xf32>
    %48 = vector.shape_cast %47 : vector<1x1x8x240xf32> to vector<8x240xf32>
    %cst_62 = arith.constant dense<0.000000e+00> : vector<8x240xf32>
    %49 = tpu.matmul %46, %48, %cst_62 {dimension_numbers = #tpu.dot_dimension_numbers<[1], [0], [0], [1], [0, 0, 1, 1], [], []>} : vector<8x8xf32>, vector<8x240xf32>, vector<8x240xf32> -> vector<8x240xf32>
    %50 = arith.addf %44, %49 : vector<8x240xf32>
    %c0_63 = arith.constant 0 : index
    %c0_64 = arith.constant 0 : index
    %51 = vector.load %arg5[%c0_63, %c0_64] : memref<8x256xf32, #tpu.memory_space<vmem>>, vector<8x240xf32>
    tpu.vector_store %arg5[%c0_63, %c0_64], %50 {strides = array<i32>} : memref<8x256xf32, #tpu.memory_space<vmem>>, vector<8x240xf32>,
    %c0_65 = arith.constant 0 : index
    %c0_66 = arith.constant 0 : index
    %52 = vector.load %arg5[%c0_65, %c0_66] : memref<8x256xf32, #tpu.memory_space<vmem>>, vector<8x224xf32>
    %c6 = arith.constant 6 : index
    %c0_67 = arith.constant 0 : index
    %c0_68 = arith.constant 0 : index
    %53 = vector.load %arg2[%c6, %c0_67, %c0_68] : memref<9x8x8xf32, #tpu.memory_space<vmem>>, vector<1x8x8xf32>
    %54 = vector.shape_cast %53 : vector<1x8x8xf32> to vector<8x8xf32>
    %c0_69 = arith.constant 0 : index
    %c0_70 = arith.constant 0 : index
    %c0_71 = arith.constant 0 : index
    %c32_72 = arith.constant 32 : index
    %55 = vector.load %arg1[%c0_69, %c0_70, %c0_71, %c32_72] : memref<4x1x8x256xf32, #tpu.memory_space<vmem>>, vector<1x1x8x224xf32>
    %56 = vector.shape_cast %55 : vector<1x1x8x224xf32> to vector<8x224xf32>
    %cst_73 = arith.constant dense<0.000000e+00> : vector<8x224xf32>
    %57 = tpu.matmul %54, %56, %cst_73 {dimension_numbers = #tpu.dot_dimension_numbers<[1], [0], [0], [1], [0, 0, 1, 1], [], []>} : vector<8x8xf32>, vector<8x224xf32>, vector<8x224xf32> -> vector<8x224xf32>
    %58 = arith.addf %52, %57 : vector<8x224xf32>
    %c0_74 = arith.constant 0 : index
    %c0_75 = arith.constant 0 : index
    %59 = vector.load %arg5[%c0_74, %c0_75] : memref<8x256xf32, #tpu.memory_space<vmem>>, vector<8x224xf32>
    tpu.vector_store %arg5[%c0_74, %c0_75], %58 {strides = array<i32>} : memref<8x256xf32, #tpu.memory_space<vmem>>, vector<8x224xf32>,
    %c0_76 = arith.constant 0 : index
    %c0_77 = arith.constant 0 : index
    %60 = vector.load %arg5[%c0_76, %c0_77] : memref<8x256xf32, #tpu.memory_space<vmem>>, vector<8x208xf32>
    %c7 = arith.constant 7 : index
    %c0_78 = arith.constant 0 : index
    %c0_79 = arith.constant 0 : index
    %61 = vector.load %arg2[%c7, %c0_78, %c0_79] : memref<9x8x8xf32, #tpu.memory_space<vmem>>, vector<1x8x8xf32>
    %62 = vector.shape_cast %61 : vector<1x8x8xf32> to vector<8x8xf32>
    %c0_80 = arith.constant 0 : index
    %c0_81 = arith.constant 0 : index
    %c0_82 = arith.constant 0 : index
    %c48_83 = arith.constant 48 : index
    %63 = vector.load %arg1[%c0_80, %c0_81, %c0_82, %c48_83] : memref<4x1x8x256xf32, #tpu.memory_space<vmem>>, vector<1x1x8x208xf32>
    %64 = vector.shape_cast %63 : vector<1x1x8x208xf32> to vector<8x208xf32>
    %cst_84 = arith.constant dense<0.000000e+00> : vector<8x208xf32>
    %65 = tpu.matmul %62, %64, %cst_84 {dimension_numbers = #tpu.dot_dimension_numbers<[1], [0], [0], [1], [0, 0, 1, 1], [], []>} : vector<8x8xf32>, vector<8x208xf32>, vector<8x208xf32> -> vector<8x208xf32>
    %66 = arith.addf %60, %65 : vector<8x208xf32>
    %c0_85 = arith.constant 0 : index
    %c0_86 = arith.constant 0 : index
    %67 = vector.load %arg5[%c0_85, %c0_86] : memref<8x256xf32, #tpu.memory_space<vmem>>, vector<8x208xf32>
    tpu.vector_store %arg5[%c0_85, %c0_86], %66 {strides = array<i32>} : memref<8x256xf32, #tpu.memory_space<vmem>>, vector<8x208xf32>,
    %c0_87 = arith.constant 0 : index
    %c0_88 = arith.constant 0 : index
    %68 = vector.load %arg5[%c0_87, %c0_88] : memref<8x256xf32, #tpu.memory_space<vmem>>, vector<8x192xf32>
    %c8 = arith.constant 8 : index
    %c0_89 = arith.constant 0 : index
    %c0_90 = arith.constant 0 : index
    %69 = vector.load %arg2[%c8, %c0_89, %c0_90] : memref<9x8x8xf32, #tpu.memory_space<vmem>>, vector<1x8x8xf32>
    %70 = vector.shape_cast %69 : vector<1x8x8xf32> to vector<8x8xf32>
    %c0_91 = arith.constant 0 : index
    %c0_92 = arith.constant 0 : index
    %c0_93 = arith.constant 0 : index
    %c64_94 = arith.constant 64 : index
    %71 = vector.load %arg1[%c0_91, %c0_92, %c0_93, %c64_94] : memref<4x1x8x256xf32, #tpu.memory_space<vmem>>, vector<1x1x8x192xf32>
    %72 = vector.shape_cast %71 : vector<1x1x8x192xf32> to vector<8x192xf32>
    %cst_95 = arith.constant dense<0.000000e+00> : vector<8x192xf32>
    %73 = tpu.matmul %70, %72, %cst_95 {dimension_numbers = #tpu.dot_dimension_numbers<[1], [0], [0], [1], [0, 0, 1, 1], [], []>} : vector<8x8xf32>, vector<8x192xf32>, vector<8x192xf32> -> vector<8x192xf32>
    %74 = arith.addf %68, %73 : vector<8x192xf32>
    %c0_96 = arith.constant 0 : index
    %c0_97 = arith.constant 0 : index
    %75 = vector.load %arg5[%c0_96, %c0_97] : memref<8x256xf32, #tpu.memory_space<vmem>>, vector<8x192xf32>
    tpu.vector_store %arg5[%c0_96, %c0_97], %74 {strides = array<i32>} : memref<8x256xf32, #tpu.memory_space<vmem>>, vector<8x192xf32>,
    %c0_98 = arith.constant 0 : index
    %c0_99 = arith.constant 0 : index
    %76 = vector.load %arg5[%c0_98, %c0_99] : memref<8x256xf32, #tpu.memory_space<vmem>>, vector<8x256xf32>
    %c0_100 = arith.constant 0 : index
    %c0_101 = arith.constant 0 : index
    %c0_102 = arith.constant 0 : index
    %77 = vector.load %arg4[%c0_100, %c0_101, %c0_102] : memref<4x8x256xf32, #tpu.memory_space<vmem>>, vector<1x8x256xf32>
    %78 = vector.shape_cast %77 : vector<1x8x256xf32> to vector<8x256xf32>
    %79 = vector.shape_cast %76 : vector<8x256xf32> to vector<1x8x256xf32>
    tpu.vector_store %arg4[%c0_100, %c0_101, %c0_102], %79 {strides = array<i32>} : memref<4x8x256xf32, #tpu.memory_space<vmem>>, vector<1x8x256xf32>,
    %80 = vector.shape_cast %0 : vector<8x1xf32> to vector<8x1xf32>
    %81 = vector.broadcast %80 : vector<8x1xf32> to vector<8x256xf32>
    %c0_103 = arith.constant 0 : index
    %c0_104 = arith.constant 0 : index
    %82 = vector.load %arg5[%c0_103, %c0_104] : memref<8x256xf32, #tpu.memory_space<vmem>>, vector<8x256xf32>
    tpu.vector_store %arg5[%c0_103, %c0_104], %81 {strides = array<i32>} : memref<8x256xf32, #tpu.memory_space<vmem>>, vector<8x256xf32>,
    %c0_105 = arith.constant 0 : index
    %c64_106 = arith.constant 64 : index
    %83 = vector.load %arg5[%c0_105, %c64_106] : memref<8x256xf32, #tpu.memory_space<vmem>>, vector<8x192xf32>
    %c0_107 = arith.constant 0 : index
    %c0_108 = arith.constant 0 : index
    %c0_109 = arith.constant 0 : index
    %84 = vector.load %arg2[%c0_107, %c0_108, %c0_109] : memref<9x8x8xf32, #tpu.memory_space<vmem>>, vector<1x8x8xf32>
    %85 = vector.shape_cast %84 : vector<1x8x8xf32> to vector<8x8xf32>
    %c1_110 = arith.constant 1 : index
    %c0_111 = arith.constant 0 : index
    %c0_112 = arith.constant 0 : index
    %c0_113 = arith.constant 0 : index
    %86 = vector.load %arg1[%c1_110, %c0_111, %c0_112, %c0_113] : memref<4x1x8x256xf32, #tpu.memory_space<vmem>>, vector<1x1x8x192xf32>
    %87 = vector.shape_cast %86 : vector<1x1x8x192xf32> to vector<8x192xf32>
    %cst_114 = arith.constant dense<0.000000e+00> : vector<8x192xf32>
    %88 = tpu.matmul %85, %87, %cst_114 {dimension_numbers = #tpu.dot_dimension_numbers<[1], [0], [0], [1], [0, 0, 1, 1], [], []>} : vector<8x8xf32>, vector<8x192xf32>, vector<8x192xf32> -> vector<8x192xf32>
    %89 = arith.addf %83, %88 : vector<8x192xf32>
    %c0_115 = arith.constant 0 : index
    %c64_116 = arith.constant 64 : index
    %90 = vector.load %arg5[%c0_115, %c64_116] : memref<8x256xf32, #tpu.memory_space<vmem>>, vector<8x192xf32>
    tpu.vector_store %arg5[%c0_115, %c64_116], %89 {strides = array<i32>} : memref<8x256xf32, #tpu.memory_space<vmem>>, vector<8x192xf32>,
    %c0_117 = arith.constant 0 : index
    %c48_118 = arith.constant 48 : index
    %91 = vector.load %arg5[%c0_117, %c48_118] : memref<8x256xf32, #tpu.memory_space<vmem>>, vector<8x208xf32>
    %c1_119 = arith.constant 1 : index
    %c0_120 = arith.constant 0 : index
    %c0_121 = arith.constant 0 : index
    %92 = vector.load %arg2[%c1_119, %c0_120, %c0_121] : memref<9x8x8xf32, #tpu.memory_space<vmem>>, vector<1x8x8xf32>
    %93 = vector.shape_cast %92 : vector<1x8x8xf32> to vector<8x8xf32>
    %c1_122 = arith.constant 1 : index
    %c0_123 = arith.constant 0 : index
    %c0_124 = arith.constant 0 : index
    %c0_125 = arith.constant 0 : index
    %94 = vector.load %arg1[%c1_122, %c0_123, %c0_124, %c0_125] : memref<4x1x8x256xf32, #tpu.memory_space<vmem>>, vector<1x1x8x208xf32>
    %95 = vector.shape_cast %94 : vector<1x1x8x208xf32> to vector<8x208xf32>
    %cst_126 = arith.constant dense<0.000000e+00> : vector<8x208xf32>
    %96 = tpu.matmul %93, %95, %cst_126 {dimension_numbers = #tpu.dot_dimension_numbers<[1], [0], [0], [1], [0, 0, 1, 1], [], []>} : vector<8x8xf32>, vector<8x208xf32>, vector<8x208xf32> -> vector<8x208xf32>
    %97 = arith.addf %91, %96 : vector<8x208xf32>
    %c0_127 = arith.constant 0 : index
    %c48_128 = arith.constant 48 : index
    %98 = vector.load %arg5[%c0_127, %c48_128] : memref<8x256xf32, #tpu.memory_space<vmem>>, vector<8x208xf32>
    tpu.vector_store %arg5[%c0_127, %c48_128], %97 {strides = array<i32>} : memref<8x256xf32, #tpu.memory_space<vmem>>, vector<8x208xf32>,
    %c0_129 = arith.constant 0 : index
    %c32_130 = arith.constant 32 : index
    %99 = vector.load %arg5[%c0_129, %c32_130] : memref<8x256xf32, #tpu.memory_space<vmem>>, vector<8x224xf32>
    %c2_131 = arith.constant 2 : index
    %c0_132 = arith.constant 0 : index
    %c0_133 = arith.constant 0 : index
    %100 = vector.load %arg2[%c2_131, %c0_132, %c0_133] : memref<9x8x8xf32, #tpu.memory_space<vmem>>, vector<1x8x8xf32>
    %101 = vector.shape_cast %100 : vector<1x8x8xf32> to vector<8x8xf32>
    %c1_134 = arith.constant 1 : index
    %c0_135 = arith.constant 0 : index
    %c0_136 = arith.constant 0 : index
    %c0_137 = arith.constant 0 : index
    %102 = vector.load %arg1[%c1_134, %c0_135, %c0_136, %c0_137] : memref<4x1x8x256xf32, #tpu.memory_space<vmem>>, vector<1x1x8x224xf32>
    %103 = vector.shape_cast %102 : vector<1x1x8x224xf32> to vector<8x224xf32>
    %cst_138 = arith.constant dense<0.000000e+00> : vector<8x224xf32>
    %104 = tpu.matmul %101, %103, %cst_138 {dimension_numbers = #tpu.dot_dimension_numbers<[1], [0], [0], [1], [0, 0, 1, 1], [], []>} : vector<8x8xf32>, vector<8x224xf32>, vector<8x224xf32> -> vector<8x224xf32>
    %105 = arith.addf %99, %104 : vector<8x224xf32>
    %c0_139 = arith.constant 0 : index
    %c32_140 = arith.constant 32 : index
    %106 = vector.load %arg5[%c0_139, %c32_140] : memref<8x256xf32, #tpu.memory_space<vmem>>, vector<8x224xf32>
    tpu.vector_store %arg5[%c0_139, %c32_140], %105 {strides = array<i32>} : memref<8x256xf32, #tpu.memory_space<vmem>>, vector<8x224xf32>,
    %c0_141 = arith.constant 0 : index
    %c16_142 = arith.constant 16 : index
    %107 = vector.load %arg5[%c0_141, %c16_142] : memref<8x256xf32, #tpu.memory_space<vmem>>, vector<8x240xf32>
    %c3_143 = arith.constant 3 : index
    %c0_144 = arith.constant 0 : index
    %c0_145 = arith.constant 0 : index
    %108 = vector.load %arg2[%c3_143, %c0_144, %c0_145] : memref<9x8x8xf32, #tpu.memory_space<vmem>>, vector<1x8x8xf32>
    %109 = vector.shape_cast %108 : vector<1x8x8xf32> to vector<8x8xf32>
    %c1_146 = arith.constant 1 : index
    %c0_147 = arith.constant 0 : index
    %c0_148 = arith.constant 0 : index
    %c0_149 = arith.constant 0 : index
    %110 = vector.load %arg1[%c1_146, %c0_147, %c0_148, %c0_149] : memref<4x1x8x256xf32, #tpu.memory_space<vmem>>, vector<1x1x8x240xf32>
    %111 = vector.shape_cast %110 : vector<1x1x8x240xf32> to vector<8x240xf32>
    %cst_150 = arith.constant dense<0.000000e+00> : vector<8x240xf32>
    %112 = tpu.matmul %109, %111, %cst_150 {dimension_numbers = #tpu.dot_dimension_numbers<[1], [0], [0], [1], [0, 0, 1, 1], [], []>} : vector<8x8xf32>, vector<8x240xf32>, vector<8x240xf32> -> vector<8x240xf32>
    %113 = arith.addf %107, %112 : vector<8x240xf32>
    %c0_151 = arith.constant 0 : index
    %c16_152 = arith.constant 16 : index
    %114 = vector.load %arg5[%c0_151, %c16_152] : memref<8x256xf32, #tpu.memory_space<vmem>>, vector<8x240xf32>
    tpu.vector_store %arg5[%c0_151, %c16_152], %113 {strides = array<i32>} : memref<8x256xf32, #tpu.memory_space<vmem>>, vector<8x240xf32>,
    %c0_153 = arith.constant 0 : index
    %c0_154 = arith.constant 0 : index
    %115 = vector.load %arg5[%c0_153, %c0_154] : memref<8x256xf32, #tpu.memory_space<vmem>>, vector<8x256xf32>
    %c4_155 = arith.constant 4 : index
    %c0_156 = arith.constant 0 : index
    %c0_157 = arith.constant 0 : index
    %116 = vector.load %arg2[%c4_155, %c0_156, %c0_157] : memref<9x8x8xf32, #tpu.memory_space<vmem>>, vector<1x8x8xf32>
    %117 = vector.shape_cast %116 : vector<1x8x8xf32> to vector<8x8xf32>
    %c1_158 = arith.constant 1 : index
    %c0_159 = arith.constant 0 : index
    %c0_160 = arith.constant 0 : index
    %c0_161 = arith.constant 0 : index
    %118 = vector.load %arg1[%c1_158, %c0_159, %c0_160, %c0_161] : memref<4x1x8x256xf32, #tpu.memory_space<vmem>>, vector<1x1x8x256xf32>
    %119 = vector.shape_cast %118 : vector<1x1x8x256xf32> to vector<8x256xf32>
    %cst_162 = arith.constant dense<0.000000e+00> : vector<8x256xf32>
    %120 = tpu.matmul %117, %119, %cst_162 {dimension_numbers = #tpu.dot_dimension_numbers<[1], [0], [0], [1], [0, 0, 1, 1], [], []>} : vector<8x8xf32>, vector<8x256xf32>, vector<8x256xf32> -> vector<8x256xf32>
    %121 = arith.addf %115, %120 : vector<8x256xf32>
    %c0_163 = arith.constant 0 : index
    %c0_164 = arith.constant 0 : index
    %122 = vector.load %arg5[%c0_163, %c0_164] : memref<8x256xf32, #tpu.memory_space<vmem>>, vector<8x256xf32>
    tpu.vector_store %arg5[%c0_163, %c0_164], %121 {strides = array<i32>} : memref<8x256xf32, #tpu.memory_space<vmem>>, vector<8x256xf32>,
    %c0_165 = arith.constant 0 : index
    %c0_166 = arith.constant 0 : index
    %123 = vector.load %arg5[%c0_165, %c0_166] : memref<8x256xf32, #tpu.memory_space<vmem>>, vector<8x240xf32>
    %c5_167 = arith.constant 5 : index
    %c0_168 = arith.constant 0 : index
    %c0_169 = arith.constant 0 : index
    %124 = vector.load %arg2[%c5_167, %c0_168, %c0_169] : memref<9x8x8xf32, #tpu.memory_space<vmem>>, vector<1x8x8xf32>
    %125 = vector.shape_cast %124 : vector<1x8x8xf32> to vector<8x8xf32>
    %c1_170 = arith.constant 1 : index
    %c0_171 = arith.constant 0 : index
    %c0_172 = arith.constant 0 : index
    %c16_173 = arith.constant 16 : index
    %126 = vector.load %arg1[%c1_170, %c0_171, %c0_172, %c16_173] : memref<4x1x8x256xf32, #tpu.memory_space<vmem>>, vector<1x1x8x240xf32>
    %127 = vector.shape_cast %126 : vector<1x1x8x240xf32> to vector<8x240xf32>
    %cst_174 = arith.constant dense<0.000000e+00> : vector<8x240xf32>
    %128 = tpu.matmul %125, %127, %cst_174 {dimension_numbers = #tpu.dot_dimension_numbers<[1], [0], [0], [1], [0, 0, 1, 1], [], []>} : vector<8x8xf32>, vector<8x240xf32>, vector<8x240xf32> -> vector<8x240xf32>
    %129 = arith.addf %123, %128 : vector<8x240xf32>
    %c0_175 = arith.constant 0 : index
    %c0_176 = arith.constant 0 : index
    %130 = vector.load %arg5[%c0_175, %c0_176] : memref<8x256xf32, #tpu.memory_space<vmem>>, vector<8x240xf32>
    tpu.vector_store %arg5[%c0_175, %c0_176], %129 {strides = array<i32>} : memref<8x256xf32, #tpu.memory_space<vmem>>, vector<8x240xf32>,
    %c0_177 = arith.constant 0 : index
    %c0_178 = arith.constant 0 : index
    %131 = vector.load %arg5[%c0_177, %c0_178] : memref<8x256xf32, #tpu.memory_space<vmem>>, vector<8x224xf32>
    %c6_179 = arith.constant 6 : index
    %c0_180 = arith.constant 0 : index
    %c0_181 = arith.constant 0 : index
    %132 = vector.load %arg2[%c6_179, %c0_180, %c0_181] : memref<9x8x8xf32, #tpu.memory_space<vmem>>, vector<1x8x8xf32>
    %133 = vector.shape_cast %132 : vector<1x8x8xf32> to vector<8x8xf32>
    %c1_182 = arith.constant 1 : index
    %c0_183 = arith.constant 0 : index
    %c0_184 = arith.constant 0 : index
    %c32_185 = arith.constant 32 : index
    %134 = vector.load %arg1[%c1_182, %c0_183, %c0_184, %c32_185] : memref<4x1x8x256xf32, #tpu.memory_space<vmem>>, vector<1x1x8x224xf32>
    %135 = vector.shape_cast %134 : vector<1x1x8x224xf32> to vector<8x224xf32>
    %cst_186 = arith.constant dense<0.000000e+00> : vector<8x224xf32>
    %136 = tpu.matmul %133, %135, %cst_186 {dimension_numbers = #tpu.dot_dimension_numbers<[1], [0], [0], [1], [0, 0, 1, 1], [], []>} : vector<8x8xf32>, vector<8x224xf32>, vector<8x224xf32> -> vector<8x224xf32>
    %137 = arith.addf %131, %136 : vector<8x224xf32>
    %c0_187 = arith.constant 0 : index
    %c0_188 = arith.constant 0 : index
    %138 = vector.load %arg5[%c0_187, %c0_188] : memref<8x256xf32, #tpu.memory_space<vmem>>, vector<8x224xf32>
    tpu.vector_store %arg5[%c0_187, %c0_188], %137 {strides = array<i32>} : memref<8x256xf32, #tpu.memory_space<vmem>>, vector<8x224xf32>,
    %c0_189 = arith.constant 0 : index
    %c0_190 = arith.constant 0 : index
    %139 = vector.load %arg5[%c0_189, %c0_190] : memref<8x256xf32, #tpu.memory_space<vmem>>, vector<8x208xf32>
    %c7_191 = arith.constant 7 : index
    %c0_192 = arith.constant 0 : index
    %c0_193 = arith.constant 0 : index
    %140 = vector.load %arg2[%c7_191, %c0_192, %c0_193] : memref<9x8x8xf32, #tpu.memory_space<vmem>>, vector<1x8x8xf32>
    %141 = vector.shape_cast %140 : vector<1x8x8xf32> to vector<8x8xf32>
    %c1_194 = arith.constant 1 : index
    %c0_195 = arith.constant 0 : index
    %c0_196 = arith.constant 0 : index
    %c48_197 = arith.constant 48 : index
    %142 = vector.load %arg1[%c1_194, %c0_195, %c0_196, %c48_197] : memref<4x1x8x256xf32, #tpu.memory_space<vmem>>, vector<1x1x8x208xf32>
    %143 = vector.shape_cast %142 : vector<1x1x8x208xf32> to vector<8x208xf32>
    %cst_198 = arith.constant dense<0.000000e+00> : vector<8x208xf32>
    %144 = tpu.matmul %141, %143, %cst_198 {dimension_numbers = #tpu.dot_dimension_numbers<[1], [0], [0], [1], [0, 0, 1, 1], [], []>} : vector<8x8xf32>, vector<8x208xf32>, vector<8x208xf32> -> vector<8x208xf32>
    %145 = arith.addf %139, %144 : vector<8x208xf32>
    %c0_199 = arith.constant 0 : index
    %c0_200 = arith.constant 0 : index
    %146 = vector.load %arg5[%c0_199, %c0_200] : memref<8x256xf32, #tpu.memory_space<vmem>>, vector<8x208xf32>
    tpu.vector_store %arg5[%c0_199, %c0_200], %145 {strides = array<i32>} : memref<8x256xf32, #tpu.memory_space<vmem>>, vector<8x208xf32>,
    %c0_201 = arith.constant 0 : index
    %c0_202 = arith.constant 0 : index
    %147 = vector.load %arg5[%c0_201, %c0_202] : memref<8x256xf32, #tpu.memory_space<vmem>>, vector<8x192xf32>
    %c8_203 = arith.constant 8 : index
    %c0_204 = arith.constant 0 : index
    %c0_205 = arith.constant 0 : index
    %148 = vector.load %arg2[%c8_203, %c0_204, %c0_205] : memref<9x8x8xf32, #tpu.memory_space<vmem>>, vector<1x8x8xf32>
    %149 = vector.shape_cast %148 : vector<1x8x8xf32> to vector<8x8xf32>
    %c1_206 = arith.constant 1 : index
    %c0_207 = arith.constant 0 : index
    %c0_208 = arith.constant 0 : index
    %c64_209 = arith.constant 64 : index
    %150 = vector.load %arg1[%c1_206, %c0_207, %c0_208, %c64_209] : memref<4x1x8x256xf32, #tpu.memory_space<vmem>>, vector<1x1x8x192xf32>
    %151 = vector.shape_cast %150 : vector<1x1x8x192xf32> to vector<8x192xf32>
    %cst_210 = arith.constant dense<0.000000e+00> : vector<8x192xf32>
    %152 = tpu.matmul %149, %151, %cst_210 {dimension_numbers = #tpu.dot_dimension_numbers<[1], [0], [0], [1], [0, 0, 1, 1], [], []>} : vector<8x8xf32>, vector<8x192xf32>, vector<8x192xf32> -> vector<8x192xf32>
    %153 = arith.addf %147, %152 : vector<8x192xf32>
    %c0_211 = arith.constant 0 : index
    %c0_212 = arith.constant 0 : index
    %154 = vector.load %arg5[%c0_211, %c0_212] : memref<8x256xf32, #tpu.memory_space<vmem>>, vector<8x192xf32>
    tpu.vector_store %arg5[%c0_211, %c0_212], %153 {strides = array<i32>} : memref<8x256xf32, #tpu.memory_space<vmem>>, vector<8x192xf32>,
    %c0_213 = arith.constant 0 : index
    %c0_214 = arith.constant 0 : index
    %155 = vector.load %arg5[%c0_213, %c0_214] : memref<8x256xf32, #tpu.memory_space<vmem>>, vector<8x256xf32>
    %c1_215 = arith.constant 1 : index
    %c0_216 = arith.constant 0 : index
    %c0_217 = arith.constant 0 : index
    %156 = vector.load %arg4[%c1_215, %c0_216, %c0_217] : memref<4x8x256xf32, #tpu.memory_space<vmem>>, vector<1x8x256xf32>
    %157 = vector.shape_cast %156 : vector<1x8x256xf32> to vector<8x256xf32>
    %158 = vector.shape_cast %155 : vector<8x256xf32> to vector<1x8x256xf32>
    tpu.vector_store %arg4[%c1_215, %c0_216, %c0_217], %158 {strides = array<i32>} : memref<4x8x256xf32, #tpu.memory_space<vmem>>, vector<1x8x256xf32>,
    %159 = vector.shape_cast %0 : vector<8x1xf32> to vector<8x1xf32>
    %160 = vector.broadcast %159 : vector<8x1xf32> to vector<8x256xf32>
    %c0_218 = arith.constant 0 : index
    %c0_219 = arith.constant 0 : index
    %161 = vector.load %arg5[%c0_218, %c0_219] : memref<8x256xf32, #tpu.memory_space<vmem>>, vector<8x256xf32>
    tpu.vector_store %arg5[%c0_218, %c0_219], %160 {strides = array<i32>} : memref<8x256xf32, #tpu.memory_space<vmem>>, vector<8x256xf32>,
    %c0_220 = arith.constant 0 : index
    %c64_221 = arith.constant 64 : index
    %162 = vector.load %arg5[%c0_220, %c64_221] : memref<8x256xf32, #tpu.memory_space<vmem>>, vector<8x192xf32>
    %c0_222 = arith.constant 0 : index
    %c0_223 = arith.constant 0 : index
    %c0_224 = arith.constant 0 : index
    %163 = vector.load %arg2[%c0_222, %c0_223, %c0_224] : memref<9x8x8xf32, #tpu.memory_space<vmem>>, vector<1x8x8xf32>
    %164 = vector.shape_cast %163 : vector<1x8x8xf32> to vector<8x8xf32>
    %c2_225 = arith.constant 2 : index
    %c0_226 = arith.constant 0 : index
    %c0_227 = arith.constant 0 : index
    %c0_228 = arith.constant 0 : index
    %165 = vector.load %arg1[%c2_225, %c0_226, %c0_227, %c0_228] : memref<4x1x8x256xf32, #tpu.memory_space<vmem>>, vector<1x1x8x192xf32>
    %166 = vector.shape_cast %165 : vector<1x1x8x192xf32> to vector<8x192xf32>
    %cst_229 = arith.constant dense<0.000000e+00> : vector<8x192xf32>
    %167 = tpu.matmul %164, %166, %cst_229 {dimension_numbers = #tpu.dot_dimension_numbers<[1], [0], [0], [1], [0, 0, 1, 1], [], []>} : vector<8x8xf32>, vector<8x192xf32>, vector<8x192xf32> -> vector<8x192xf32>
    %168 = arith.addf %162, %167 : vector<8x192xf32>
    %c0_230 = arith.constant 0 : index
    %c64_231 = arith.constant 64 : index
    %169 = vector.load %arg5[%c0_230, %c64_231] : memref<8x256xf32, #tpu.memory_space<vmem>>, vector<8x192xf32>
    tpu.vector_store %arg5[%c0_230, %c64_231], %168 {strides = array<i32>} : memref<8x256xf32, #tpu.memory_space<vmem>>, vector<8x192xf32>,
    %c0_232 = arith.constant 0 : index
    %c48_233 = arith.constant 48 : index
    %170 = vector.load %arg5[%c0_232, %c48_233] : memref<8x256xf32, #tpu.memory_space<vmem>>, vector<8x208xf32>
    %c1_234 = arith.constant 1 : index
    %c0_235 = arith.constant 0 : index
    %c0_236 = arith.constant 0 : index
    %171 = vector.load %arg2[%c1_234, %c0_235, %c0_236] : memref<9x8x8xf32, #tpu.memory_space<vmem>>, vector<1x8x8xf32>
    %172 = vector.shape_cast %171 : vector<1x8x8xf32> to vector<8x8xf32>
    %c2_237 = arith.constant 2 : index
    %c0_238 = arith.constant 0 : index
    %c0_239 = arith.constant 0 : index
    %c0_240 = arith.constant 0 : index
    %173 = vector.load %arg1[%c2_237, %c0_238, %c0_239, %c0_240] : memref<4x1x8x256xf32, #tpu.memory_space<vmem>>, vector<1x1x8x208xf32>
    %174 = vector.shape_cast %173 : vector<1x1x8x208xf32> to vector<8x208xf32>
    %cst_241 = arith.constant dense<0.000000e+00> : vector<8x208xf32>
    %175 = tpu.matmul %172, %174, %cst_241 {dimension_numbers = #tpu.dot_dimension_numbers<[1], [0], [0], [1], [0, 0, 1, 1], [], []>} : vector<8x8xf32>, vector<8x208xf32>, vector<8x208xf32> -> vector<8x208xf32>
    %176 = arith.addf %170, %175 : vector<8x208xf32>
    %c0_242 = arith.constant 0 : index
    %c48_243 = arith.constant 48 : index
    %177 = vector.load %arg5[%c0_242, %c48_243] : memref<8x256xf32, #tpu.memory_space<vmem>>, vector<8x208xf32>
    tpu.vector_store %arg5[%c0_242, %c48_243], %176 {strides = array<i32>} : memref<8x256xf32, #tpu.memory_space<vmem>>, vector<8x208xf32>,
    %c0_244 = arith.constant 0 : index
    %c32_245 = arith.constant 32 : index
    %178 = vector.load %arg5[%c0_244, %c32_245] : memref<8x256xf32, #tpu.memory_space<vmem>>, vector<8x224xf32>
    %c2_246 = arith.constant 2 : index
    %c0_247 = arith.constant 0 : index
    %c0_248 = arith.constant 0 : index
    %179 = vector.load %arg2[%c2_246, %c0_247, %c0_248] : memref<9x8x8xf32, #tpu.memory_space<vmem>>, vector<1x8x8xf32>
    %180 = vector.shape_cast %179 : vector<1x8x8xf32> to vector<8x8xf32>
    %c2_249 = arith.constant 2 : index
    %c0_250 = arith.constant 0 : index
    %c0_251 = arith.constant 0 : index
    %c0_252 = arith.constant 0 : index
    %181 = vector.load %arg1[%c2_249, %c0_250, %c0_251, %c0_252] : memref<4x1x8x256xf32, #tpu.memory_space<vmem>>, vector<1x1x8x224xf32>
    %182 = vector.shape_cast %181 : vector<1x1x8x224xf32> to vector<8x224xf32>
    %cst_253 = arith.constant dense<0.000000e+00> : vector<8x224xf32>
    %183 = tpu.matmul %180, %182, %cst_253 {dimension_numbers = #tpu.dot_dimension_numbers<[1], [0], [0], [1], [0, 0, 1, 1], [], []>} : vector<8x8xf32>, vector<8x224xf32>, vector<8x224xf32> -> vector<8x224xf32>
    %184 = arith.addf %178, %183 : vector<8x224xf32>
    %c0_254 = arith.constant 0 : index
    %c32_255 = arith.constant 32 : index
    %185 = vector.load %arg5[%c0_254, %c32_255] : memref<8x256xf32, #tpu.memory_space<vmem>>, vector<8x224xf32>
    tpu.vector_store %arg5[%c0_254, %c32_255], %184 {strides = array<i32>} : memref<8x256xf32, #tpu.memory_space<vmem>>, vector<8x224xf32>,
    %c0_256 = arith.constant 0 : index
    %c16_257 = arith.constant 16 : index
    %186 = vector.load %arg5[%c0_256, %c16_257] : memref<8x256xf32, #tpu.memory_space<vmem>>, vector<8x240xf32>
    %c3_258 = arith.constant 3 : index
    %c0_259 = arith.constant 0 : index
    %c0_260 = arith.constant 0 : index
    %187 = vector.load %arg2[%c3_258, %c0_259, %c0_260] : memref<9x8x8xf32, #tpu.memory_space<vmem>>, vector<1x8x8xf32>
    %188 = vector.shape_cast %187 : vector<1x8x8xf32> to vector<8x8xf32>
    %c2_261 = arith.constant 2 : index
    %c0_262 = arith.constant 0 : index
    %c0_263 = arith.constant 0 : index
    %c0_264 = arith.constant 0 : index
    %189 = vector.load %arg1[%c2_261, %c0_262, %c0_263, %c0_264] : memref<4x1x8x256xf32, #tpu.memory_space<vmem>>, vector<1x1x8x240xf32>
    %190 = vector.shape_cast %189 : vector<1x1x8x240xf32> to vector<8x240xf32>
    %cst_265 = arith.constant dense<0.000000e+00> : vector<8x240xf32>
    %191 = tpu.matmul %188, %190, %cst_265 {dimension_numbers = #tpu.dot_dimension_numbers<[1], [0], [0], [1], [0, 0, 1, 1], [], []>} : vector<8x8xf32>, vector<8x240xf32>, vector<8x240xf32> -> vector<8x240xf32>
    %192 = arith.addf %186, %191 : vector<8x240xf32>
    %c0_266 = arith.constant 0 : index
    %c16_267 = arith.constant 16 : index
    %193 = vector.load %arg5[%c0_266, %c16_267] : memref<8x256xf32, #tpu.memory_space<vmem>>, vector<8x240xf32>
    tpu.vector_store %arg5[%c0_266, %c16_267], %192 {strides = array<i32>} : memref<8x256xf32, #tpu.memory_space<vmem>>, vector<8x240xf32>,
    %c0_268 = arith.constant 0 : index
    %c0_269 = arith.constant 0 : index
    %194 = vector.load %arg5[%c0_268, %c0_269] : memref<8x256xf32, #tpu.memory_space<vmem>>, vector<8x256xf32>
    %c4_270 = arith.constant 4 : index
    %c0_271 = arith.constant 0 : index
    %c0_272 = arith.constant 0 : index
    %195 = vector.load %arg2[%c4_270, %c0_271, %c0_272] : memref<9x8x8xf32, #tpu.memory_space<vmem>>, vector<1x8x8xf32>
    %196 = vector.shape_cast %195 : vector<1x8x8xf32> to vector<8x8xf32>
    %c2_273 = arith.constant 2 : index
    %c0_274 = arith.constant 0 : index
    %c0_275 = arith.constant 0 : index
    %c0_276 = arith.constant 0 : index
    %197 = vector.load %arg1[%c2_273, %c0_274, %c0_275, %c0_276] : memref<4x1x8x256xf32, #tpu.memory_space<vmem>>, vector<1x1x8x256xf32>
    %198 = vector.shape_cast %197 : vector<1x1x8x256xf32> to vector<8x256xf32>
    %cst_277 = arith.constant dense<0.000000e+00> : vector<8x256xf32>
    %199 = tpu.matmul %196, %198, %cst_277 {dimension_numbers = #tpu.dot_dimension_numbers<[1], [0], [0], [1], [0, 0, 1, 1], [], []>} : vector<8x8xf32>, vector<8x256xf32>, vector<8x256xf32> -> vector<8x256xf32>
    %200 = arith.addf %194, %199 : vector<8x256xf32>
    %c0_278 = arith.constant 0 : index
    %c0_279 = arith.constant 0 : index
    %201 = vector.load %arg5[%c0_278, %c0_279] : memref<8x256xf32, #tpu.memory_space<vmem>>, vector<8x256xf32>
    tpu.vector_store %arg5[%c0_278, %c0_279], %200 {strides = array<i32>} : memref<8x256xf32, #tpu.memory_space<vmem>>, vector<8x256xf32>,
    %c0_280 = arith.constant 0 : index
    %c0_281 = arith.constant 0 : index
    %202 = vector.load %arg5[%c0_280, %c0_281] : memref<8x256xf32, #tpu.memory_space<vmem>>, vector<8x240xf32>
    %c5_282 = arith.constant 5 : index
    %c0_283 = arith.constant 0 : index
    %c0_284 = arith.constant 0 : index
    %203 = vector.load %arg2[%c5_282, %c0_283, %c0_284] : memref<9x8x8xf32, #tpu.memory_space<vmem>>, vector<1x8x8xf32>
    %204 = vector.shape_cast %203 : vector<1x8x8xf32> to vector<8x8xf32>
    %c2_285 = arith.constant 2 : index
    %c0_286 = arith.constant 0 : index
    %c0_287 = arith.constant 0 : index
    %c16_288 = arith.constant 16 : index
    %205 = vector.load %arg1[%c2_285, %c0_286, %c0_287, %c16_288] : memref<4x1x8x256xf32, #tpu.memory_space<vmem>>, vector<1x1x8x240xf32>
    %206 = vector.shape_cast %205 : vector<1x1x8x240xf32> to vector<8x240xf32>
    %cst_289 = arith.constant dense<0.000000e+00> : vector<8x240xf32>
    %207 = tpu.matmul %204, %206, %cst_289 {dimension_numbers = #tpu.dot_dimension_numbers<[1], [0], [0], [1], [0, 0, 1, 1], [], []>} : vector<8x8xf32>, vector<8x240xf32>, vector<8x240xf32> -> vector<8x240xf32>
    %208 = arith.addf %202, %207 : vector<8x240xf32>
    %c0_290 = arith.constant 0 : index
    %c0_291 = arith.constant 0 : index
    %209 = vector.load %arg5[%c0_290, %c0_291] : memref<8x256xf32, #tpu.memory_space<vmem>>, vector<8x240xf32>
    tpu.vector_store %arg5[%c0_290, %c0_291], %208 {strides = array<i32>} : memref<8x256xf32, #tpu.memory_space<vmem>>, vector<8x240xf32>,
    %c0_292 = arith.constant 0 : index
    %c0_293 = arith.constant 0 : index
    %210 = vector.load %arg5[%c0_292, %c0_293] : memref<8x256xf32, #tpu.memory_space<vmem>>, vector<8x224xf32>
    %c6_294 = arith.constant 6 : index
    %c0_295 = arith.constant 0 : index
    %c0_296 = arith.constant 0 : index
    %211 = vector.load %arg2[%c6_294, %c0_295, %c0_296] : memref<9x8x8xf32, #tpu.memory_space<vmem>>, vector<1x8x8xf32>
    %212 = vector.shape_cast %211 : vector<1x8x8xf32> to vector<8x8xf32>
    %c2_297 = arith.constant 2 : index
    %c0_298 = arith.constant 0 : index
    %c0_299 = arith.constant 0 : index
    %c32_300 = arith.constant 32 : index
    %213 = vector.load %arg1[%c2_297, %c0_298, %c0_299, %c32_300] : memref<4x1x8x256xf32, #tpu.memory_space<vmem>>, vector<1x1x8x224xf32>
    %214 = vector.shape_cast %213 : vector<1x1x8x224xf32> to vector<8x224xf32>
    %cst_301 = arith.constant dense<0.000000e+00> : vector<8x224xf32>
    %215 = tpu.matmul %212, %214, %cst_301 {dimension_numbers = #tpu.dot_dimension_numbers<[1], [0], [0], [1], [0, 0, 1, 1], [], []>} : vector<8x8xf32>, vector<8x224xf32>, vector<8x224xf32> -> vector<8x224xf32>
    %216 = arith.addf %210, %215 : vector<8x224xf32>
    %c0_302 = arith.constant 0 : index
    %c0_303 = arith.constant 0 : index
    %217 = vector.load %arg5[%c0_302, %c0_303] : memref<8x256xf32, #tpu.memory_space<vmem>>, vector<8x224xf32>
    tpu.vector_store %arg5[%c0_302, %c0_303], %216 {strides = array<i32>} : memref<8x256xf32, #tpu.memory_space<vmem>>, vector<8x224xf32>,
    %c0_304 = arith.constant 0 : index
    %c0_305 = arith.constant 0 : index
    %218 = vector.load %arg5[%c0_304, %c0_305] : memref<8x256xf32, #tpu.memory_space<vmem>>, vector<8x208xf32>
    %c7_306 = arith.constant 7 : index
    %c0_307 = arith.constant 0 : index
    %c0_308 = arith.constant 0 : index
    %219 = vector.load %arg2[%c7_306, %c0_307, %c0_308] : memref<9x8x8xf32, #tpu.memory_space<vmem>>, vector<1x8x8xf32>
    %220 = vector.shape_cast %219 : vector<1x8x8xf32> to vector<8x8xf32>
    %c2_309 = arith.constant 2 : index
    %c0_310 = arith.constant 0 : index
    %c0_311 = arith.constant 0 : index
    %c48_312 = arith.constant 48 : index
    %221 = vector.load %arg1[%c2_309, %c0_310, %c0_311, %c48_312] : memref<4x1x8x256xf32, #tpu.memory_space<vmem>>, vector<1x1x8x208xf32>
    %222 = vector.shape_cast %221 : vector<1x1x8x208xf32> to vector<8x208xf32>
    %cst_313 = arith.constant dense<0.000000e+00> : vector<8x208xf32>
    %223 = tpu.matmul %220, %222, %cst_313 {dimension_numbers = #tpu.dot_dimension_numbers<[1], [0], [0], [1], [0, 0, 1, 1], [], []>} : vector<8x8xf32>, vector<8x208xf32>, vector<8x208xf32> -> vector<8x208xf32>
    %224 = arith.addf %218, %223 : vector<8x208xf32>
    %c0_314 = arith.constant 0 : index
    %c0_315 = arith.constant 0 : index
    %225 = vector.load %arg5[%c0_314, %c0_315] : memref<8x256xf32, #tpu.memory_space<vmem>>, vector<8x208xf32>
    tpu.vector_store %arg5[%c0_314, %c0_315], %224 {strides = array<i32>} : memref<8x256xf32, #tpu.memory_space<vmem>>, vector<8x208xf32>,
    %c0_316 = arith.constant 0 : index
    %c0_317 = arith.constant 0 : index
    %226 = vector.load %arg5[%c0_316, %c0_317] : memref<8x256xf32, #tpu.memory_space<vmem>>, vector<8x192xf32>
    %c8_318 = arith.constant 8 : index
    %c0_319 = arith.constant 0 : index
    %c0_320 = arith.constant 0 : index
    %227 = vector.load %arg2[%c8_318, %c0_319, %c0_320] : memref<9x8x8xf32, #tpu.memory_space<vmem>>, vector<1x8x8xf32>
    %228 = vector.shape_cast %227 : vector<1x8x8xf32> to vector<8x8xf32>
    %c2_321 = arith.constant 2 : index
    %c0_322 = arith.constant 0 : index
    %c0_323 = arith.constant 0 : index
    %c64_324 = arith.constant 64 : index
    %229 = vector.load %arg1[%c2_321, %c0_322, %c0_323, %c64_324] : memref<4x1x8x256xf32, #tpu.memory_space<vmem>>, vector<1x1x8x192xf32>
    %230 = vector.shape_cast %229 : vector<1x1x8x192xf32> to vector<8x192xf32>
    %cst_325 = arith.constant dense<0.000000e+00> : vector<8x192xf32>
    %231 = tpu.matmul %228, %230, %cst_325 {dimension_numbers = #tpu.dot_dimension_numbers<[1], [0], [0], [1], [0, 0, 1, 1], [], []>} : vector<8x8xf32>, vector<8x192xf32>, vector<8x192xf32> -> vector<8x192xf32>
    %232 = arith.addf %226, %231 : vector<8x192xf32>
    %c0_326 = arith.constant 0 : index
    %c0_327 = arith.constant 0 : index
    %233 = vector.load %arg5[%c0_326, %c0_327] : memref<8x256xf32, #tpu.memory_space<vmem>>, vector<8x192xf32>
    tpu.vector_store %arg5[%c0_326, %c0_327], %232 {strides = array<i32>} : memref<8x256xf32, #tpu.memory_space<vmem>>, vector<8x192xf32>,
    %c0_328 = arith.constant 0 : index
    %c0_329 = arith.constant 0 : index
    %234 = vector.load %arg5[%c0_328, %c0_329] : memref<8x256xf32, #tpu.memory_space<vmem>>, vector<8x256xf32>
    %c2_330 = arith.constant 2 : index
    %c0_331 = arith.constant 0 : index
    %c0_332 = arith.constant 0 : index
    %235 = vector.load %arg4[%c2_330, %c0_331, %c0_332] : memref<4x8x256xf32, #tpu.memory_space<vmem>>, vector<1x8x256xf32>
    %236 = vector.shape_cast %235 : vector<1x8x256xf32> to vector<8x256xf32>
    %237 = vector.shape_cast %234 : vector<8x256xf32> to vector<1x8x256xf32>
    tpu.vector_store %arg4[%c2_330, %c0_331, %c0_332], %237 {strides = array<i32>} : memref<4x8x256xf32, #tpu.memory_space<vmem>>, vector<1x8x256xf32>,
    %238 = vector.shape_cast %0 : vector<8x1xf32> to vector<8x1xf32>
    %239 = vector.broadcast %238 : vector<8x1xf32> to vector<8x256xf32>
    %c0_333 = arith.constant 0 : index
    %c0_334 = arith.constant 0 : index
    %240 = vector.load %arg5[%c0_333, %c0_334] : memref<8x256xf32, #tpu.memory_space<vmem>>, vector<8x256xf32>
    tpu.vector_store %arg5[%c0_333, %c0_334], %239 {strides = array<i32>} : memref<8x256xf32, #tpu.memory_space<vmem>>, vector<8x256xf32>,
    %c0_335 = arith.constant 0 : index
    %c64_336 = arith.constant 64 : index
    %241 = vector.load %arg5[%c0_335, %c64_336] : memref<8x256xf32, #tpu.memory_space<vmem>>, vector<8x192xf32>
    %c0_337 = arith.constant 0 : index
    %c0_338 = arith.constant 0 : index
    %c0_339 = arith.constant 0 : index
    %242 = vector.load %arg2[%c0_337, %c0_338, %c0_339] : memref<9x8x8xf32, #tpu.memory_space<vmem>>, vector<1x8x8xf32>
    %243 = vector.shape_cast %242 : vector<1x8x8xf32> to vector<8x8xf32>
    %c3_340 = arith.constant 3 : index
    %c0_341 = arith.constant 0 : index
    %c0_342 = arith.constant 0 : index
    %c0_343 = arith.constant 0 : index
    %244 = vector.load %arg1[%c3_340, %c0_341, %c0_342, %c0_343] : memref<4x1x8x256xf32, #tpu.memory_space<vmem>>, vector<1x1x8x192xf32>
    %245 = vector.shape_cast %244 : vector<1x1x8x192xf32> to vector<8x192xf32>
    %cst_344 = arith.constant dense<0.000000e+00> : vector<8x192xf32>
    %246 = tpu.matmul %243, %245, %cst_344 {dimension_numbers = #tpu.dot_dimension_numbers<[1], [0], [0], [1], [0, 0, 1, 1], [], []>} : vector<8x8xf32>, vector<8x192xf32>, vector<8x192xf32> -> vector<8x192xf32>
    %247 = arith.addf %241, %246 : vector<8x192xf32>
    %c0_345 = arith.constant 0 : index
    %c64_346 = arith.constant 64 : index
    %248 = vector.load %arg5[%c0_345, %c64_346] : memref<8x256xf32, #tpu.memory_space<vmem>>, vector<8x192xf32>
    tpu.vector_store %arg5[%c0_345, %c64_346], %247 {strides = array<i32>} : memref<8x256xf32, #tpu.memory_space<vmem>>, vector<8x192xf32>,
    %c0_347 = arith.constant 0 : index
    %c48_348 = arith.constant 48 : index
    %249 = vector.load %arg5[%c0_347, %c48_348] : memref<8x256xf32, #tpu.memory_space<vmem>>, vector<8x208xf32>
    %c1_349 = arith.constant 1 : index
    %c0_350 = arith.constant 0 : index
    %c0_351 = arith.constant 0 : index
    %250 = vector.load %arg2[%c1_349, %c0_350, %c0_351] : memref<9x8x8xf32, #tpu.memory_space<vmem>>, vector<1x8x8xf32>
    %251 = vector.shape_cast %250 : vector<1x8x8xf32> to vector<8x8xf32>
    %c3_352 = arith.constant 3 : index
    %c0_353 = arith.constant 0 : index
    %c0_354 = arith.constant 0 : index
    %c0_355 = arith.constant 0 : index
    %252 = vector.load %arg1[%c3_352, %c0_353, %c0_354, %c0_355] : memref<4x1x8x256xf32, #tpu.memory_space<vmem>>, vector<1x1x8x208xf32>
    %253 = vector.shape_cast %252 : vector<1x1x8x208xf32> to vector<8x208xf32>
    %cst_356 = arith.constant dense<0.000000e+00> : vector<8x208xf32>
    %254 = tpu.matmul %251, %253, %cst_356 {dimension_numbers = #tpu.dot_dimension_numbers<[1], [0], [0], [1], [0, 0, 1, 1], [], []>} : vector<8x8xf32>, vector<8x208xf32>, vector<8x208xf32> -> vector<8x208xf32>
    %255 = arith.addf %249, %254 : vector<8x208xf32>
    %c0_357 = arith.constant 0 : index
    %c48_358 = arith.constant 48 : index
    %256 = vector.load %arg5[%c0_357, %c48_358] : memref<8x256xf32, #tpu.memory_space<vmem>>, vector<8x208xf32>
    tpu.vector_store %arg5[%c0_357, %c48_358], %255 {strides = array<i32>} : memref<8x256xf32, #tpu.memory_space<vmem>>, vector<8x208xf32>,
    %c0_359 = arith.constant 0 : index
    %c32_360 = arith.constant 32 : index
    %257 = vector.load %arg5[%c0_359, %c32_360] : memref<8x256xf32, #tpu.memory_space<vmem>>, vector<8x224xf32>
    %c2_361 = arith.constant 2 : index
    %c0_362 = arith.constant 0 : index
    %c0_363 = arith.constant 0 : index
    %258 = vector.load %arg2[%c2_361, %c0_362, %c0_363] : memref<9x8x8xf32, #tpu.memory_space<vmem>>, vector<1x8x8xf32>
    %259 = vector.shape_cast %258 : vector<1x8x8xf32> to vector<8x8xf32>
    %c3_364 = arith.constant 3 : index
    %c0_365 = arith.constant 0 : index
    %c0_366 = arith.constant 0 : index
    %c0_367 = arith.constant 0 : index
    %260 = vector.load %arg1[%c3_364, %c0_365, %c0_366, %c0_367] : memref<4x1x8x256xf32, #tpu.memory_space<vmem>>, vector<1x1x8x224xf32>
    %261 = vector.shape_cast %260 : vector<1x1x8x224xf32> to vector<8x224xf32>
    %cst_368 = arith.constant dense<0.000000e+00> : vector<8x224xf32>
    %262 = tpu.matmul %259, %261, %cst_368 {dimension_numbers = #tpu.dot_dimension_numbers<[1], [0], [0], [1], [0, 0, 1, 1], [], []>} : vector<8x8xf32>, vector<8x224xf32>, vector<8x224xf32> -> vector<8x224xf32>
    %263 = arith.addf %257, %262 : vector<8x224xf32>
    %c0_369 = arith.constant 0 : index
    %c32_370 = arith.constant 32 : index
    %264 = vector.load %arg5[%c0_369, %c32_370] : memref<8x256xf32, #tpu.memory_space<vmem>>, vector<8x224xf32>
    tpu.vector_store %arg5[%c0_369, %c32_370], %263 {strides = array<i32>} : memref<8x256xf32, #tpu.memory_space<vmem>>, vector<8x224xf32>,
    %c0_371 = arith.constant 0 : index
    %c16_372 = arith.constant 16 : index
    %265 = vector.load %arg5[%c0_371, %c16_372] : memref<8x256xf32, #tpu.memory_space<vmem>>, vector<8x240xf32>
    %c3_373 = arith.constant 3 : index
    %c0_374 = arith.constant 0 : index
    %c0_375 = arith.constant 0 : index
    %266 = vector.load %arg2[%c3_373, %c0_374, %c0_375] : memref<9x8x8xf32, #tpu.memory_space<vmem>>, vector<1x8x8xf32>
    %267 = vector.shape_cast %266 : vector<1x8x8xf32> to vector<8x8xf32>
    %c3_376 = arith.constant 3 : index
    %c0_377 = arith.constant 0 : index
    %c0_378 = arith.constant 0 : index
    %c0_379 = arith.constant 0 : index
    %268 = vector.load %arg1[%c3_376, %c0_377, %c0_378, %c0_379] : memref<4x1x8x256xf32, #tpu.memory_space<vmem>>, vector<1x1x8x240xf32>
    %269 = vector.shape_cast %268 : vector<1x1x8x240xf32> to vector<8x240xf32>
    %cst_380 = arith.constant dense<0.000000e+00> : vector<8x240xf32>
    %270 = tpu.matmul %267, %269, %cst_380 {dimension_numbers = #tpu.dot_dimension_numbers<[1], [0], [0], [1], [0, 0, 1, 1], [], []>} : vector<8x8xf32>, vector<8x240xf32>, vector<8x240xf32> -> vector<8x240xf32>
    %271 = arith.addf %265, %270 : vector<8x240xf32>
    %c0_381 = arith.constant 0 : index
    %c16_382 = arith.constant 16 : index
    %272 = vector.load %arg5[%c0_381, %c16_382] : memref<8x256xf32, #tpu.memory_space<vmem>>, vector<8x240xf32>
    tpu.vector_store %arg5[%c0_381, %c16_382], %271 {strides = array<i32>} : memref<8x256xf32, #tpu.memory_space<vmem>>, vector<8x240xf32>,
    %c0_383 = arith.constant 0 : index
    %c0_384 = arith.constant 0 : index
    %273 = vector.load %arg5[%c0_383, %c0_384] : memref<8x256xf32, #tpu.memory_space<vmem>>, vector<8x256xf32>
    %c4_385 = arith.constant 4 : index
    %c0_386 = arith.constant 0 : index
    %c0_387 = arith.constant 0 : index
    %274 = vector.load %arg2[%c4_385, %c0_386, %c0_387] : memref<9x8x8xf32, #tpu.memory_space<vmem>>, vector<1x8x8xf32>
    %275 = vector.shape_cast %274 : vector<1x8x8xf32> to vector<8x8xf32>
    %c3_388 = arith.constant 3 : index
    %c0_389 = arith.constant 0 : index
    %c0_390 = arith.constant 0 : index
    %c0_391 = arith.constant 0 : index
    %276 = vector.load %arg1[%c3_388, %c0_389, %c0_390, %c0_391] : memref<4x1x8x256xf32, #tpu.memory_space<vmem>>, vector<1x1x8x256xf32>
    %277 = vector.shape_cast %276 : vector<1x1x8x256xf32> to vector<8x256xf32>
    %cst_392 = arith.constant dense<0.000000e+00> : vector<8x256xf32>
    %278 = tpu.matmul %275, %277, %cst_392 {dimension_numbers = #tpu.dot_dimension_numbers<[1], [0], [0], [1], [0, 0, 1, 1], [], []>} : vector<8x8xf32>, vector<8x256xf32>, vector<8x256xf32> -> vector<8x256xf32>
    %279 = arith.addf %273, %278 : vector<8x256xf32>
    %c0_393 = arith.constant 0 : index
    %c0_394 = arith.constant 0 : index
    %280 = vector.load %arg5[%c0_393, %c0_394] : memref<8x256xf32, #tpu.memory_space<vmem>>, vector<8x256xf32>
    tpu.vector_store %arg5[%c0_393, %c0_394], %279 {strides = array<i32>} : memref<8x256xf32, #tpu.memory_space<vmem>>, vector<8x256xf32>,
    %c0_395 = arith.constant 0 : index
    %c0_396 = arith.constant 0 : index
    %281 = vector.load %arg5[%c0_395, %c0_396] : memref<8x256xf32, #tpu.memory_space<vmem>>, vector<8x240xf32>
    %c5_397 = arith.constant 5 : index
    %c0_398 = arith.constant 0 : index
    %c0_399 = arith.constant 0 : index
    %282 = vector.load %arg2[%c5_397, %c0_398, %c0_399] : memref<9x8x8xf32, #tpu.memory_space<vmem>>, vector<1x8x8xf32>
    %283 = vector.shape_cast %282 : vector<1x8x8xf32> to vector<8x8xf32>
    %c3_400 = arith.constant 3 : index
    %c0_401 = arith.constant 0 : index
    %c0_402 = arith.constant 0 : index
    %c16_403 = arith.constant 16 : index
    %284 = vector.load %arg1[%c3_400, %c0_401, %c0_402, %c16_403] : memref<4x1x8x256xf32, #tpu.memory_space<vmem>>, vector<1x1x8x240xf32>
    %285 = vector.shape_cast %284 : vector<1x1x8x240xf32> to vector<8x240xf32>
    %cst_404 = arith.constant dense<0.000000e+00> : vector<8x240xf32>
    %286 = tpu.matmul %283, %285, %cst_404 {dimension_numbers = #tpu.dot_dimension_numbers<[1], [0], [0], [1], [0, 0, 1, 1], [], []>} : vector<8x8xf32>, vector<8x240xf32>, vector<8x240xf32> -> vector<8x240xf32>
    %287 = arith.addf %281, %286 : vector<8x240xf32>
    %c0_405 = arith.constant 0 : index
    %c0_406 = arith.constant 0 : index
    %288 = vector.load %arg5[%c0_405, %c0_406] : memref<8x256xf32, #tpu.memory_space<vmem>>, vector<8x240xf32>
    tpu.vector_store %arg5[%c0_405, %c0_406], %287 {strides = array<i32>} : memref<8x256xf32, #tpu.memory_space<vmem>>, vector<8x240xf32>,
    %c0_407 = arith.constant 0 : index
    %c0_408 = arith.constant 0 : index
    %289 = vector.load %arg5[%c0_407, %c0_408] : memref<8x256xf32, #tpu.memory_space<vmem>>, vector<8x224xf32>
    %c6_409 = arith.constant 6 : index
    %c0_410 = arith.constant 0 : index
    %c0_411 = arith.constant 0 : index
    %290 = vector.load %arg2[%c6_409, %c0_410, %c0_411] : memref<9x8x8xf32, #tpu.memory_space<vmem>>, vector<1x8x8xf32>
    %291 = vector.shape_cast %290 : vector<1x8x8xf32> to vector<8x8xf32>
    %c3_412 = arith.constant 3 : index
    %c0_413 = arith.constant 0 : index
    %c0_414 = arith.constant 0 : index
    %c32_415 = arith.constant 32 : index
    %292 = vector.load %arg1[%c3_412, %c0_413, %c0_414, %c32_415] : memref<4x1x8x256xf32, #tpu.memory_space<vmem>>, vector<1x1x8x224xf32>
    %293 = vector.shape_cast %292 : vector<1x1x8x224xf32> to vector<8x224xf32>
    %cst_416 = arith.constant dense<0.000000e+00> : vector<8x224xf32>
    %294 = tpu.matmul %291, %293, %cst_416 {dimension_numbers = #tpu.dot_dimension_numbers<[1], [0], [0], [1], [0, 0, 1, 1], [], []>} : vector<8x8xf32>, vector<8x224xf32>, vector<8x224xf32> -> vector<8x224xf32>
    %295 = arith.addf %289, %294 : vector<8x224xf32>
    %c0_417 = arith.constant 0 : index
    %c0_418 = arith.constant 0 : index
    %296 = vector.load %arg5[%c0_417, %c0_418] : memref<8x256xf32, #tpu.memory_space<vmem>>, vector<8x224xf32>
    tpu.vector_store %arg5[%c0_417, %c0_418], %295 {strides = array<i32>} : memref<8x256xf32, #tpu.memory_space<vmem>>, vector<8x224xf32>,
    %c0_419 = arith.constant 0 : index
    %c0_420 = arith.constant 0 : index
    %297 = vector.load %arg5[%c0_419, %c0_420] : memref<8x256xf32, #tpu.memory_space<vmem>>, vector<8x208xf32>
    %c7_421 = arith.constant 7 : index
    %c0_422 = arith.constant 0 : index
    %c0_423 = arith.constant 0 : index
    %298 = vector.load %arg2[%c7_421, %c0_422, %c0_423] : memref<9x8x8xf32, #tpu.memory_space<vmem>>, vector<1x8x8xf32>
    %299 = vector.shape_cast %298 : vector<1x8x8xf32> to vector<8x8xf32>
    %c3_424 = arith.constant 3 : index
    %c0_425 = arith.constant 0 : index
    %c0_426 = arith.constant 0 : index
    %c48_427 = arith.constant 48 : index
    %300 = vector.load %arg1[%c3_424, %c0_425, %c0_426, %c48_427] : memref<4x1x8x256xf32, #tpu.memory_space<vmem>>, vector<1x1x8x208xf32>
    %301 = vector.shape_cast %300 : vector<1x1x8x208xf32> to vector<8x208xf32>
    %cst_428 = arith.constant dense<0.000000e+00> : vector<8x208xf32>
    %302 = tpu.matmul %299, %301, %cst_428 {dimension_numbers = #tpu.dot_dimension_numbers<[1], [0], [0], [1], [0, 0, 1, 1], [], []>} : vector<8x8xf32>, vector<8x208xf32>, vector<8x208xf32> -> vector<8x208xf32>
    %303 = arith.addf %297, %302 : vector<8x208xf32>
    %c0_429 = arith.constant 0 : index
    %c0_430 = arith.constant 0 : index
    %304 = vector.load %arg5[%c0_429, %c0_430] : memref<8x256xf32, #tpu.memory_space<vmem>>, vector<8x208xf32>
    tpu.vector_store %arg5[%c0_429, %c0_430], %303 {strides = array<i32>} : memref<8x256xf32, #tpu.memory_space<vmem>>, vector<8x208xf32>,
    %c0_431 = arith.constant 0 : index
    %c0_432 = arith.constant 0 : index
    %305 = vector.load %arg5[%c0_431, %c0_432] : memref<8x256xf32, #tpu.memory_space<vmem>>, vector<8x192xf32>
    %c8_433 = arith.constant 8 : index
    %c0_434 = arith.constant 0 : index
    %c0_435 = arith.constant 0 : index
    %306 = vector.load %arg2[%c8_433, %c0_434, %c0_435] : memref<9x8x8xf32, #tpu.memory_space<vmem>>, vector<1x8x8xf32>
    %307 = vector.shape_cast %306 : vector<1x8x8xf32> to vector<8x8xf32>
    %c3_436 = arith.constant 3 : index
    %c0_437 = arith.constant 0 : index
    %c0_438 = arith.constant 0 : index
    %c64_439 = arith.constant 64 : index
    %308 = vector.load %arg1[%c3_436, %c0_437, %c0_438, %c64_439] : memref<4x1x8x256xf32, #tpu.memory_space<vmem>>, vector<1x1x8x192xf32>
    %309 = vector.shape_cast %308 : vector<1x1x8x192xf32> to vector<8x192xf32>
    %cst_440 = arith.constant dense<0.000000e+00> : vector<8x192xf32>
    %310 = tpu.matmul %307, %309, %cst_440 {dimension_numbers = #tpu.dot_dimension_numbers<[1], [0], [0], [1], [0, 0, 1, 1], [], []>} : vector<8x8xf32>, vector<8x192xf32>, vector<8x192xf32> -> vector<8x192xf32>
    %311 = arith.addf %305, %310 : vector<8x192xf32>
    %c0_441 = arith.constant 0 : index
    %c0_442 = arith.constant 0 : index
    %312 = vector.load %arg5[%c0_441, %c0_442] : memref<8x256xf32, #tpu.memory_space<vmem>>, vector<8x192xf32>
    tpu.vector_store %arg5[%c0_441, %c0_442], %311 {strides = array<i32>} : memref<8x256xf32, #tpu.memory_space<vmem>>, vector<8x192xf32>,
    %c0_443 = arith.constant 0 : index
    %c0_444 = arith.constant 0 : index
    %313 = vector.load %arg5[%c0_443, %c0_444] : memref<8x256xf32, #tpu.memory_space<vmem>>, vector<8x256xf32>
    %c3_445 = arith.constant 3 : index
    %c0_446 = arith.constant 0 : index
    %c0_447 = arith.constant 0 : index
    %314 = vector.load %arg4[%c3_445, %c0_446, %c0_447] : memref<4x8x256xf32, #tpu.memory_space<vmem>>, vector<1x8x256xf32>
    %315 = vector.shape_cast %314 : vector<1x8x256xf32> to vector<8x256xf32>
    %316 = vector.shape_cast %313 : vector<8x256xf32> to vector<1x8x256xf32>
    tpu.vector_store %arg4[%c3_445, %c0_446, %c0_447], %316 {strides = array<i32>} : memref<4x8x256xf32, #tpu.memory_space<vmem>>, vector<1x8x256xf32>,
    return
  }
  func.func @transform_0(%arg0: i32) -> (i32, i32, i32, i32) {
    %c0_i32 = arith.constant 0 : i32
    %c0_i32_0 = arith.constant 0 : i32
    %c0_i32_1 = arith.constant 0 : i32
    %c0_i32_2 = arith.constant 0 : i32
    return %arg0, %c0_i32, %c0_i32_0, %c0_i32_1 : i32, i32, i32, i32
  }
  func.func @transform_1(%arg0: i32) -> (i32, i32, i32) {
    %c0_i32 = arith.constant 0 : i32
    %c0_i32_0 = arith.constant 0 : i32
    %c0_i32_1 = arith.constant 0 : i32
    %c0_i32_2 = arith.constant 0 : i32
    return %c0_i32, %c0_i32_0, %c0_i32_1 : i32, i32, i32
  }
  func.func @transform_2(%arg0: i32) -> (i32, i32) {
    %c0_i32 = arith.constant 0 : i32
    %c0_i32_0 = arith.constant 0 : i32
    %c0_i32_1 = arith.constant 0 : i32
    return %c0_i32, %c0_i32_0 : i32, i32
  }
  func.func @transform_3(%arg0: i32) -> (i32, i32, i32) {
    %c0_i32 = arith.constant 0 : i32
    %c0_i32_0 = arith.constant 0 : i32
    %c0_i32_1 = arith.constant 0 : i32
    return %arg0, %c0_i32, %c0_i32_0 : i32, i32, i32
  }
}

</mosaic_0001>

<llo_original>
// kernel: tpu_custom_call.1
$region0: #{tpu_custom_call.1}
  #allocation0 [shape = 'u32[]', space=smem, size = 0x4, offset = 0x4, fixed_abs, tag = 'smem constant byte address 0x4 - core index']
  #allocation1 [shape = 'u32[144,128]{1,0:T(1,128)}', space=vmem, size = 0x12000, scoped, tag = 'internal scratch']
  #allocation2 [shape = 'f32[8,256]{1,0:T(8,128)}', space=vmem, size = 0x2000, scoped, tag = 'scratch operand']
  %s0 = inlined_call_operand.vmem [shape: f32[8,1,8,256], index: 0, kind: input, shape index: {}]
  %s1 = inlined_call_operand.vmem [shape: f32[9,8,8], index: 1, kind: input, shape index: {}]
  %s2 = inlined_call_operand.vmem [shape: f32[8,128], index: 2, kind: input, shape index: {}]
  %s3 = inlined_call_operand.hbm [shape: f32[8,8,256], index: 3, kind: output, shape index: {}]
  %s4 = sld [smem:[#allocation0]]
  $region45: #{tpu_custom_call.1} parent=0
    _
  %s6 = ssub.s32 1, %s4
  %s7 = scalar_select 0, %s6, %s4
  $region1: #{tpu_custom_call.1} parent=0
    #allocation3 [shape = 'u8[65536]{0}', space=vmem, size = 0x10000, scoped, tag = 'output window, operand 0']
    #allocation4 [shape = 's32[2]{0}', space=sflag, size = 0x8, scoped, tag = 'scoped memory for tpu_custom_call.1']
    %8 = vsyncpa [#allocation4], 0
    %s9 = scalar_lea.sflag [#allocation4], 1
    %10 = vsyncpa %s9, 0
    loop: start=0, step=1, limit=4
    $region2: #{tpu_custom_call.1} parent=1 // loop_pre_header
      _
    $region3: #{tpu_custom_call.1} parent=1 // loop_header
      %s12 = sphi 0, %s16
      %p13 = scmp.ge.s32.totalorder %s12, 4
      %s22 = sphi 0, %s24
      %s25 = sphi 0, %s22
      %s26 = sphi 0, %s25
      %s42 = sphi 0, %s26
      %s46 = sphi 0, %s46
      %s48 = sphi 0, %s46
      %s49 = sphi 0, %s48
      %s63 = sphi 0, %s49
      %s67 = sphi 0, %s67
      %s69 = sphi 0, %s67
      %s70 = sphi 0, %s69
      %s84 = sphi 0, %s70
      %s90 = sphi 0, %s92
      %s93 = sphi 0, %s90
      %s94 = sphi 0, %s93
      %s110 = sphi 0, %s94
    $region4: #{tpu_custom_call.1} parent=1 // loop_header_branch
      %15 = sbr.rel (%p13) target = $region8
    $region5: #{tpu_custom_call.1} parent=1 // loop_body
      %s17 = ssub.s32 %s12, 1
      %s18 = ssub.s32 %s12, 2
      %s19 = sadd.s32 %s12, 1
      %s20 = ssub.s32 %s12, %s19
      %p21 = scmp.eq.s32.totalorder %s20, 0
      %s23 = sadd.s32 %s22, 1
      %s24 = scalar_select %p21, %s22, %s23
      %p27 = pneg %p21
      %p28 = scmp.eq.s32.totalorder %s12, 1
      %p29 = por %p27, %p28
      %p30 = scmp.ne.s32.totalorder %s22, %s25
      %p31 = scmp.eq.s32.totalorder %s12, 0
      %p32 = por %p30, %p31
      %p33 = scmp.ne.s32.totalorder %s22, %s25
      %p34 = scmp.eq.s32.totalorder %s17, 1
      %p35 = por %p33, %p34
      %p36 = scmp.ne.s32.totalorder %s25, %s26
      %p37 = scmp.eq.s32.totalorder %s17, 0
      %p38 = por %p36, %p37
      %p39 = scmp.ne.s32.totalorder %s25, %s26
      %p40 = scmp.eq.s32.totalorder %s18, 1
      %p41 = por %p39, %p40
      %p43 = scmp.ne.s32.totalorder %s26, %s42
      %p44 = scmp.eq.s32.totalorder %s18, 0
      %p45 = por %p43, %p44
      %s47 = sadd.s32 %s46, 1
      %p50 = scmp.eq.s32.totalorder %s12, 1
      %p51 = scmp.ne.s32.totalorder %s46, %s48
      %p52 = scmp.eq.s32.totalorder %s12, 0
      %p53 = por %p51, %p52
      %p54 = scmp.ne.s32.totalorder %s46, %s48
      %p55 = scmp.eq.s32.totalorder %s17, 1
      %p56 = por %p54, %p55
      %p57 = scmp.ne.s32.totalorder %s48, %s49
      %p58 = scmp.eq.s32.totalorder %s17, 0
      %p59 = por %p57, %p58
      %p60 = scmp.ne.s32.totalorder %s48, %s49
      %p61 = scmp.eq.s32.totalorder %s18, 1
      %p62 = por %p60, %p61
      %p64 = scmp.ne.s32.totalorder %s49, %s63
      %p65 = scmp.eq.s32.totalorder %s18, 0
      %p66 = por %p64, %p65
      %s68 = sadd.s32 %s67, 1
      %p71 = scmp.eq.s32.totalorder %s12, 1
      %p72 = scmp.ne.s32.totalorder %s67, %s69
      %p73 = scmp.eq.s32.totalorder %s12, 0
      %p74 = por %p72, %p73
      %p75 = scmp.ne.s32.totalorder %s67, %s69
      %p76 = scmp.eq.s32.totalorder %s17, 1
      %p77 = por %p75, %p76
      %p78 = scmp.ne.s32.totalorder %s69, %s70
      %p79 = scmp.eq.s32.totalorder %s17, 0
      %p80 = por %p78, %p79
      %p81 = scmp.ne.s32.totalorder %s69, %s70
      %p82 = scmp.eq.s32.totalorder %s18, 1
      %p83 = por %p81, %p82
      %p85 = scmp.ne.s32.totalorder %s70, %s84
      %p86 = scmp.eq.s32.totalorder %s18, 0
      %p87 = por %p85, %p86
      %s88 = ssub.s32 %s12, %s19
      %p89 = scmp.eq.s32.totalorder %s88, 0
      %s91 = sadd.s32 %s90, 1
      %s92 = scalar_select %p89, %s90, %s91
      %p95 = pneg %p89
      %p96 = scmp.eq.s32.totalorder %s12, 1
      %p97 = por %p95, %p96
      %p98 = scmp.ne.s32.totalorder %s90, %s93
      %p99 = scmp.eq.s32.totalorder %s12, 0
      %p100 = por %p98, %p99
      %p101 = scmp.ne.s32.totalorder %s90, %s93
      %p102 = scmp.eq.s32.totalorder %s17, 1
      %p103 = por %p101, %p102
      %p104 = scmp.ne.s32.totalorder %s93, %s94
      %p105 = scmp.eq.s32.totalorder %s17, 0
      %p106 = por %p104, %p105
      %p107 = scmp.ne.s32.totalorder %s93, %s94
      %p108 = scmp.eq.s32.totalorder %s18, 1
      %p109 = por %p107, %p108
      %p111 = scmp.ne.s32.totalorder %s94, %s110
      %p112 = scmp.eq.s32.totalorder %s18, 0
      %p113 = por %p111, %p112
      %p114 = scmp.le.s32.totalorder 1, %s12
      %p115 = scmp.lt.s32.totalorder %s12, 3
      %p116 = pnand %p114, %p115
      %p117 = pneg %p116
      // Predicated region
      $region9: #{tpu_custom_call.1} parent=5 // pred_check
        _
      $region10: #{tpu_custom_call.1} parent=5 // pred_check_branch
        %119 = sbr.rel (%p116) target = $region12
      $region11: #{tpu_custom_call.1} parent=5 // pred_region
        %s120 = ssub.s32 %s12, 1
        // Predicated region
        $region13: #{tpu_custom_call.1} parent=11 // pred_check
          %p121 = pneg %p59
        $region14: #{tpu_custom_call.1} parent=11 // pred_check_branch
          %123 = sbr.rel (%p121) target = $region16
        $region15: #{tpu_custom_call.1} parent=11 // pred_region
          _
        $region16: #{tpu_custom_call.1} parent=11 // pred_fallthru
          _
        // Predicated region
        $region17: #{tpu_custom_call.1} parent=11 // pred_check
          %p124 = pneg %p80
        $region18: #{tpu_custom_call.1} parent=11 // pred_check_branch
          %126 = sbr.rel (%p124) target = $region20
        $region19: #{tpu_custom_call.1} parent=11 // pred_region
          _
        $region20: #{tpu_custom_call.1} parent=11 // pred_fallthru
          _
      $region12: #{tpu_custom_call.1} parent=5 // pred_fallthru
        _
      %p127 = scmp.lt.s32.totalorder %s12, 2
      // Predicated region
      $region21: #{tpu_custom_call.1} parent=5 // pred_check
        %p128 = pneg %p127
      $region22: #{tpu_custom_call.1} parent=5 // pred_check_branch
        %130 = sbr.rel (%p128) target = $region24
      $region23: #{tpu_custom_call.1} parent=5 // pred_region
        // Predicated region
        $region25: #{tpu_custom_call.1} parent=23 // pred_check
          %p131 = pneg %p32
        $region26: #{tpu_custom_call.1} parent=23 // pred_check_branch
          %133 = sbr.rel (%p131) target = $region28
        $region27: #{tpu_custom_call.1} parent=23 // pred_region
          %s134 = smul.u32 4, %s12
          %p135 = scmp.lt.s32.totalorder %s134, 7
          %s136 = scalar_select %p135, %s134, 7
          %s137 = smul.addr %s136, 2
          %s138 = smul.addr %s137, 8
          %s139 = scalar_lea.vmem %s0, %s138
          %s140 = smul.u32 4, %s12
        $region28: #{tpu_custom_call.1} parent=23 // pred_fallthru
          _
      $region24: #{tpu_custom_call.1} parent=5 // pred_fallthru
        _
      %p141 = scmp.le.s32.totalorder 1, %s12
      %p142 = scmp.lt.s32.totalorder %s12, 3
      %p143 = pnand %p141, %p142
      %p144 = pneg %p143
      // Predicated region
      $region29: #{tpu_custom_call.1} parent=5 // pred_check
        _
      $region30: #{tpu_custom_call.1} parent=5 // pred_check_branch
        %146 = sbr.rel (%p143) target = $region32
      $region31: #{tpu_custom_call.1} parent=5 // pred_region
        %s147 = ssub.s32 %s12, 1
        %s148 = smul.u32 4, %s17
        %p149 = scmp.lt.s32.totalorder %s148, 7
        %s150 = scalar_select %p149, %s148, 7
        %s151 = smul.addr %s150, 2
        %s152 = smul.addr %s151, 8
        %s153 = scalar_lea.vmem %s0, %s152
        %p154 = pneg %p38
        %p155 = pneg %p35
        %p156 = pneg %p59
        %p157 = pneg %p56
        %p158 = pneg %p80
        %p159 = pneg %p77
        %p160 = pneg %p106
        %p161 = pneg %p103
        %s162 = sand.u32 %s93, 1
        %s163 = scalar_lea.sflag [#allocation4], %s162
        %s164 = sand.u32 %s93, 1
        %s165 = smul.addr %s164, 64
        %s166 = scalar_lea.vmem [#allocation3], %s165
        %s167 = smul.u32 4, %s17
        %p168 = scmp.lt.s32.totalorder %s167, 7
        %s169 = scalar_select %p168, %s167, 7
        %s170 = smul.addr %s169, 2
        %s171 = smul.addr %s170, 8
        %s172 = scalar_lea.vmem %s0, %s171
        %s173 = smul.u32 4, %s17
        %s174 = smul.u32 4, %s17
        %v175 = vld [vmem:[%s2] sm:$0xff]
        %177 = vset.pattern.permute.xlu0 0
        %178 = vperm.xlu0 %177, %v175
        %v179 = vpop.permute.xlu0 %178
        %181 = vst [vmem:[#allocation2] sm:$0xff] %v179
        %182 = vst [vmem:[#allocation2 + $0x8] sm:$0xff] %v179
        %v183 = vld [vmem:[#allocation2] sm:$0xff]
        %v184 = vld [vmem:[#allocation2 + $0x8] sm:$0xff]
        %v185 = vld [vmem:[%s1] sm:$0xff]
        %v186 = vld [vmem:[%s172] sm:$0xff]
        %v187 = vld [vmem:[%s172 + $0x8] sm:$0xff]
        %vm188 = vcmask 64512
        %v190 = vsel %vm188, %v185, 0
        %192 = vmatprep.subr.mxu0 %v187
        %193 = vmatpush1.msra.mxu0 %v186
        %194 = vmatprep.subr.mxu0 0.0
        %195 = vmatpush1.msra.mxu0 0.0
        %196 = vmatprep.subr.mxu0 0.0
        %197 = vmatpush1.msra.mxu0 0.0
        %198 = vmatprep.subr.mxu0 0.0
        %199 = vmatpush1.msra.mxu0 0.0
        %200 = vmatprep.subr.mxu0 0.0
        %201 = vmatpush1.msra.mxu0 0.0
        %202 = vmatprep.subr.mxu0 0.0
        %203 = vmatpush1.msra.mxu0 0.0
        %204 = vmatprep.subr.mxu0 0.0
        %205 = vmatpush1.msra.mxu0 0.0
        %206 = vmatprep.subr.mxu0 0.0
        %207 = vmatpush1.msra.mxu0 0.0
        %208 = vmatprep.subr.mxu0 0.0
        %209 = vmatpush1.msra.mxu0 0.0
        %210 = vmatprep.subr.mxu0 0.0
        %211 = vmatpush1.msra.mxu0 0.0
        %212 = vmatprep.subr.mxu0 0.0
        %213 = vmatpush1.msra.mxu0 0.0
        %214 = vmatprep.subr.mxu0 0.0
        %215 = vmatpush1.msra.mxu0 0.0
        %216 = vmatprep.subr.mxu0 0.0
        %217 = vmatpush1.msra.mxu0 0.0
        %218 = vmatprep.subr.mxu0 0.0
        %219 = vmatpush1.msra.mxu0 0.0
        %220 = vmatprep.subr.mxu0 0.0
        %221 = vmatpush1.msra.mxu0 0.0
        %222 = vmatprep.subr.mxu0 0.0
        %223 = vmatpush1.msra.mxu0 0.0
        %224 = vmatprep.subr.mxu0 0.0
        %225 = vmatpush1.msra.mxu0 0.0
        %226 = vmatprep.subr.mxu0 0.0
        %227 = vmatpush1.msra.mxu0 0.0
        %228 = vmatprep.subr.mxu0 0.0
        %229 = vmatpush1.msra.mxu0 0.0
        %230 = vmatprep.subr.mxu0 0.0
        %231 = vmatpush1.msra.mxu0 0.0
        %232 = vmatprep.subr.mxu0 0.0
        %233 = vmatpush1.msra.mxu0 0.0
        %234 = vmatprep.subr.mxu0 0.0
        %235 = vmatpush1.msra.mxu0 0.0
        %236 = vmatprep.subr.mxu0 0.0
        %237 = vmatpush1.msra.mxu0 0.0
        %238 = vmatprep.subr.mxu0 0.0
        %239 = vmatpush1.msra.mxu0 0.0
        %240 = vmatprep.subr.mxu0 0.0
        %241 = vmatpush1.msra.mxu0 0.0
        %242 = vmatprep.subr.mxu0 0.0
        %243 = vmatpush1.msra.mxu0 0.0
        %244 = vmatprep.subr.mxu0 0.0
        %245 = vmatpush1.msra.mxu0 0.0
        %246 = vmatprep.subr.mxu0 0.0
        %247 = vmatpush1.msra.mxu0 0.0
        %248 = vmatprep.subr.mxu0 0.0
        %249 = vmatpush1.msra.mxu0 0.0
        %250 = vmatprep.subr.mxu0 0.0
        %251 = vmatpush1.msra.mxu0 0.0
        %252 = vmatprep.subr.mxu0 0.0
        %253 = vmatpush1.msra.mxu0 0.0
        %254 = vmatprep.subr.mxu0 0.0
        %255 = vmatpush1.msra.mxu0 0.0
        %256 = vmatprep.mubr.f32.mxu0 0.0
        %257 = vmatmul.mubr.f32.gmra.mrb[0].mxu0 %v190
        %v258 = vpop.f32.mrb[0].mxu0
        %v259 = vadd.f32 0.0, %v258
        %v260 = vpop.f32.mrb[0].mxu0
        %v261 = vadd.f32 0.0, %v260
        %262 = vdwg.mxu0
        %265 = vrot.lane.b32.xlu0 %v259, 64
        %v266 = vpop.permute.xlu0 %265
        %267 = vrot.lane.b32.xlu0 %v261, 64
        %v268 = vpop.permute.xlu0 %267
        %vm269 = vcmask 523264
        %v270 = vsel %vm269, %v266, %v268
        %v273 = vadd.f32 %v183, %v266
        %v274 = vadd.f32 %v184, %v270
        %vm275 = vcmask 1048064
        %276 = vst.msk [vmem:[#allocation2] sm:$0xff] %vm275, %v273
        %277 = vst [vmem:[#allocation2 + $0x8] sm:$0xff] %v274
        %v278 = vld [vmem:[#allocation2] sm:$0xff]
        %v279 = vld [vmem:[#allocation2 + $0x8] sm:$0xff]
        %s280 = scalar_lea.vmem %s1, 8
        %v281 = vld [vmem:[%s280] sm:$0xff]
        %v282 = vld [vmem:[%s172] sm:$0xff]
        %v283 = vld [vmem:[%s172 + $0x8] sm:$0xff]
        %v285 = vsel %vm188, %v281, 0
        %287 = vmatprep.subr.mxu0 %v283
        %288 = vmatpush1.msra.mxu0 %v282
        %289 = vmatprep.subr.mxu0 0.0
        %290 = vmatpush1.msra.mxu0 0.0
        %291 = vmatprep.subr.mxu0 0.0
        %292 = vmatpush1.msra.mxu0 0.0
        %293 = vmatprep.subr.mxu0 0.0
        %294 = vmatpush1.msra.mxu0 0.0
        %295 = vmatprep.subr.mxu0 0.0
        %296 = vmatpush1.msra.mxu0 0.0
        %297 = vmatprep.subr.mxu0 0.0
        %298 = vmatpush1.msra.mxu0 0.0
        %299 = vmatprep.subr.mxu0 0.0
        %300 = vmatpush1.msra.mxu0 0.0
        %301 = vmatprep.subr.mxu0 0.0
        %302 = vmatpush1.msra.mxu0 0.0
        %303 = vmatprep.subr.mxu0 0.0
        %304 = vmatpush1.msra.mxu0 0.0
        %305 = vmatprep.subr.mxu0 0.0
        %306 = vmatpush1.msra.mxu0 0.0
        %307 = vmatprep.subr.mxu0 0.0
        %308 = vmatpush1.msra.mxu0 0.0
        %309 = vmatprep.subr.mxu0 0.0
        %310 = vmatpush1.msra.mxu0 0.0
        %311 = vmatprep.subr.mxu0 0.0
        %312 = vmatpush1.msra.mxu0 0.0
        %313 = vmatprep.subr.mxu0 0.0
        %314 = vmatpush1.msra.mxu0 0.0
        %315 = vmatprep.subr.mxu0 0.0
        %316 = vmatpush1.msra.mxu0 0.0
        %317 = vmatprep.subr.mxu0 0.0
        %318 = vmatpush1.msra.mxu0 0.0
        %319 = vmatprep.subr.mxu0 0.0
        %320 = vmatpush1.msra.mxu0 0.0
        %321 = vmatprep.subr.mxu0 0.0
        %322 = vmatpush1.msra.mxu0 0.0
        %323 = vmatprep.subr.mxu0 0.0
        %324 = vmatpush1.msra.mxu0 0.0
        %325 = vmatprep.subr.mxu0 0.0
        %326 = vmatpush1.msra.mxu0 0.0
        %327 = vmatprep.subr.mxu0 0.0
        %328 = vmatpush1.msra.mxu0 0.0
        %329 = vmatprep.subr.mxu0 0.0
        %330 = vmatpush1.msra.mxu0 0.0
        %331 = vmatprep.subr.mxu0 0.0
        %332 = vmatpush1.msra.mxu0 0.0
        %333 = vmatprep.subr.mxu0 0.0
        %334 = vmatpush1.msra.mxu0 0.0
        %335 = vmatprep.subr.mxu0 0.0
        %336 = vmatpush1.msra.mxu0 0.0
        %337 = vmatprep.subr.mxu0 0.0
        %338 = vmatpush1.msra.mxu0 0.0
        %339 = vmatprep.subr.mxu0 0.0
        %340 = vmatpush1.msra.mxu0 0.0
        %341 = vmatprep.subr.mxu0 0.0
        %342 = vmatpush1.msra.mxu0 0.0
        %343 = vmatprep.subr.mxu0 0.0
        %344 = vmatpush1.msra.mxu0 0.0
        %345 = vmatprep.subr.mxu0 0.0
        %346 = vmatpush1.msra.mxu0 0.0
        %347 = vmatprep.subr.mxu0 0.0
        %348 = vmatpush1.msra.mxu0 0.0
        %349 = vmatprep.subr.mxu0 0.0
        %350 = vmatpush1.msra.mxu0 0.0
        %351 = vmatprep.mubr.f32.mxu0 0.0
        %352 = vmatmul.mubr.f32.gmra.mrb[0].mxu0 %v285
        %v353 = vpop.f32.mrb[0].mxu0
        %v354 = vadd.f32 0.0, %v353
        %v355 = vpop.f32.mrb[0].mxu0
        %v356 = vadd.f32 0.0, %v355
        %357 = vdwg.mxu0
        %360 = vrot.lane.b32.xlu0 %v354, 48
        %v361 = vpop.permute.xlu0 %360
        %362 = vrot.lane.b32.xlu0 %v356, 48
        %v363 = vpop.permute.xlu0 %362
        %vm364 = vcmask 392192
        %v365 = vsel %vm364, %v361, %v363
        %v368 = vadd.f32 %v278, %v361
        %v369 = vadd.f32 %v279, %v365
        %vm370 = vcmask 1047936
        %371 = vst.msk [vmem:[#allocation2] sm:$0xff] %vm370, %v368
        %372 = vst [vmem:[#allocation2 + $0x8] sm:$0xff] %v369
        %v373 = vld [vmem:[#allocation2] sm:$0xff]
        %v374 = vld [vmem:[#allocation2 + $0x8] sm:$0xff]
        %s375 = scalar_lea.vmem %s1, 16
        %v376 = vld [vmem:[%s375] sm:$0xff]
        %v377 = vld [vmem:[%s172] sm:$0xff]
        %v378 = vld [vmem:[%s172 + $0x8] sm:$0xff]
        %v380 = vsel %vm188, %v376, 0
        %382 = vmatprep.subr.mxu0 %v378
        %383 = vmatpush1.msra.mxu0 %v377
        %384 = vmatprep.subr.mxu0 0.0
        %385 = vmatpush1.msra.mxu0 0.0
        %386 = vmatprep.subr.mxu0 0.0
        %387 = vmatpush1.msra.mxu0 0.0
        %388 = vmatprep.subr.mxu0 0.0
        %389 = vmatpush1.msra.mxu0 0.0
        %390 = vmatprep.subr.mxu0 0.0
        %391 = vmatpush1.msra.mxu0 0.0
        %392 = vmatprep.subr.mxu0 0.0
        %393 = vmatpush1.msra.mxu0 0.0
        %394 = vmatprep.subr.mxu0 0.0
        %395 = vmatpush1.msra.mxu0 0.0
        %396 = vmatprep.subr.mxu0 0.0
        %397 = vmatpush1.msra.mxu0 0.0
        %398 = vmatprep.subr.mxu0 0.0
        %399 = vmatpush1.msra.mxu0 0.0
        %400 = vmatprep.subr.mxu0 0.0
        %401 = vmatpush1.msra.mxu0 0.0
        %402 = vmatprep.subr.mxu0 0.0
        %403 = vmatpush1.msra.mxu0 0.0
        %404 = vmatprep.subr.mxu0 0.0
        %405 = vmatpush1.msra.mxu0 0.0
        %406 = vmatprep.subr.mxu0 0.0
        %407 = vmatpush1.msra.mxu0 0.0
        %408 = vmatprep.subr.mxu0 0.0
        %409 = vmatpush1.msra.mxu0 0.0
        %410 = vmatprep.subr.mxu0 0.0
        %411 = vmatpush1.msra.mxu0 0.0
        %412 = vmatprep.subr.mxu0 0.0
        %413 = vmatpush1.msra.mxu0 0.0
        %414 = vmatprep.subr.mxu0 0.0
        %415 = vmatpush1.msra.mxu0 0.0
        %416 = vmatprep.subr.mxu0 0.0
        %417 = vmatpush1.msra.mxu0 0.0
        %418 = vmatprep.subr.mxu0 0.0
        %419 = vmatpush1.msra.mxu0 0.0
        %420 = vmatprep.subr.mxu0 0.0
        %421 = vmatpush1.msra.mxu0 0.0
        %422 = vmatprep.subr.mxu0 0.0
        %423 = vmatpush1.msra.mxu0 0.0
        %424 = vmatprep.subr.mxu0 0.0
        %425 = vmatpush1.msra.mxu0 0.0
        %426 = vmatprep.subr.mxu0 0.0
        %427 = vmatpush1.msra.mxu0 0.0
        %428 = vmatprep.subr.mxu0 0.0
        %429 = vmatpush1.msra.mxu0 0.0
        %430 = vmatprep.subr.mxu0 0.0
        %431 = vmatpush1.msra.mxu0 0.0
        %432 = vmatprep.subr.mxu0 0.0
        %433 = vmatpush1.msra.mxu0 0.0
        %434 = vmatprep.subr.mxu0 0.0
        %435 = vmatpush1.msra.mxu0 0.0
        %436 = vmatprep.subr.mxu0 0.0
        %437 = vmatpush1.msra.mxu0 0.0
        %438 = vmatprep.subr.mxu0 0.0
        %439 = vmatpush1.msra.mxu0 0.0
        %440 = vmatprep.subr.mxu0 0.0
        %441 = vmatpush1.msra.mxu0 0.0
        %442 = vmatprep.subr.mxu0 0.0
        %443 = vmatpush1.msra.mxu0 0.0
        %444 = vmatprep.subr.mxu0 0.0
        %445 = vmatpush1.msra.mxu0 0.0
        %446 = vmatprep.mubr.f32.mxu0 0.0
        %447 = vmatmul.mubr.f32.gmra.mrb[0].mxu0 %v380
        %v448 = vpop.f32.mrb[0].mxu0
        %v449 = vadd.f32 0.0, %v448
        %v450 = vpop.f32.mrb[0].mxu0
        %v451 = vadd.f32 0.0, %v450
        %452 = vdwg.mxu0
        %455 = vrot.lane.b32.xlu0 %v449, 32
        %v456 = vpop.permute.xlu0 %455
        %457 = vrot.lane.b32.xlu0 %v451, 32
        %v458 = vpop.permute.xlu0 %457
        %vm459 = vcmask 261120
        %v460 = vsel %vm459, %v456, %v458
        %v463 = vadd.f32 %v373, %v456
        %v464 = vadd.f32 %v374, %v460
        %vm465 = vcmask 1047808
        %466 = vst.msk [vmem:[#allocation2] sm:$0xff] %vm465, %v463
        %467 = vst [vmem:[#allocation2 + $0x8] sm:$0xff] %v464
        %v468 = vld [vmem:[#allocation2] sm:$0xff]
        %v469 = vld [vmem:[#allocation2 + $0x8] sm:$0xff]
        %s470 = scalar_lea.vmem %s1, 24
        %v471 = vld [vmem:[%s470] sm:$0xff]
        %v472 = vld [vmem:[%s172] sm:$0xff]
        %v473 = vld [vmem:[%s172 + $0x8] sm:$0xff]
        %v475 = vsel %vm188, %v471, 0
        %477 = vmatprep.subr.mxu0 %v473
        %478 = vmatpush1.msra.mxu0 %v472
        %479 = vmatprep.subr.mxu0 0.0
        %480 = vmatpush1.msra.mxu0 0.0
        %481 = vmatprep.subr.mxu0 0.0
        %482 = vmatpush1.msra.mxu0 0.0
        %483 = vmatprep.subr.mxu0 0.0
        %484 = vmatpush1.msra.mxu0 0.0
        %485 = vmatprep.subr.mxu0 0.0
        %486 = vmatpush1.msra.mxu0 0.0
        %487 = vmatprep.subr.mxu0 0.0
        %488 = vmatpush1.msra.mxu0 0.0
        %489 = vmatprep.subr.mxu0 0.0
        %490 = vmatpush1.msra.mxu0 0.0
        %491 = vmatprep.subr.mxu0 0.0
        %492 = vmatpush1.msra.mxu0 0.0
        %493 = vmatprep.subr.mxu0 0.0
        %494 = vmatpush1.msra.mxu0 0.0
        %495 = vmatprep.subr.mxu0 0.0
        %496 = vmatpush1.msra.mxu0 0.0
        %497 = vmatprep.subr.mxu0 0.0
        %498 = vmatpush1.msra.mxu0 0.0
        %499 = vmatprep.subr.mxu0 0.0
        %500 = vmatpush1.msra.mxu0 0.0
        %501 = vmatprep.subr.mxu0 0.0
        %502 = vmatpush1.msra.mxu0 0.0
        %503 = vmatprep.subr.mxu0 0.0
        %504 = vmatpush1.msra.mxu0 0.0
        %505 = vmatprep.subr.mxu0 0.0
        %506 = vmatpush1.msra.mxu0 0.0
        %507 = vmatprep.subr.mxu0 0.0
        %508 = vmatpush1.msra.mxu0 0.0
        %509 = vmatprep.subr.mxu0 0.0
        %510 = vmatpush1.msra.mxu0 0.0
        %511 = vmatprep.subr.mxu0 0.0
        %512 = vmatpush1.msra.mxu0 0.0
        %513 = vmatprep.subr.mxu0 0.0
        %514 = vmatpush1.msra.mxu0 0.0
        %515 = vmatprep.subr.mxu0 0.0
        %516 = vmatpush1.msra.mxu0 0.0
        %517 = vmatprep.subr.mxu0 0.0
        %518 = vmatpush1.msra.mxu0 0.0
        %519 = vmatprep.subr.mxu0 0.0
        %520 = vmatpush1.msra.mxu0 0.0
        %521 = vmatprep.subr.mxu0 0.0
        %522 = vmatpush1.msra.mxu0 0.0
        %523 = vmatprep.subr.mxu0 0.0
        %524 = vmatpush1.msra.mxu0 0.0
        %525 = vmatprep.subr.mxu0 0.0
        %526 = vmatpush1.msra.mxu0 0.0
        %527 = vmatprep.subr.mxu0 0.0
        %528 = vmatpush1.msra.mxu0 0.0
        %529 = vmatprep.subr.mxu0 0.0
        %530 = vmatpush1.msra.mxu0 0.0
        %531 = vmatprep.subr.mxu0 0.0
        %532 = vmatpush1.msra.mxu0 0.0
        %533 = vmatprep.subr.mxu0 0.0
        %534 = vmatpush1.msra.mxu0 0.0
        %535 = vmatprep.subr.mxu0 0.0
        %536 = vmatpush1.msra.mxu0 0.0
        %537 = vmatprep.subr.mxu0 0.0
        %538 = vmatpush1.msra.mxu0 0.0
        %539 = vmatprep.subr.mxu0 0.0
        %540 = vmatpush1.msra.mxu0 0.0
        %541 = vmatprep.mubr.f32.mxu0 0.0
        %542 = vmatmul.mubr.f32.gmra.mrb[0].mxu0 %v475
        %v543 = vpop.f32.mrb[0].mxu0
        %v544 = vadd.f32 0.0, %v543
        %v545 = vpop.f32.mrb[0].mxu0
        %v546 = vadd.f32 0.0, %v545
        %547 = vdwg.mxu0
        %550 = vrot.lane.b32.xlu0 %v544, 16
        %v551 = vpop.permute.xlu0 %550
        %552 = vrot.lane.b32.xlu0 %v546, 16
        %v553 = vpop.permute.xlu0 %552
        %vm554 = vcmask 130048
        %v555 = vsel %vm554, %v551, %v553
        %v558 = vadd.f32 %v468, %v551
        %v559 = vadd.f32 %v469, %v555
        %vm560 = vcmask 1047680
        %561 = vst.msk [vmem:[#allocation2] sm:$0xff] %vm560, %v558
        %562 = vst [vmem:[#allocation2 + $0x8] sm:$0xff] %v559
        %v563 = vld [vmem:[#allocation2] sm:$0xff]
        %v564 = vld [vmem:[#allocation2 + $0x8] sm:$0xff]
        %s565 = scalar_lea.vmem %s1, 32
        %v566 = vld [vmem:[%s565] sm:$0xff]
        %v567 = vld [vmem:[%s172] sm:$0xff]
        %v568 = vld [vmem:[%s172 + $0x8] sm:$0xff]
        %v570 = vsel %vm188, %v566, 0
        %572 = vmatprep.subr.mxu0 %v568
        %573 = vmatpush1.msra.mxu0 %v567
        %574 = vmatprep.subr.mxu0 0.0
        %575 = vmatpush1.msra.mxu0 0.0
        %576 = vmatprep.subr.mxu0 0.0
        %577 = vmatpush1.msra.mxu0 0.0
        %578 = vmatprep.subr.mxu0 0.0
        %579 = vmatpush1.msra.mxu0 0.0
        %580 = vmatprep.subr.mxu0 0.0
        %581 = vmatpush1.msra.mxu0 0.0
        %582 = vmatprep.subr.mxu0 0.0
        %583 = vmatpush1.msra.mxu0 0.0
        %584 = vmatprep.subr.mxu0 0.0
        %585 = vmatpush1.msra.mxu0 0.0
        %586 = vmatprep.subr.mxu0 0.0
        %587 = vmatpush1.msra.mxu0 0.0
        %588 = vmatprep.subr.mxu0 0.0
        %589 = vmatpush1.msra.mxu0 0.0
        %590 = vmatprep.subr.mxu0 0.0
        %591 = vmatpush1.msra.mxu0 0.0
        %592 = vmatprep.subr.mxu0 0.0
        %593 = vmatpush1.msra.mxu0 0.0
        %594 = vmatprep.subr.mxu0 0.0
        %595 = vmatpush1.msra.mxu0 0.0
        %596 = vmatprep.subr.mxu0 0.0
        %597 = vmatpush1.msra.mxu0 0.0
        %598 = vmatprep.subr.mxu0 0.0
        %599 = vmatpush1.msra.mxu0 0.0
        %600 = vmatprep.subr.mxu0 0.0
        %601 = vmatpush1.msra.mxu0 0.0
        %602 = vmatprep.subr.mxu0 0.0
        %603 = vmatpush1.msra.mxu0 0.0
        %604 = vmatprep.subr.mxu0 0.0
        %605 = vmatpush1.msra.mxu0 0.0
        %606 = vmatprep.subr.mxu0 0.0
        %607 = vmatpush1.msra.mxu0 0.0
        %608 = vmatprep.subr.mxu0 0.0
        %609 = vmatpush1.msra.mxu0 0.0
        %610 = vmatprep.subr.mxu0 0.0
        %611 = vmatpush1.msra.mxu0 0.0
        %612 = vmatprep.subr.mxu0 0.0
        %613 = vmatpush1.msra.mxu0 0.0
        %614 = vmatprep.subr.mxu0 0.0
        %615 = vmatpush1.msra.mxu0 0.0
        %616 = vmatprep.subr.mxu0 0.0
        %617 = vmatpush1.msra.mxu0 0.0
        %618 = vmatprep.subr.mxu0 0.0
        %619 = vmatpush1.msra.mxu0 0.0
        %620 = vmatprep.subr.mxu0 0.0
        %621 = vmatpush1.msra.mxu0 0.0
        %622 = vmatprep.subr.mxu0 0.0
        %623 = vmatpush1.msra.mxu0 0.0
        %624 = vmatprep.subr.mxu0 0.0
        %625 = vmatpush1.msra.mxu0 0.0
        %626 = vmatprep.subr.mxu0 0.0
        %627 = vmatpush1.msra.mxu0 0.0
        %628 = vmatprep.subr.mxu0 0.0
        %629 = vmatpush1.msra.mxu0 0.0
        %630 = vmatprep.subr.mxu0 0.0
        %631 = vmatpush1.msra.mxu0 0.0
        %632 = vmatprep.subr.mxu0 0.0
        %633 = vmatpush1.msra.mxu0 0.0
        %634 = vmatprep.subr.mxu0 0.0
        %635 = vmatpush1.msra.mxu0 0.0
        %636 = vmatprep.mubr.f32.mxu0 0.0
        %637 = vmatmul.mubr.f32.gmra.mrb[0].mxu0 %v570
        %v638 = vpop.f32.mrb[0].mxu0
        %v639 = vadd.f32 0.0, %v638
        %v640 = vpop.f32.mrb[0].mxu0
        %v641 = vadd.f32 0.0, %v640
        %642 = vdwg.mxu0
        %v643 = vadd.f32 %v563, %v639
        %v644 = vadd.f32 %v564, %v641
        %645 = vst [vmem:[#allocation2] sm:$0xff] %v643
        %646 = vst [vmem:[#allocation2 + $0x8] sm:$0xff] %v644
        %v647 = vld [vmem:[#allocation2] sm:$0xff]
        %v648 = vld [vmem:[#allocation2 + $0x8] sm:$0xff]
        %s649 = scalar_lea.vmem %s1, 40
        %v650 = vld [vmem:[%s649] sm:$0xff]
        %v651 = vld [vmem:[%s172] sm:$0xff]
        %v652 = vld [vmem:[%s172 + $0x8] sm:$0xff]
        %655 = vrot.lane.b32.xlu0 %v651, 112
        %v656 = vpop.permute.xlu0 %655
        %657 = vrot.lane.b32.xlu0 %v652, 112
        %v658 = vpop.permute.xlu0 %657
        %vm659 = vcmask 916480
        %v660 = vsel %vm659, %v656, %v658
        %v664 = vsel %vm188, %v650, 0
        %666 = vmatprep.subr.mxu0 %v658
        %667 = vmatpush1.msra.mxu0 %v660
        %668 = vmatprep.subr.mxu0 0.0
        %669 = vmatpush1.msra.mxu0 0.0
        %670 = vmatprep.subr.mxu0 0.0
        %671 = vmatpush1.msra.mxu0 0.0
        %672 = vmatprep.subr.mxu0 0.0
        %673 = vmatpush1.msra.mxu0 0.0
        %674 = vmatprep.subr.mxu0 0.0
        %675 = vmatpush1.msra.mxu0 0.0
        %676 = vmatprep.subr.mxu0 0.0
        %677 = vmatpush1.msra.mxu0 0.0
        %678 = vmatprep.subr.mxu0 0.0
        %679 = vmatpush1.msra.mxu0 0.0
        %680 = vmatprep.subr.mxu0 0.0
        %681 = vmatpush1.msra.mxu0 0.0
        %682 = vmatprep.subr.mxu0 0.0
        %683 = vmatpush1.msra.mxu0 0.0
        %684 = vmatprep.subr.mxu0 0.0
        %685 = vmatpush1.msra.mxu0 0.0
        %686 = vmatprep.subr.mxu0 0.0
        %687 = vmatpush1.msra.mxu0 0.0
        %688 = vmatprep.subr.mxu0 0.0
        %689 = vmatpush1.msra.mxu0 0.0
        %690 = vmatprep.subr.mxu0 0.0
        %691 = vmatpush1.msra.mxu0 0.0
        %692 = vmatprep.subr.mxu0 0.0
        %693 = vmatpush1.msra.mxu0 0.0
        %694 = vmatprep.subr.mxu0 0.0
        %695 = vmatpush1.msra.mxu0 0.0
        %696 = vmatprep.subr.mxu0 0.0
        %697 = vmatpush1.msra.mxu0 0.0
        %698 = vmatprep.subr.mxu0 0.0
        %699 = vmatpush1.msra.mxu0 0.0
        %700 = vmatprep.subr.mxu0 0.0
        %701 = vmatpush1.msra.mxu0 0.0
        %702 = vmatprep.subr.mxu0 0.0
        %703 = vmatpush1.msra.mxu0 0.0
        %704 = vmatprep.subr.mxu0 0.0
        %705 = vmatpush1.msra.mxu0 0.0
        %706 = vmatprep.subr.mxu0 0.0
        %707 = vmatpush1.msra.mxu0 0.0
        %708 = vmatprep.subr.mxu0 0.0
        %709 = vmatpush1.msra.mxu0 0.0
        %710 = vmatprep.subr.mxu0 0.0
        %711 = vmatpush1.msra.mxu0 0.0
        %712 = vmatprep.subr.mxu0 0.0
        %713 = vmatpush1.msra.mxu0 0.0
        %714 = vmatprep.subr.mxu0 0.0
        %715 = vmatpush1.msra.mxu0 0.0
        %716 = vmatprep.subr.mxu0 0.0
        %717 = vmatpush1.msra.mxu0 0.0
        %718 = vmatprep.subr.mxu0 0.0
        %719 = vmatpush1.msra.mxu0 0.0
        %720 = vmatprep.subr.mxu0 0.0
        %721 = vmatpush1.msra.mxu0 0.0
        %722 = vmatprep.subr.mxu0 0.0
        %723 = vmatpush1.msra.mxu0 0.0
        %724 = vmatprep.subr.mxu0 0.0
        %725 = vmatpush1.msra.mxu0 0.0
        %726 = vmatprep.subr.mxu0 0.0
        %727 = vmatpush1.msra.mxu0 0.0
        %728 = vmatprep.subr.mxu0 0.0
        %729 = vmatpush1.msra.mxu0 0.0
        %730 = vmatprep.mubr.f32.mxu0 0.0
        %731 = vmatmul.mubr.f32.gmra.mrb[0].mxu0 %v664
        %v732 = vpop.f32.mrb[0].mxu0
        %v733 = vadd.f32 0.0, %v732
        %v734 = vpop.f32.mrb[0].mxu0
        %v735 = vadd.f32 0.0, %v734
        %736 = vdwg.mxu0
        %v737 = vadd.f32 %v647, %v733
        %v738 = vadd.f32 %v648, %v735
        %739 = vst [vmem:[#allocation2] sm:$0xff] %v737
        %740 = vst.msk [vmem:[#allocation2 + $0x8] sm:$0xff] %vm659, %v738
        %v741 = vld [vmem:[#allocation2] sm:$0xff]
        %v742 = vld [vmem:[#allocation2 + $0x8] sm:$0xff]
        %s743 = scalar_lea.vmem %s1, 48
        %v744 = vld [vmem:[%s743] sm:$0xff]
        %v745 = vld [vmem:[%s172] sm:$0xff]
        %v746 = vld [vmem:[%s172 + $0x8] sm:$0xff]
        %749 = vrot.lane.b32.xlu0 %v745, 96
        %v750 = vpop.permute.xlu0 %749
        %751 = vrot.lane.b32.xlu0 %v746, 96
        %v752 = vpop.permute.xlu0 %751
        %vm753 = vcmask 785408
        %v754 = vsel %vm753, %v750, %v752
        %v758 = vsel %vm188, %v744, 0
        %760 = vmatprep.subr.mxu0 %v752
        %761 = vmatpush1.msra.mxu0 %v754
        %762 = vmatprep.subr.mxu0 0.0
        %763 = vmatpush1.msra.mxu0 0.0
        %764 = vmatprep.subr.mxu0 0.0
        %765 = vmatpush1.msra.mxu0 0.0
        %766 = vmatprep.subr.mxu0 0.0
        %767 = vmatpush1.msra.mxu0 0.0
        %768 = vmatprep.subr.mxu0 0.0
        %769 = vmatpush1.msra.mxu0 0.0
        %770 = vmatprep.subr.mxu0 0.0
        %771 = vmatpush1.msra.mxu0 0.0
        %772 = vmatprep.subr.mxu0 0.0
        %773 = vmatpush1.msra.mxu0 0.0
        %774 = vmatprep.subr.mxu0 0.0
        %775 = vmatpush1.msra.mxu0 0.0
        %776 = vmatprep.subr.mxu0 0.0
        %777 = vmatpush1.msra.mxu0 0.0
        %778 = vmatprep.subr.mxu0 0.0
        %779 = vmatpush1.msra.mxu0 0.0
        %780 = vmatprep.subr.mxu0 0.0
        %781 = vmatpush1.msra.mxu0 0.0
        %782 = vmatprep.subr.mxu0 0.0
        %783 = vmatpush1.msra.mxu0 0.0
        %784 = vmatprep.subr.mxu0 0.0
        %785 = vmatpush1.msra.mxu0 0.0
        %786 = vmatprep.subr.mxu0 0.0
        %787 = vmatpush1.msra.mxu0 0.0
        %788 = vmatprep.subr.mxu0 0.0
        %789 = vmatpush1.msra.mxu0 0.0
        %790 = vmatprep.subr.mxu0 0.0
        %791 = vmatpush1.msra.mxu0 0.0
        %792 = vmatprep.subr.mxu0 0.0
        %793 = vmatpush1.msra.mxu0 0.0
        %794 = vmatprep.subr.mxu0 0.0
        %795 = vmatpush1.msra.mxu0 0.0
        %796 = vmatprep.subr.mxu0 0.0
        %797 = vmatpush1.msra.mxu0 0.0
        %798 = vmatprep.subr.mxu0 0.0
        %799 = vmatpush1.msra.mxu0 0.0
        %800 = vmatprep.subr.mxu0 0.0
        %801 = vmatpush1.msra.mxu0 0.0
        %802 = vmatprep.subr.mxu0 0.0
        %803 = vmatpush1.msra.mxu0 0.0
        %804 = vmatprep.subr.mxu0 0.0
        %805 = vmatpush1.msra.mxu0 0.0
        %806 = vmatprep.subr.mxu0 0.0
        %807 = vmatpush1.msra.mxu0 0.0
        %808 = vmatprep.subr.mxu0 0.0
        %809 = vmatpush1.msra.mxu0 0.0
        %810 = vmatprep.subr.mxu0 0.0
        %811 = vmatpush1.msra.mxu0 0.0
        %812 = vmatprep.subr.mxu0 0.0
        %813 = vmatpush1.msra.mxu0 0.0
        %814 = vmatprep.subr.mxu0 0.0
        %815 = vmatpush1.msra.mxu0 0.0
        %816 = vmatprep.subr.mxu0 0.0
        %817 = vmatpush1.msra.mxu0 0.0
        %818 = vmatprep.subr.mxu0 0.0
        %819 = vmatpush1.msra.mxu0 0.0
        %820 = vmatprep.subr.mxu0 0.0
        %821 = vmatpush1.msra.mxu0 0.0
        %822 = vmatprep.subr.mxu0 0.0
        %823 = vmatpush1.msra.mxu0 0.0
        %824 = vmatprep.mubr.f32.mxu0 0.0
        %825 = vmatmul.mubr.f32.gmra.mrb[0].mxu0 %v758
        %v826 = vpop.f32.mrb[0].mxu0
        %v827 = vadd.f32 0.0, %v826
        %v828 = vpop.f32.mrb[0].mxu0
        %v829 = vadd.f32 0.0, %v828
        %830 = vdwg.mxu0
        %v831 = vadd.f32 %v741, %v827
        %v832 = vadd.f32 %v742, %v829
        %833 = vst [vmem:[#allocation2] sm:$0xff] %v831
        %834 = vst.msk [vmem:[#allocation2 + $0x8] sm:$0xff] %vm753, %v832
        %v835 = vld [vmem:[#allocation2] sm:$0xff]
        %v836 = vld [vmem:[#allocation2 + $0x8] sm:$0xff]
        %s837 = scalar_lea.vmem %s1, 56
        %v838 = vld [vmem:[%s837] sm:$0xff]
        %v839 = vld [vmem:[%s172] sm:$0xff]
        %v840 = vld [vmem:[%s172 + $0x8] sm:$0xff]
        %843 = vrot.lane.b32.xlu0 %v839, 80
        %v844 = vpop.permute.xlu0 %843
        %845 = vrot.lane.b32.xlu0 %v840, 80
        %v846 = vpop.permute.xlu0 %845
        %vm847 = vcmask 654336
        %v848 = vsel %vm847, %v844, %v846
        %v852 = vsel %vm188, %v838, 0
        %854 = vmatprep.subr.mxu0 %v846
        %855 = vmatpush1.msra.mxu0 %v848
        %856 = vmatprep.subr.mxu0 0.0
        %857 = vmatpush1.msra.mxu0 0.0
        %858 = vmatprep.subr.mxu0 0.0
        %859 = vmatpush1.msra.mxu0 0.0
        %860 = vmatprep.subr.mxu0 0.0
        %861 = vmatpush1.msra.mxu0 0.0
        %862 = vmatprep.subr.mxu0 0.0
        %863 = vmatpush1.msra.mxu0 0.0
        %864 = vmatprep.subr.mxu0 0.0
        %865 = vmatpush1.msra.mxu0 0.0
        %866 = vmatprep.subr.mxu0 0.0
        %867 = vmatpush1.msra.mxu0 0.0
        %868 = vmatprep.subr.mxu0 0.0
        %869 = vmatpush1.msra.mxu0 0.0
        %870 = vmatprep.subr.mxu0 0.0
        %871 = vmatpush1.msra.mxu0 0.0
        %872 = vmatprep.subr.mxu0 0.0
        %873 = vmatpush1.msra.mxu0 0.0
        %874 = vmatprep.subr.mxu0 0.0
        %875 = vmatpush1.msra.mxu0 0.0
        %876 = vmatprep.subr.mxu0 0.0
        %877 = vmatpush1.msra.mxu0 0.0
        %878 = vmatprep.subr.mxu0 0.0
        %879 = vmatpush1.msra.mxu0 0.0
        %880 = vmatprep.subr.mxu0 0.0
        %881 = vmatpush1.msra.mxu0 0.0
        %882 = vmatprep.subr.mxu0 0.0
        %883 = vmatpush1.msra.mxu0 0.0
        %884 = vmatprep.subr.mxu0 0.0
        %885 = vmatpush1.msra.mxu0 0.0
        %886 = vmatprep.subr.mxu0 0.0
        %887 = vmatpush1.msra.mxu0 0.0
        %888 = vmatprep.subr.mxu0 0.0
        %889 = vmatpush1.msra.mxu0 0.0
        %890 = vmatprep.subr.mxu0 0.0
        %891 = vmatpush1.msra.mxu0 0.0
        %892 = vmatprep.subr.mxu0 0.0
        %893 = vmatpush1.msra.mxu0 0.0
        %894 = vmatprep.subr.mxu0 0.0
        %895 = vmatpush1.msra.mxu0 0.0
        %896 = vmatprep.subr.mxu0 0.0
        %897 = vmatpush1.msra.mxu0 0.0
        %898 = vmatprep.subr.mxu0 0.0
        %899 = vmatpush1.msra.mxu0 0.0
        %900 = vmatprep.subr.mxu0 0.0
        %901 = vmatpush1.msra.mxu0 0.0
        %902 = vmatprep.subr.mxu0 0.0
        %903 = vmatpush1.msra.mxu0 0.0
        %904 = vmatprep.subr.mxu0 0.0
        %905 = vmatpush1.msra.mxu0 0.0
        %906 = vmatprep.subr.mxu0 0.0
        %907 = vmatpush1.msra.mxu0 0.0
        %908 = vmatprep.subr.mxu0 0.0
        %909 = vmatpush1.msra.mxu0 0.0
        %910 = vmatprep.subr.mxu0 0.0
        %911 = vmatpush1.msra.mxu0 0.0
        %912 = vmatprep.subr.mxu0 0.0
        %913 = vmatpush1.msra.mxu0 0.0
        %914 = vmatprep.subr.mxu0 0.0
        %915 = vmatpush1.msra.mxu0 0.0
        %916 = vmatprep.subr.mxu0 0.0
        %917 = vmatpush1.msra.mxu0 0.0
        %918 = vmatprep.mubr.f32.mxu0 0.0
        %919 = vmatmul.mubr.f32.gmra.mrb[0].mxu0 %v852
        %v920 = vpop.f32.mrb[0].mxu0
        %v921 = vadd.f32 0.0, %v920
        %v922 = vpop.f32.mrb[0].mxu0
        %v923 = vadd.f32 0.0, %v922
        %924 = vdwg.mxu0
        %v925 = vadd.f32 %v835, %v921
        %v926 = vadd.f32 %v836, %v923
        %927 = vst [vmem:[#allocation2] sm:$0xff] %v925
        %928 = vst.msk [vmem:[#allocation2 + $0x8] sm:$0xff] %vm847, %v926
        %v929 = vld [vmem:[#allocation2] sm:$0xff]
        %v930 = vld [vmem:[#allocation2 + $0x8] sm:$0xff]
        %s931 = scalar_lea.vmem %s1, 64
        %v932 = vld [vmem:[%s931] sm:$0xff]
        %v933 = vld [vmem:[%s172] sm:$0xff]
        %v934 = vld [vmem:[%s172 + $0x8] sm:$0xff]
        %937 = vrot.lane.b32.xlu0 %v933, 64
        %v938 = vpop.permute.xlu0 %937
        %939 = vrot.lane.b32.xlu0 %v934, 64
        %v940 = vpop.permute.xlu0 %939
        %v941 = vsel %vm269, %v938, %v940
        %v945 = vsel %vm188, %v932, 0
        %947 = vmatprep.subr.mxu0 %v940
        %948 = vmatpush1.msra.mxu0 %v941
        %949 = vmatprep.subr.mxu0 0.0
        %950 = vmatpush1.msra.mxu0 0.0
        %951 = vmatprep.subr.mxu0 0.0
        %952 = vmatpush1.msra.mxu0 0.0
        %953 = vmatprep.subr.mxu0 0.0
        %954 = vmatpush1.msra.mxu0 0.0
        %955 = vmatprep.subr.mxu0 0.0
        %956 = vmatpush1.msra.mxu0 0.0
        %957 = vmatprep.subr.mxu0 0.0
        %958 = vmatpush1.msra.mxu0 0.0
        %959 = vmatprep.subr.mxu0 0.0
        %960 = vmatpush1.msra.mxu0 0.0
        %961 = vmatprep.subr.mxu0 0.0
        %962 = vmatpush1.msra.mxu0 0.0
        %963 = vmatprep.subr.mxu0 0.0
        %964 = vmatpush1.msra.mxu0 0.0
        %965 = vmatprep.subr.mxu0 0.0
        %966 = vmatpush1.msra.mxu0 0.0
        %967 = vmatprep.subr.mxu0 0.0
        %968 = vmatpush1.msra.mxu0 0.0
        %969 = vmatprep.subr.mxu0 0.0
        %970 = vmatpush1.msra.mxu0 0.0
        %971 = vmatprep.subr.mxu0 0.0
        %972 = vmatpush1.msra.mxu0 0.0
        %973 = vmatprep.subr.mxu0 0.0
        %974 = vmatpush1.msra.mxu0 0.0
        %975 = vmatprep.subr.mxu0 0.0
        %976 = vmatpush1.msra.mxu0 0.0
        %977 = vmatprep.subr.mxu0 0.0
        %978 = vmatpush1.msra.mxu0 0.0
        %979 = vmatprep.subr.mxu0 0.0
        %980 = vmatpush1.msra.mxu0 0.0
        %981 = vmatprep.subr.mxu0 0.0
        %982 = vmatpush1.msra.mxu0 0.0
        %983 = vmatprep.subr.mxu0 0.0
        %984 = vmatpush1.msra.mxu0 0.0
        %985 = vmatprep.subr.mxu0 0.0
        %986 = vmatpush1.msra.mxu0 0.0
        %987 = vmatprep.subr.mxu0 0.0
        %988 = vmatpush1.msra.mxu0 0.0
        %989 = vmatprep.subr.mxu0 0.0
        %990 = vmatpush1.msra.mxu0 0.0
        %991 = vmatprep.subr.mxu0 0.0
        %992 = vmatpush1.msra.mxu0 0.0
        %993 = vmatprep.subr.mxu0 0.0
        %994 = vmatpush1.msra.mxu0 0.0
        %995 = vmatprep.subr.mxu0 0.0
        %996 = vmatpush1.msra.mxu0 0.0
        %997 = vmatprep.subr.mxu0 0.0
        %998 = vmatpush1.msra.mxu0 0.0
        %999 = vmatprep.subr.mxu0 0.0
        %1000 = vmatpush1.msra.mxu0 0.0
        %1001 = vmatprep.subr.mxu0 0.0
        %1002 = vmatpush1.msra.mxu0 0.0
        %1003 = vmatprep.subr.mxu0 0.0
        %1004 = vmatpush1.msra.mxu0 0.0
        %1005 = vmatprep.subr.mxu0 0.0
        %1006 = vmatpush1.msra.mxu0 0.0
        %1007 = vmatprep.subr.mxu0 0.0
        %1008 = vmatpush1.msra.mxu0 0.0
        %1009 = vmatprep.subr.mxu0 0.0
        %1010 = vmatpush1.msra.mxu0 0.0
        %1011 = vmatprep.mubr.f32.mxu0 0.0
        %1012 = vmatmul.mubr.f32.gmra.mrb[0].mxu0 %v945
        %v1013 = vpop.f32.mrb[0].mxu0
        %v1014 = vadd.f32 0.0, %v1013
        %v1015 = vpop.f32.mrb[0].mxu0
        %v1016 = vadd.f32 0.0, %v1015
        %1017 = vdwg.mxu0
        %v1018 = vadd.f32 %v929, %v1014
        %v1019 = vadd.f32 %v930, %v1016
        %1020 = vst [vmem:[#allocation2] sm:$0xff] %v1018
        %1021 = vst.msk [vmem:[#allocation2 + $0x8] sm:$0xff] %vm269, %v1019
        %v1022 = vld [vmem:[#allocation2] sm:$0xff]
        %v1023 = vld [vmem:[#allocation2 + $0x8] sm:$0xff]
        %1024 = vst [vmem:[%s166] sm:$0xff] %v1022
        %1025 = vst [vmem:[%s166 + $0x8] sm:$0xff] %v1023
        %1026 = vst [vmem:[#allocation2] sm:$0xff] %v179
        %1027 = vst [vmem:[#allocation2 + $0x8] sm:$0xff] %v179
        %v1028 = vld [vmem:[#allocation2] sm:$0xff]
        %v1029 = vld [vmem:[#allocation2 + $0x8] sm:$0xff]
        %v1030 = vld [vmem:[%s1] sm:$0xff]
        %s1031 = scalar_lea.vmem %s172, 16
        %v1032 = vld [vmem:[%s1031] sm:$0xff]
        %v1033 = vld [vmem:[%s1031 + $0x8] sm:$0xff]
        %v1035 = vsel %vm188, %v1030, 0
        %1037 = vmatprep.subr.mxu0 %v1033
        %1038 = vmatpush1.msra.mxu0 %v1032
        %1039 = vmatprep.subr.mxu0 0.0
        %1040 = vmatpush1.msra.mxu0 0.0
        %1041 = vmatprep.subr.mxu0 0.0
        %1042 = vmatpush1.msra.mxu0 0.0
        %1043 = vmatprep.subr.mxu0 0.0
        %1044 = vmatpush1.msra.mxu0 0.0
        %1045 = vmatprep.subr.mxu0 0.0
        %1046 = vmatpush1.msra.mxu0 0.0
        %1047 = vmatprep.subr.mxu0 0.0
        %1048 = vmatpush1.msra.mxu0 0.0
        %1049 = vmatprep.subr.mxu0 0.0
        %1050 = vmatpush1.msra.mxu0 0.0
        %1051 = vmatprep.subr.mxu0 0.0
        %1052 = vmatpush1.msra.mxu0 0.0
        %1053 = vmatprep.subr.mxu0 0.0
        %1054 = vmatpush1.msra.mxu0 0.0
        %1055 = vmatprep.subr.mxu0 0.0
        %1056 = vmatpush1.msra.mxu0 0.0
        %1057 = vmatprep.subr.mxu0 0.0
        %1058 = vmatpush1.msra.mxu0 0.0
        %1059 = vmatprep.subr.mxu0 0.0
        %1060 = vmatpush1.msra.mxu0 0.0
        %1061 = vmatprep.subr.mxu0 0.0
        %1062 = vmatpush1.msra.mxu0 0.0
        %1063 = vmatprep.subr.mxu0 0.0
        %1064 = vmatpush1.msra.mxu0 0.0
        %1065 = vmatprep.subr.mxu0 0.0
        %1066 = vmatpush1.msra.mxu0 0.0
        %1067 = vmatprep.subr.mxu0 0.0
        %1068 = vmatpush1.msra.mxu0 0.0
        %1069 = vmatprep.subr.mxu0 0.0
        %1070 = vmatpush1.msra.mxu0 0.0
        %1071 = vmatprep.subr.mxu0 0.0
        %1072 = vmatpush1.msra.mxu0 0.0
        %1073 = vmatprep.subr.mxu0 0.0
        %1074 = vmatpush1.msra.mxu0 0.0
        %1075 = vmatprep.subr.mxu0 0.0
        %1076 = vmatpush1.msra.mxu0 0.0
        %1077 = vmatprep.subr.mxu0 0.0
        %1078 = vmatpush1.msra.mxu0 0.0
        %1079 = vmatprep.subr.mxu0 0.0
        %1080 = vmatpush1.msra.mxu0 0.0
        %1081 = vmatprep.subr.mxu0 0.0
        %1082 = vmatpush1.msra.mxu0 0.0
        %1083 = vmatprep.subr.mxu0 0.0
        %1084 = vmatpush1.msra.mxu0 0.0
        %1085 = vmatprep.subr.mxu0 0.0
        %1086 = vmatpush1.msra.mxu0 0.0
        %1087 = vmatprep.subr.mxu0 0.0
        %1088 = vmatpush1.msra.mxu0 0.0
        %1089 = vmatprep.subr.mxu0 0.0
        %1090 = vmatpush1.msra.mxu0 0.0
        %1091 = vmatprep.subr.mxu0 0.0
        %1092 = vmatpush1.msra.mxu0 0.0
        %1093 = vmatprep.subr.mxu0 0.0
        %1094 = vmatpush1.msra.mxu0 0.0
        %1095 = vmatprep.subr.mxu0 0.0
        %1096 = vmatpush1.msra.mxu0 0.0
        %1097 = vmatprep.subr.mxu0 0.0
        %1098 = vmatpush1.msra.mxu0 0.0
        %1099 = vmatprep.subr.mxu0 0.0
        %1100 = vmatpush1.msra.mxu0 0.0
        %1101 = vmatprep.mubr.f32.mxu0 0.0
        %1102 = vmatmul.mubr.f32.gmra.mrb[0].mxu0 %v1035
        %v1103 = vpop.f32.mrb[0].mxu0
        %v1104 = vadd.f32 0.0, %v1103
        %v1105 = vpop.f32.mrb[0].mxu0
        %v1106 = vadd.f32 0.0, %v1105
        %1107 = vdwg.mxu0
        %1110 = vrot.lane.b32.xlu0 %v1104, 64
        %v1111 = vpop.permute.xlu0 %1110
        %1112 = vrot.lane.b32.xlu0 %v1106, 64
        %v1113 = vpop.permute.xlu0 %1112
        %v1114 = vsel %vm269, %v1111, %v1113
        %v1117 = vadd.f32 %v1028, %v1111
        %v1118 = vadd.f32 %v1029, %v1114
        %1119 = vst.msk [vmem:[#allocation2] sm:$0xff] %vm275, %v1117
        %1120 = vst [vmem:[#allocation2 + $0x8] sm:$0xff] %v1118
        %v1121 = vld [vmem:[#allocation2] sm:$0xff]
        %v1122 = vld [vmem:[#allocation2 + $0x8] sm:$0xff]
        %v1123 = vld [vmem:[%s280] sm:$0xff]
        %v1124 = vld [vmem:[%s1031] sm:$0xff]
        %v1125 = vld [vmem:[%s1031 + $0x8] sm:$0xff]
        %v1127 = vsel %vm188, %v1123, 0
        %1129 = vmatprep.subr.mxu0 %v1125
        %1130 = vmatpush1.msra.mxu0 %v1124
        %1131 = vmatprep.subr.mxu0 0.0
        %1132 = vmatpush1.msra.mxu0 0.0
        %1133 = vmatprep.subr.mxu0 0.0
        %1134 = vmatpush1.msra.mxu0 0.0
        %1135 = vmatprep.subr.mxu0 0.0
        %1136 = vmatpush1.msra.mxu0 0.0
        %1137 = vmatprep.subr.mxu0 0.0
        %1138 = vmatpush1.msra.mxu0 0.0
        %1139 = vmatprep.subr.mxu0 0.0
        %1140 = vmatpush1.msra.mxu0 0.0
        %1141 = vmatprep.subr.mxu0 0.0
        %1142 = vmatpush1.msra.mxu0 0.0
        %1143 = vmatprep.subr.mxu0 0.0
        %1144 = vmatpush1.msra.mxu0 0.0
        %1145 = vmatprep.subr.mxu0 0.0
        %1146 = vmatpush1.msra.mxu0 0.0
        %1147 = vmatprep.subr.mxu0 0.0
        %1148 = vmatpush1.msra.mxu0 0.0
        %1149 = vmatprep.subr.mxu0 0.0
        %1150 = vmatpush1.msra.mxu0 0.0
        %1151 = vmatprep.subr.mxu0 0.0
        %1152 = vmatpush1.msra.mxu0 0.0
        %1153 = vmatprep.subr.mxu0 0.0
        %1154 = vmatpush1.msra.mxu0 0.0
        %1155 = vmatprep.subr.mxu0 0.0
        %1156 = vmatpush1.msra.mxu0 0.0
        %1157 = vmatprep.subr.mxu0 0.0
        %1158 = vmatpush1.msra.mxu0 0.0
        %1159 = vmatprep.subr.mxu0 0.0
        %1160 = vmatpush1.msra.mxu0 0.0
        %1161 = vmatprep.subr.mxu0 0.0
        %1162 = vmatpush1.msra.mxu0 0.0
        %1163 = vmatprep.subr.mxu0 0.0
        %1164 = vmatpush1.msra.mxu0 0.0
        %1165 = vmatprep.subr.mxu0 0.0
        %1166 = vmatpush1.msra.mxu0 0.0
        %1167 = vmatprep.subr.mxu0 0.0
        %1168 = vmatpush1.msra.mxu0 0.0
        %1169 = vmatprep.subr.mxu0 0.0
        %1170 = vmatpush1.msra.mxu0 0.0
        %1171 = vmatprep.subr.mxu0 0.0
        %1172 = vmatpush1.msra.mxu0 0.0
        %1173 = vmatprep.subr.mxu0 0.0
        %1174 = vmatpush1.msra.mxu0 0.0
        %1175 = vmatprep.subr.mxu0 0.0
        %1176 = vmatpush1.msra.mxu0 0.0
        %1177 = vmatprep.subr.mxu0 0.0
        %1178 = vmatpush1.msra.mxu0 0.0
        %1179 = vmatprep.subr.mxu0 0.0
        %1180 = vmatpush1.msra.mxu0 0.0
        %1181 = vmatprep.subr.mxu0 0.0
        %1182 = vmatpush1.msra.mxu0 0.0
        %1183 = vmatprep.subr.mxu0 0.0
        %1184 = vmatpush1.msra.mxu0 0.0
        %1185 = vmatprep.subr.mxu0 0.0
        %1186 = vmatpush1.msra.mxu0 0.0
        %1187 = vmatprep.subr.mxu0 0.0
        %1188 = vmatpush1.msra.mxu0 0.0
        %1189 = vmatprep.subr.mxu0 0.0
        %1190 = vmatpush1.msra.mxu0 0.0
        %1191 = vmatprep.subr.mxu0 0.0
        %1192 = vmatpush1.msra.mxu0 0.0
        %1193 = vmatprep.mubr.f32.mxu0 0.0
        %1194 = vmatmul.mubr.f32.gmra.mrb[0].mxu0 %v1127
        %v1195 = vpop.f32.mrb[0].mxu0
        %v1196 = vadd.f32 0.0, %v1195
        %v1197 = vpop.f32.mrb[0].mxu0
        %v1198 = vadd.f32 0.0, %v1197
        %1199 = vdwg.mxu0
        %1202 = vrot.lane.b32.xlu0 %v1196, 48
        %v1203 = vpop.permute.xlu0 %1202
        %1204 = vrot.lane.b32.xlu0 %v1198, 48
        %v1205 = vpop.permute.xlu0 %1204
        %v1206 = vsel %vm364, %v1203, %v1205
        %v1209 = vadd.f32 %v1121, %v1203
        %v1210 = vadd.f32 %v1122, %v1206
        %1211 = vst.msk [vmem:[#allocation2] sm:$0xff] %vm370, %v1209
        %1212 = vst [vmem:[#allocation2 + $0x8] sm:$0xff] %v1210
        %v1213 = vld [vmem:[#allocation2] sm:$0xff]
        %v1214 = vld [vmem:[#allocation2 + $0x8] sm:$0xff]
        %v1215 = vld [vmem:[%s375] sm:$0xff]
        %v1216 = vld [vmem:[%s1031] sm:$0xff]
        %v1217 = vld [vmem:[%s1031 + $0x8] sm:$0xff]
        %v1219 = vsel %vm188, %v1215, 0
        %1221 = vmatprep.subr.mxu0 %v1217
        %1222 = vmatpush1.msra.mxu0 %v1216
        %1223 = vmatprep.subr.mxu0 0.0
        %1224 = vmatpush1.msra.mxu0 0.0
        %1225 = vmatprep.subr.mxu0 0.0
        %1226 = vmatpush1.msra.mxu0 0.0
        %1227 = vmatprep.subr.mxu0 0.0
        %1228 = vmatpush1.msra.mxu0 0.0
        %1229 = vmatprep.subr.mxu0 0.0
        %1230 = vmatpush1.msra.mxu0 0.0
        %1231 = vmatprep.subr.mxu0 0.0
        %1232 = vmatpush1.msra.mxu0 0.0
        %1233 = vmatprep.subr.mxu0 0.0
        %1234 = vmatpush1.msra.mxu0 0.0
        %1235 = vmatprep.subr.mxu0 0.0
        %1236 = vmatpush1.msra.mxu0 0.0
        %1237 = vmatprep.subr.mxu0 0.0
        %1238 = vmatpush1.msra.mxu0 0.0
        %1239 = vmatprep.subr.mxu0 0.0
        %1240 = vmatpush1.msra.mxu0 0.0
        %1241 = vmatprep.subr.mxu0 0.0
        %1242 = vmatpush1.msra.mxu0 0.0
        %1243 = vmatprep.subr.mxu0 0.0
        %1244 = vmatpush1.msra.mxu0 0.0
        %1245 = vmatprep.subr.mxu0 0.0
        %1246 = vmatpush1.msra.mxu0 0.0
        %1247 = vmatprep.subr.mxu0 0.0
        %1248 = vmatpush1.msra.mxu0 0.0
        %1249 = vmatprep.subr.mxu0 0.0
        %1250 = vmatpush1.msra.mxu0 0.0
        %1251 = vmatprep.subr.mxu0 0.0
        %1252 = vmatpush1.msra.mxu0 0.0
        %1253 = vmatprep.subr.mxu0 0.0
        %1254 = vmatpush1.msra.mxu0 0.0
        %1255 = vmatprep.subr.mxu0 0.0
        %1256 = vmatpush1.msra.mxu0 0.0
        %1257 = vmatprep.subr.mxu0 0.0
        %1258 = vmatpush1.msra.mxu0 0.0
        %1259 = vmatprep.subr.mxu0 0.0
        %1260 = vmatpush1.msra.mxu0 0.0
        %1261 = vmatprep.subr.mxu0 0.0
        %1262 = vmatpush1.msra.mxu0 0.0
        %1263 = vmatprep.subr.mxu0 0.0
        %1264 = vmatpush1.msra.mxu0 0.0
        %1265 = vmatprep.subr.mxu0 0.0
        %1266 = vmatpush1.msra.mxu0 0.0
        %1267 = vmatprep.subr.mxu0 0.0
        %1268 = vmatpush1.msra.mxu0 0.0
        %1269 = vmatprep.subr.mxu0 0.0
        %1270 = vmatpush1.msra.mxu0 0.0
        %1271 = vmatprep.subr.mxu0 0.0
        %1272 = vmatpush1.msra.mxu0 0.0
        %1273 = vmatprep.subr.mxu0 0.0
        %1274 = vmatpush1.msra.mxu0 0.0
        %1275 = vmatprep.subr.mxu0 0.0
        %1276 = vmatpush1.msra.mxu0 0.0
        %1277 = vmatprep.subr.mxu0 0.0
        %1278 = vmatpush1.msra.mxu0 0.0
        %1279 = vmatprep.subr.mxu0 0.0
        %1280 = vmatpush1.msra.mxu0 0.0
        %1281 = vmatprep.subr.mxu0 0.0
        %1282 = vmatpush1.msra.mxu0 0.0
        %1283 = vmatprep.subr.mxu0 0.0
        %1284 = vmatpush1.msra.mxu0 0.0
        %1285 = vmatprep.mubr.f32.mxu0 0.0
        %1286 = vmatmul.mubr.f32.gmra.mrb[0].mxu0 %v1219
        %v1287 = vpop.f32.mrb[0].mxu0
        %v1288 = vadd.f32 0.0, %v1287
        %v1289 = vpop.f32.mrb[0].mxu0
        %v1290 = vadd.f32 0.0, %v1289
        %1291 = vdwg.mxu0
        %1294 = vrot.lane.b32.xlu0 %v1288, 32
        %v1295 = vpop.permute.xlu0 %1294
        %1296 = vrot.lane.b32.xlu0 %v1290, 32
        %v1297 = vpop.permute.xlu0 %1296
        %v1298 = vsel %vm459, %v1295, %v1297
        %v1301 = vadd.f32 %v1213, %v1295
        %v1302 = vadd.f32 %v1214, %v1298
        %1303 = vst.msk [vmem:[#allocation2] sm:$0xff] %vm465, %v1301
        %1304 = vst [vmem:[#allocation2 + $0x8] sm:$0xff] %v1302
        %v1305 = vld [vmem:[#allocation2] sm:$0xff]
        %v1306 = vld [vmem:[#allocation2 + $0x8] sm:$0xff]
        %v1307 = vld [vmem:[%s470] sm:$0xff]
        %v1308 = vld [vmem:[%s1031] sm:$0xff]
        %v1309 = vld [vmem:[%s1031 + $0x8] sm:$0xff]
        %v1311 = vsel %vm188, %v1307, 0
        %1313 = vmatprep.subr.mxu0 %v1309
        %1314 = vmatpush1.msra.mxu0 %v1308
        %1315 = vmatprep.subr.mxu0 0.0
        %1316 = vmatpush1.msra.mxu0 0.0
        %1317 = vmatprep.subr.mxu0 0.0
        %1318 = vmatpush1.msra.mxu0 0.0
        %1319 = vmatprep.subr.mxu0 0.0
        %1320 = vmatpush1.msra.mxu0 0.0
        %1321 = vmatprep.subr.mxu0 0.0
        %1322 = vmatpush1.msra.mxu0 0.0
        %1323 = vmatprep.subr.mxu0 0.0
        %1324 = vmatpush1.msra.mxu0 0.0
        %1325 = vmatprep.subr.mxu0 0.0
        %1326 = vmatpush1.msra.mxu0 0.0
        %1327 = vmatprep.subr.mxu0 0.0
        %1328 = vmatpush1.msra.mxu0 0.0
        %1329 = vmatprep.subr.mxu0 0.0
        %1330 = vmatpush1.msra.mxu0 0.0
        %1331 = vmatprep.subr.mxu0 0.0
        %1332 = vmatpush1.msra.mxu0 0.0
        %1333 = vmatprep.subr.mxu0 0.0
        %1334 = vmatpush1.msra.mxu0 0.0
        %1335 = vmatprep.subr.mxu0 0.0
        %1336 = vmatpush1.msra.mxu0 0.0
        %1337 = vmatprep.subr.mxu0 0.0
        %1338 = vmatpush1.msra.mxu0 0.0
        %1339 = vmatprep.subr.mxu0 0.0
        %1340 = vmatpush1.msra.mxu0 0.0
        %1341 = vmatprep.subr.mxu0 0.0
        %1342 = vmatpush1.msra.mxu0 0.0
        %1343 = vmatprep.subr.mxu0 0.0
        %1344 = vmatpush1.msra.mxu0 0.0
        %1345 = vmatprep.subr.mxu0 0.0
        %1346 = vmatpush1.msra.mxu0 0.0
        %1347 = vmatprep.subr.mxu0 0.0
        %1348 = vmatpush1.msra.mxu0 0.0
        %1349 = vmatprep.subr.mxu0 0.0
        %1350 = vmatpush1.msra.mxu0 0.0
        %1351 = vmatprep.subr.mxu0 0.0
        %1352 = vmatpush1.msra.mxu0 0.0
        %1353 = vmatprep.subr.mxu0 0.0
        %1354 = vmatpush1.msra.mxu0 0.0
        %1355 = vmatprep.subr.mxu0 0.0
        %1356 = vmatpush1.msra.mxu0 0.0
        %1357 = vmatprep.subr.mxu0 0.0
        %1358 = vmatpush1.msra.mxu0 0.0
        %1359 = vmatprep.subr.mxu0 0.0
        %1360 = vmatpush1.msra.mxu0 0.0
        %1361 = vmatprep.subr.mxu0 0.0
        %1362 = vmatpush1.msra.mxu0 0.0
        %1363 = vmatprep.subr.mxu0 0.0
        %1364 = vmatpush1.msra.mxu0 0.0
        %1365 = vmatprep.subr.mxu0 0.0
        %1366 = vmatpush1.msra.mxu0 0.0
        %1367 = vmatprep.subr.mxu0 0.0
        %1368 = vmatpush1.msra.mxu0 0.0
        %1369 = vmatprep.subr.mxu0 0.0
        %1370 = vmatpush1.msra.mxu0 0.0
        %1371 = vmatprep.subr.mxu0 0.0
        %1372 = vmatpush1.msra.mxu0 0.0
        %1373 = vmatprep.subr.mxu0 0.0
        %1374 = vmatpush1.msra.mxu0 0.0
        %1375 = vmatprep.subr.mxu0 0.0
        %1376 = vmatpush1.msra.mxu0 0.0
        %1377 = vmatprep.mubr.f32.mxu0 0.0
        %1378 = vmatmul.mubr.f32.gmra.mrb[0].mxu0 %v1311
        %v1379 = vpop.f32.mrb[0].mxu0
        %v1380 = vadd.f32 0.0, %v1379
        %v1381 = vpop.f32.mrb[0].mxu0
        %v1382 = vadd.f32 0.0, %v1381
        %1383 = vdwg.mxu0
        %1386 = vrot.lane.b32.xlu0 %v1380, 16
        %v1387 = vpop.permute.xlu0 %1386
        %1388 = vrot.lane.b32.xlu0 %v1382, 16
        %v1389 = vpop.permute.xlu0 %1388
        %v1390 = vsel %vm554, %v1387, %v1389
        %v1393 = vadd.f32 %v1305, %v1387
        %v1394 = vadd.f32 %v1306, %v1390
        %1395 = vst.msk [vmem:[#allocation2] sm:$0xff] %vm560, %v1393
        %1396 = vst [vmem:[#allocation2 + $0x8] sm:$0xff] %v1394
        %v1397 = vld [vmem:[#allocation2] sm:$0xff]
        %v1398 = vld [vmem:[#allocation2 + $0x8] sm:$0xff]
        %v1399 = vld [vmem:[%s565] sm:$0xff]
        %v1400 = vld [vmem:[%s1031] sm:$0xff]
        %v1401 = vld [vmem:[%s1031 + $0x8] sm:$0xff]
        %v1403 = vsel %vm188, %v1399, 0
        %1405 = vmatprep.subr.mxu0 %v1401
        %1406 = vmatpush1.msra.mxu0 %v1400
        %1407 = vmatprep.subr.mxu0 0.0
        %1408 = vmatpush1.msra.mxu0 0.0
        %1409 = vmatprep.subr.mxu0 0.0
        %1410 = vmatpush1.msra.mxu0 0.0
        %1411 = vmatprep.subr.mxu0 0.0
        %1412 = vmatpush1.msra.mxu0 0.0
        %1413 = vmatprep.subr.mxu0 0.0
        %1414 = vmatpush1.msra.mxu0 0.0
        %1415 = vmatprep.subr.mxu0 0.0
        %1416 = vmatpush1.msra.mxu0 0.0
        %1417 = vmatprep.subr.mxu0 0.0
        %1418 = vmatpush1.msra.mxu0 0.0
        %1419 = vmatprep.subr.mxu0 0.0
        %1420 = vmatpush1.msra.mxu0 0.0
        %1421 = vmatprep.subr.mxu0 0.0
        %1422 = vmatpush1.msra.mxu0 0.0
        %1423 = vmatprep.subr.mxu0 0.0
        %1424 = vmatpush1.msra.mxu0 0.0
        %1425 = vmatprep.subr.mxu0 0.0
        %1426 = vmatpush1.msra.mxu0 0.0
        %1427 = vmatprep.subr.mxu0 0.0
        %1428 = vmatpush1.msra.mxu0 0.0
        %1429 = vmatprep.subr.mxu0 0.0
        %1430 = vmatpush1.msra.mxu0 0.0
        %1431 = vmatprep.subr.mxu0 0.0
        %1432 = vmatpush1.msra.mxu0 0.0
        %1433 = vmatprep.subr.mxu0 0.0
        %1434 = vmatpush1.msra.mxu0 0.0
        %1435 = vmatprep.subr.mxu0 0.0
        %1436 = vmatpush1.msra.mxu0 0.0
        %1437 = vmatprep.subr.mxu0 0.0
        %1438 = vmatpush1.msra.mxu0 0.0
        %1439 = vmatprep.subr.mxu0 0.0
        %1440 = vmatpush1.msra.mxu0 0.0
        %1441 = vmatprep.subr.mxu0 0.0
        %1442 = vmatpush1.msra.mxu0 0.0
        %1443 = vmatprep.subr.mxu0 0.0
        %1444 = vmatpush1.msra.mxu0 0.0
        %1445 = vmatprep.subr.mxu0 0.0
        %1446 = vmatpush1.msra.mxu0 0.0
        %1447 = vmatprep.subr.mxu0 0.0
        %1448 = vmatpush1.msra.mxu0 0.0
        %1449 = vmatprep.subr.mxu0 0.0
        %1450 = vmatpush1.msra.mxu0 0.0
        %1451 = vmatprep.subr.mxu0 0.0
        %1452 = vmatpush1.msra.mxu0 0.0
        %1453 = vmatprep.subr.mxu0 0.0
        %1454 = vmatpush1.msra.mxu0 0.0
        %1455 = vmatprep.subr.mxu0 0.0
        %1456 = vmatpush1.msra.mxu0 0.0
        %1457 = vmatprep.subr.mxu0 0.0
        %1458 = vmatpush1.msra.mxu0 0.0
        %1459 = vmatprep.subr.mxu0 0.0
        %1460 = vmatpush1.msra.mxu0 0.0
        %1461 = vmatprep.subr.mxu0 0.0
        %1462 = vmatpush1.msra.mxu0 0.0
        %1463 = vmatprep.subr.mxu0 0.0
        %1464 = vmatpush1.msra.mxu0 0.0
        %1465 = vmatprep.subr.mxu0 0.0
        %1466 = vmatpush1.msra.mxu0 0.0
        %1467 = vmatprep.subr.mxu0 0.0
        %1468 = vmatpush1.msra.mxu0 0.0
        %1469 = vmatprep.mubr.f32.mxu0 0.0
        %1470 = vmatmul.mubr.f32.gmra.mrb[0].mxu0 %v1403
        %v1471 = vpop.f32.mrb[0].mxu0
        %v1472 = vadd.f32 0.0, %v1471
        %v1473 = vpop.f32.mrb[0].mxu0
        %v1474 = vadd.f32 0.0, %v1473
        %1475 = vdwg.mxu0
        %v1476 = vadd.f32 %v1397, %v1472
        %v1477 = vadd.f32 %v1398, %v1474
        %1478 = vst [vmem:[#allocation2] sm:$0xff] %v1476
        %1479 = vst [vmem:[#allocation2 + $0x8] sm:$0xff] %v1477
        %v1480 = vld [vmem:[#allocation2] sm:$0xff]
        %v1481 = vld [vmem:[#allocation2 + $0x8] sm:$0xff]
        %v1482 = vld [vmem:[%s649] sm:$0xff]
        %v1483 = vld [vmem:[%s1031] sm:$0xff]
        %v1484 = vld [vmem:[%s1031 + $0x8] sm:$0xff]
        %1487 = vrot.lane.b32.xlu0 %v1483, 112
        %v1488 = vpop.permute.xlu0 %1487
        %1489 = vrot.lane.b32.xlu0 %v1484, 112
        %v1490 = vpop.permute.xlu0 %1489
        %v1491 = vsel %vm659, %v1488, %v1490
        %v1495 = vsel %vm188, %v1482, 0
        %1497 = vmatprep.subr.mxu0 %v1490
        %1498 = vmatpush1.msra.mxu0 %v1491
        %1499 = vmatprep.subr.mxu0 0.0
        %1500 = vmatpush1.msra.mxu0 0.0
        %1501 = vmatprep.subr.mxu0 0.0
        %1502 = vmatpush1.msra.mxu0 0.0
        %1503 = vmatprep.subr.mxu0 0.0
        %1504 = vmatpush1.msra.mxu0 0.0
        %1505 = vmatprep.subr.mxu0 0.0
        %1506 = vmatpush1.msra.mxu0 0.0
        %1507 = vmatprep.subr.mxu0 0.0
        %1508 = vmatpush1.msra.mxu0 0.0
        %1509 = vmatprep.subr.mxu0 0.0
        %1510 = vmatpush1.msra.mxu0 0.0
        %1511 = vmatprep.subr.mxu0 0.0
        %1512 = vmatpush1.msra.mxu0 0.0
        %1513 = vmatprep.subr.mxu0 0.0
        %1514 = vmatpush1.msra.mxu0 0.0
        %1515 = vmatprep.subr.mxu0 0.0
        %1516 = vmatpush1.msra.mxu0 0.0
        %1517 = vmatprep.subr.mxu0 0.0
        %1518 = vmatpush1.msra.mxu0 0.0
        %1519 = vmatprep.subr.mxu0 0.0
        %1520 = vmatpush1.msra.mxu0 0.0
        %1521 = vmatprep.subr.mxu0 0.0
        %1522 = vmatpush1.msra.mxu0 0.0
        %1523 = vmatprep.subr.mxu0 0.0
        %1524 = vmatpush1.msra.mxu0 0.0
        %1525 = vmatprep.subr.mxu0 0.0
        %1526 = vmatpush1.msra.mxu0 0.0
        %1527 = vmatprep.subr.mxu0 0.0
        %1528 = vmatpush1.msra.mxu0 0.0
        %1529 = vmatprep.subr.mxu0 0.0
        %1530 = vmatpush1.msra.mxu0 0.0
        %1531 = vmatprep.subr.mxu0 0.0
        %1532 = vmatpush1.msra.mxu0 0.0
        %1533 = vmatprep.subr.mxu0 0.0
        %1534 = vmatpush1.msra.mxu0 0.0
        %1535 = vmatprep.subr.mxu0 0.0
        %1536 = vmatpush1.msra.mxu0 0.0
        %1537 = vmatprep.subr.mxu0 0.0
        %1538 = vmatpush1.msra.mxu0 0.0
        %1539 = vmatprep.subr.mxu0 0.0
        %1540 = vmatpush1.msra.mxu0 0.0
        %1541 = vmatprep.subr.mxu0 0.0
        %1542 = vmatpush1.msra.mxu0 0.0
        %1543 = vmatprep.subr.mxu0 0.0
        %1544 = vmatpush1.msra.mxu0 0.0
        %1545 = vmatprep.subr.mxu0 0.0
        %1546 = vmatpush1.msra.mxu0 0.0
        %1547 = vmatprep.subr.mxu0 0.0
        %1548 = vmatpush1.msra.mxu0 0.0
        %1549 = vmatprep.subr.mxu0 0.0
        %1550 = vmatpush1.msra.mxu0 0.0
        %1551 = vmatprep.subr.mxu0 0.0
        %1552 = vmatpush1.msra.mxu0 0.0
        %1553 = vmatprep.subr.mxu0 0.0
        %1554 = vmatpush1.msra.mxu0 0.0
        %1555 = vmatprep.subr.mxu0 0.0
        %1556 = vmatpush1.msra.mxu0 0.0
        %1557 = vmatprep.subr.mxu0 0.0
        %1558 = vmatpush1.msra.mxu0 0.0
        %1559 = vmatprep.subr.mxu0 0.0
        %1560 = vmatpush1.msra.mxu0 0.0
        %1561 = vmatprep.mubr.f32.mxu0 0.0
        %1562 = vmatmul.mubr.f32.gmra.mrb[0].mxu0 %v1495
        %v1563 = vpop.f32.mrb[0].mxu0
        %v1564 = vadd.f32 0.0, %v1563
        %v1565 = vpop.f32.mrb[0].mxu0
        %v1566 = vadd.f32 0.0, %v1565
        %1567 = vdwg.mxu0
        %v1568 = vadd.f32 %v1480, %v1564
        %v1569 = vadd.f32 %v1481, %v1566
        %1570 = vst [vmem:[#allocation2] sm:$0xff] %v1568
        %1571 = vst.msk [vmem:[#allocation2 + $0x8] sm:$0xff] %vm659, %v1569
        %v1572 = vld [vmem:[#allocation2] sm:$0xff]
        %v1573 = vld [vmem:[#allocation2 + $0x8] sm:$0xff]
        %v1574 = vld [vmem:[%s743] sm:$0xff]
        %v1575 = vld [vmem:[%s1031] sm:$0xff]
        %v1576 = vld [vmem:[%s1031 + $0x8] sm:$0xff]
        %1579 = vrot.lane.b32.xlu0 %v1575, 96
        %v1580 = vpop.permute.xlu0 %1579
        %1581 = vrot.lane.b32.xlu0 %v1576, 96
        %v1582 = vpop.permute.xlu0 %1581
        %v1583 = vsel %vm753, %v1580, %v1582
        %v1587 = vsel %vm188, %v1574, 0
        %1589 = vmatprep.subr.mxu0 %v1582
        %1590 = vmatpush1.msra.mxu0 %v1583
        %1591 = vmatprep.subr.mxu0 0.0
        %1592 = vmatpush1.msra.mxu0 0.0
        %1593 = vmatprep.subr.mxu0 0.0
        %1594 = vmatpush1.msra.mxu0 0.0
        %1595 = vmatprep.subr.mxu0 0.0
        %1596 = vmatpush1.msra.mxu0 0.0
        %1597 = vmatprep.subr.mxu0 0.0
        %1598 = vmatpush1.msra.mxu0 0.0
        %1599 = vmatprep.subr.mxu0 0.0
        %1600 = vmatpush1.msra.mxu0 0.0
        %1601 = vmatprep.subr.mxu0 0.0
        %1602 = vmatpush1.msra.mxu0 0.0
        %1603 = vmatprep.subr.mxu0 0.0
        %1604 = vmatpush1.msra.mxu0 0.0
        %1605 = vmatprep.subr.mxu0 0.0
        %1606 = vmatpush1.msra.mxu0 0.0
        %1607 = vmatprep.subr.mxu0 0.0
        %1608 = vmatpush1.msra.mxu0 0.0
        %1609 = vmatprep.subr.mxu0 0.0
        %1610 = vmatpush1.msra.mxu0 0.0
        %1611 = vmatprep.subr.mxu0 0.0
        %1612 = vmatpush1.msra.mxu0 0.0
        %1613 = vmatprep.subr.mxu0 0.0
        %1614 = vmatpush1.msra.mxu0 0.0
        %1615 = vmatprep.subr.mxu0 0.0
        %1616 = vmatpush1.msra.mxu0 0.0
        %1617 = vmatprep.subr.mxu0 0.0
        %1618 = vmatpush1.msra.mxu0 0.0
        %1619 = vmatprep.subr.mxu0 0.0
        %1620 = vmatpush1.msra.mxu0 0.0
        %1621 = vmatprep.subr.mxu0 0.0
        %1622 = vmatpush1.msra.mxu0 0.0
        %1623 = vmatprep.subr.mxu0 0.0
        %1624 = vmatpush1.msra.mxu0 0.0
        %1625 = vmatprep.subr.mxu0 0.0
        %1626 = vmatpush1.msra.mxu0 0.0
        %1627 = vmatprep.subr.mxu0 0.0
        %1628 = vmatpush1.msra.mxu0 0.0
        %1629 = vmatprep.subr.mxu0 0.0
        %1630 = vmatpush1.msra.mxu0 0.0
        %1631 = vmatprep.subr.mxu0 0.0
        %1632 = vmatpush1.msra.mxu0 0.0
        %1633 = vmatprep.subr.mxu0 0.0
        %1634 = vmatpush1.msra.mxu0 0.0
        %1635 = vmatprep.subr.mxu0 0.0
        %1636 = vmatpush1.msra.mxu0 0.0
        %1637 = vmatprep.subr.mxu0 0.0
        %1638 = vmatpush1.msra.mxu0 0.0
        %1639 = vmatprep.subr.mxu0 0.0
        %1640 = vmatpush1.msra.mxu0 0.0
        %1641 = vmatprep.subr.mxu0 0.0
        %1642 = vmatpush1.msra.mxu0 0.0
        %1643 = vmatprep.subr.mxu0 0.0
        %1644 = vmatpush1.msra.mxu0 0.0
        %1645 = vmatprep.subr.mxu0 0.0
        %1646 = vmatpush1.msra.mxu0 0.0
        %1647 = vmatprep.subr.mxu0 0.0
        %1648 = vmatpush1.msra.mxu0 0.0
        %1649 = vmatprep.subr.mxu0 0.0
        %1650 = vmatpush1.msra.mxu0 0.0
        %1651 = vmatprep.subr.mxu0 0.0
        %1652 = vmatpush1.msra.mxu0 0.0
        %1653 = vmatprep.mubr.f32.mxu0 0.0
        %1654 = vmatmul.mubr.f32.gmra.mrb[0].mxu0 %v1587
        %v1655 = vpop.f32.mrb[0].mxu0
        %v1656 = vadd.f32 0.0, %v1655
        %v1657 = vpop.f32.mrb[0].mxu0
        %v1658 = vadd.f32 0.0, %v1657
        %1659 = vdwg.mxu0
        %v1660 = vadd.f32 %v1572, %v1656
        %v1661 = vadd.f32 %v1573, %v1658
        %1662 = vst [vmem:[#allocation2] sm:$0xff] %v1660
        %1663 = vst.msk [vmem:[#allocation2 + $0x8] sm:$0xff] %vm753, %v1661
        %v1664 = vld [vmem:[#allocation2] sm:$0xff]
        %v1665 = vld [vmem:[#allocation2 + $0x8] sm:$0xff]
        %v1666 = vld [vmem:[%s837] sm:$0xff]
        %v1667 = vld [vmem:[%s1031] sm:$0xff]
        %v1668 = vld [vmem:[%s1031 + $0x8] sm:$0xff]
        %1671 = vrot.lane.b32.xlu0 %v1667, 80
        %v1672 = vpop.permute.xlu0 %1671
        %1673 = vrot.lane.b32.xlu0 %v1668, 80
        %v1674 = vpop.permute.xlu0 %1673
        %v1675 = vsel %vm847, %v1672, %v1674
        %v1679 = vsel %vm188, %v1666, 0
        %1681 = vmatprep.subr.mxu0 %v1674
        %1682 = vmatpush1.msra.mxu0 %v1675
        %1683 = vmatprep.subr.mxu0 0.0
        %1684 = vmatpush1.msra.mxu0 0.0
        %1685 = vmatprep.subr.mxu0 0.0
        %1686 = vmatpush1.msra.mxu0 0.0
        %1687 = vmatprep.subr.mxu0 0.0
        %1688 = vmatpush1.msra.mxu0 0.0
        %1689 = vmatprep.subr.mxu0 0.0
        %1690 = vmatpush1.msra.mxu0 0.0
        %1691 = vmatprep.subr.mxu0 0.0
        %1692 = vmatpush1.msra.mxu0 0.0
        %1693 = vmatprep.subr.mxu0 0.0
        %1694 = vmatpush1.msra.mxu0 0.0
        %1695 = vmatprep.subr.mxu0 0.0
        %1696 = vmatpush1.msra.mxu0 0.0
        %1697 = vmatprep.subr.mxu0 0.0
        %1698 = vmatpush1.msra.mxu0 0.0
        %1699 = vmatprep.subr.mxu0 0.0
        %1700 = vmatpush1.msra.mxu0 0.0
        %1701 = vmatprep.subr.mxu0 0.0
        %1702 = vmatpush1.msra.mxu0 0.0
        %1703 = vmatprep.subr.mxu0 0.0
        %1704 = vmatpush1.msra.mxu0 0.0
        %1705 = vmatprep.subr.mxu0 0.0
        %1706 = vmatpush1.msra.mxu0 0.0
        %1707 = vmatprep.subr.mxu0 0.0
        %1708 = vmatpush1.msra.mxu0 0.0
        %1709 = vmatprep.subr.mxu0 0.0
        %1710 = vmatpush1.msra.mxu0 0.0
        %1711 = vmatprep.subr.mxu0 0.0
        %1712 = vmatpush1.msra.mxu0 0.0
        %1713 = vmatprep.subr.mxu0 0.0
        %1714 = vmatpush1.msra.mxu0 0.0
        %1715 = vmatprep.subr.mxu0 0.0
        %1716 = vmatpush1.msra.mxu0 0.0
        %1717 = vmatprep.subr.mxu0 0.0
        %1718 = vmatpush1.msra.mxu0 0.0
        %1719 = vmatprep.subr.mxu0 0.0
        %1720 = vmatpush1.msra.mxu0 0.0
        %1721 = vmatprep.subr.mxu0 0.0
        %1722 = vmatpush1.msra.mxu0 0.0
        %1723 = vmatprep.subr.mxu0 0.0
        %1724 = vmatpush1.msra.mxu0 0.0
        %1725 = vmatprep.subr.mxu0 0.0
        %1726 = vmatpush1.msra.mxu0 0.0
        %1727 = vmatprep.subr.mxu0 0.0
        %1728 = vmatpush1.msra.mxu0 0.0
        %1729 = vmatprep.subr.mxu0 0.0
        %1730 = vmatpush1.msra.mxu0 0.0
        %1731 = vmatprep.subr.mxu0 0.0
        %1732 = vmatpush1.msra.mxu0 0.0
        %1733 = vmatprep.subr.mxu0 0.0
        %1734 = vmatpush1.msra.mxu0 0.0
        %1735 = vmatprep.subr.mxu0 0.0
        %1736 = vmatpush1.msra.mxu0 0.0
        %1737 = vmatprep.subr.mxu0 0.0
        %1738 = vmatpush1.msra.mxu0 0.0
        %1739 = vmatprep.subr.mxu0 0.0
        %1740 = vmatpush1.msra.mxu0 0.0
        %1741 = vmatprep.subr.mxu0 0.0
        %1742 = vmatpush1.msra.mxu0 0.0
        %1743 = vmatprep.subr.mxu0 0.0
        %1744 = vmatpush1.msra.mxu0 0.0
        %1745 = vmatprep.mubr.f32.mxu0 0.0
        %1746 = vmatmul.mubr.f32.gmra.mrb[0].mxu0 %v1679
        %v1747 = vpop.f32.mrb[0].mxu0
        %v1748 = vadd.f32 0.0, %v1747
        %v1749 = vpop.f32.mrb[0].mxu0
        %v1750 = vadd.f32 0.0, %v1749
        %1751 = vdwg.mxu0
        %v1752 = vadd.f32 %v1664, %v1748
        %v1753 = vadd.f32 %v1665, %v1750
        %1754 = vst [vmem:[#allocation2] sm:$0xff] %v1752
        %1755 = vst.msk [vmem:[#allocation2 + $0x8] sm:$0xff] %vm847, %v1753
        %v1756 = vld [vmem:[#allocation2] sm:$0xff]
        %v1757 = vld [vmem:[#allocation2 + $0x8] sm:$0xff]
        %v1758 = vld [vmem:[%s931] sm:$0xff]
        %v1759 = vld [vmem:[%s1031] sm:$0xff]
        %v1760 = vld [vmem:[%s1031 + $0x8] sm:$0xff]
        %1763 = vrot.lane.b32.xlu0 %v1759, 64
        %v1764 = vpop.permute.xlu0 %1763
        %1765 = vrot.lane.b32.xlu0 %v1760, 64
        %v1766 = vpop.permute.xlu0 %1765
        %v1767 = vsel %vm269, %v1764, %v1766
        %v1771 = vsel %vm188, %v1758, 0
        %1773 = vmatprep.subr.mxu0 %v1766
        %1774 = vmatpush1.msra.mxu0 %v1767
        %1775 = vmatprep.subr.mxu0 0.0
        %1776 = vmatpush1.msra.mxu0 0.0
        %1777 = vmatprep.subr.mxu0 0.0
        %1778 = vmatpush1.msra.mxu0 0.0
        %1779 = vmatprep.subr.mxu0 0.0
        %1780 = vmatpush1.msra.mxu0 0.0
        %1781 = vmatprep.subr.mxu0 0.0
        %1782 = vmatpush1.msra.mxu0 0.0
        %1783 = vmatprep.subr.mxu0 0.0
        %1784 = vmatpush1.msra.mxu0 0.0
        %1785 = vmatprep.subr.mxu0 0.0
        %1786 = vmatpush1.msra.mxu0 0.0
        %1787 = vmatprep.subr.mxu0 0.0
        %1788 = vmatpush1.msra.mxu0 0.0
        %1789 = vmatprep.subr.mxu0 0.0
        %1790 = vmatpush1.msra.mxu0 0.0
        %1791 = vmatprep.subr.mxu0 0.0
        %1792 = vmatpush1.msra.mxu0 0.0
        %1793 = vmatprep.subr.mxu0 0.0
        %1794 = vmatpush1.msra.mxu0 0.0
        %1795 = vmatprep.subr.mxu0 0.0
        %1796 = vmatpush1.msra.mxu0 0.0
        %1797 = vmatprep.subr.mxu0 0.0
        %1798 = vmatpush1.msra.mxu0 0.0
        %1799 = vmatprep.subr.mxu0 0.0
        %1800 = vmatpush1.msra.mxu0 0.0
        %1801 = vmatprep.subr.mxu0 0.0
        %1802 = vmatpush1.msra.mxu0 0.0
        %1803 = vmatprep.subr.mxu0 0.0
        %1804 = vmatpush1.msra.mxu0 0.0
        %1805 = vmatprep.subr.mxu0 0.0
        %1806 = vmatpush1.msra.mxu0 0.0
        %1807 = vmatprep.subr.mxu0 0.0
        %1808 = vmatpush1.msra.mxu0 0.0
        %1809 = vmatprep.subr.mxu0 0.0
        %1810 = vmatpush1.msra.mxu0 0.0
        %1811 = vmatprep.subr.mxu0 0.0
        %1812 = vmatpush1.msra.mxu0 0.0
        %1813 = vmatprep.subr.mxu0 0.0
        %1814 = vmatpush1.msra.mxu0 0.0
        %1815 = vmatprep.subr.mxu0 0.0
        %1816 = vmatpush1.msra.mxu0 0.0
        %1817 = vmatprep.subr.mxu0 0.0
        %1818 = vmatpush1.msra.mxu0 0.0
        %1819 = vmatprep.subr.mxu0 0.0
        %1820 = vmatpush1.msra.mxu0 0.0
        %1821 = vmatprep.subr.mxu0 0.0
        %1822 = vmatpush1.msra.mxu0 0.0
        %1823 = vmatprep.subr.mxu0 0.0
        %1824 = vmatpush1.msra.mxu0 0.0
        %1825 = vmatprep.subr.mxu0 0.0
        %1826 = vmatpush1.msra.mxu0 0.0
        %1827 = vmatprep.subr.mxu0 0.0
        %1828 = vmatpush1.msra.mxu0 0.0
        %1829 = vmatprep.subr.mxu0 0.0
        %1830 = vmatpush1.msra.mxu0 0.0
        %1831 = vmatprep.subr.mxu0 0.0
        %1832 = vmatpush1.msra.mxu0 0.0
        %1833 = vmatprep.subr.mxu0 0.0
        %1834 = vmatpush1.msra.mxu0 0.0
        %1835 = vmatprep.subr.mxu0 0.0
        %1836 = vmatpush1.msra.mxu0 0.0
        %1837 = vmatprep.mubr.f32.mxu0 0.0
        %1838 = vmatmul.mubr.f32.gmra.mrb[0].mxu0 %v1771
        %v1839 = vpop.f32.mrb[0].mxu0
        %v1840 = vadd.f32 0.0, %v1839
        %v1841 = vpop.f32.mrb[0].mxu0
        %v1842 = vadd.f32 0.0, %v1841
        %1843 = vdwg.mxu0
        %v1844 = vadd.f32 %v1756, %v1840
        %v1845 = vadd.f32 %v1757, %v1842
        %1846 = vst [vmem:[#allocation2] sm:$0xff] %v1844
        %1847 = vst.msk [vmem:[#allocation2 + $0x8] sm:$0xff] %vm269, %v1845
        %v1848 = vld [vmem:[#allocation2] sm:$0xff]
        %v1849 = vld [vmem:[#allocation2 + $0x8] sm:$0xff]
        %s1850 = scalar_lea.vmem %s166, 16 [#allocation3]
        %1851 = vst [vmem:[%s1850] sm:$0xff] %v1848
        %1852 = vst [vmem:[%s1850 + $0x8] sm:$0xff] %v1849
        %1853 = vst [vmem:[#allocation2] sm:$0xff] %v179
        %1854 = vst [vmem:[#allocation2 + $0x8] sm:$0xff] %v179
        %v1855 = vld [vmem:[#allocation2] sm:$0xff]
        %v1856 = vld [vmem:[#allocation2 + $0x8] sm:$0xff]
        %v1857 = vld [vmem:[%s1] sm:$0xff]
        %s1858 = scalar_lea.vmem %s172, 32
        %v1859 = vld [vmem:[%s1858] sm:$0xff]
        %v1860 = vld [vmem:[%s1858 + $0x8] sm:$0xff]
        %v1862 = vsel %vm188, %v1857, 0
        %1864 = vmatprep.subr.mxu0 %v1860
        %1865 = vmatpush1.msra.mxu0 %v1859
        %1866 = vmatprep.subr.mxu0 0.0
        %1867 = vmatpush1.msra.mxu0 0.0
        %1868 = vmatprep.subr.mxu0 0.0
        %1869 = vmatpush1.msra.mxu0 0.0
        %1870 = vmatprep.subr.mxu0 0.0
        %1871 = vmatpush1.msra.mxu0 0.0
        %1872 = vmatprep.subr.mxu0 0.0
        %1873 = vmatpush1.msra.mxu0 0.0
        %1874 = vmatprep.subr.mxu0 0.0
        %1875 = vmatpush1.msra.mxu0 0.0
        %1876 = vmatprep.subr.mxu0 0.0
        %1877 = vmatpush1.msra.mxu0 0.0
        %1878 = vmatprep.subr.mxu0 0.0
        %1879 = vmatpush1.msra.mxu0 0.0
        %1880 = vmatprep.subr.mxu0 0.0
        %1881 = vmatpush1.msra.mxu0 0.0
        %1882 = vmatprep.subr.mxu0 0.0
        %1883 = vmatpush1.msra.mxu0 0.0
        %1884 = vmatprep.subr.mxu0 0.0
        %1885 = vmatpush1.msra.mxu0 0.0
        %1886 = vmatprep.subr.mxu0 0.0
        %1887 = vmatpush1.msra.mxu0 0.0
        %1888 = vmatprep.subr.mxu0 0.0
        %1889 = vmatpush1.msra.mxu0 0.0
        %1890 = vmatprep.subr.mxu0 0.0
        %1891 = vmatpush1.msra.mxu0 0.0
        %1892 = vmatprep.subr.mxu0 0.0
        %1893 = vmatpush1.msra.mxu0 0.0
        %1894 = vmatprep.subr.mxu0 0.0
        %1895 = vmatpush1.msra.mxu0 0.0
        %1896 = vmatprep.subr.mxu0 0.0
        %1897 = vmatpush1.msra.mxu0 0.0
        %1898 = vmatprep.subr.mxu0 0.0
        %1899 = vmatpush1.msra.mxu0 0.0
        %1900 = vmatprep.subr.mxu0 0.0
        %1901 = vmatpush1.msra.mxu0 0.0
        %1902 = vmatprep.subr.mxu0 0.0
        %1903 = vmatpush1.msra.mxu0 0.0
        %1904 = vmatprep.subr.mxu0 0.0
        %1905 = vmatpush1.msra.mxu0 0.0
        %1906 = vmatprep.subr.mxu0 0.0
        %1907 = vmatpush1.msra.mxu0 0.0
        %1908 = vmatprep.subr.mxu0 0.0
        %1909 = vmatpush1.msra.mxu0 0.0
        %1910 = vmatprep.subr.mxu0 0.0
        %1911 = vmatpush1.msra.mxu0 0.0
        %1912 = vmatprep.subr.mxu0 0.0
        %1913 = vmatpush1.msra.mxu0 0.0
        %1914 = vmatprep.subr.mxu0 0.0
        %1915 = vmatpush1.msra.mxu0 0.0
        %1916 = vmatprep.subr.mxu0 0.0
        %1917 = vmatpush1.msra.mxu0 0.0
        %1918 = vmatprep.subr.mxu0 0.0
        %1919 = vmatpush1.msra.mxu0 0.0
        %1920 = vmatprep.subr.mxu0 0.0
        %1921 = vmatpush1.msra.mxu0 0.0
        %1922 = vmatprep.subr.mxu0 0.0
        %1923 = vmatpush1.msra.mxu0 0.0
        %1924 = vmatprep.subr.mxu0 0.0
        %1925 = vmatpush1.msra.mxu0 0.0
        %1926 = vmatprep.subr.mxu0 0.0
        %1927 = vmatpush1.msra.mxu0 0.0
        %1928 = vmatprep.mubr.f32.mxu0 0.0
        %1929 = vmatmul.mubr.f32.gmra.mrb[0].mxu0 %v1862
        %v1930 = vpop.f32.mrb[0].mxu0
        %v1931 = vadd.f32 0.0, %v1930
        %v1932 = vpop.f32.mrb[0].mxu0
        %v1933 = vadd.f32 0.0, %v1932
        %1934 = vdwg.mxu0
        %1937 = vrot.lane.b32.xlu0 %v1931, 64
        %v1938 = vpop.permute.xlu0 %1937
        %1939 = vrot.lane.b32.xlu0 %v1933, 64
        %v1940 = vpop.permute.xlu0 %1939
        %v1941 = vsel %vm269, %v1938, %v1940
        %v1944 = vadd.f32 %v1855, %v1938
        %v1945 = vadd.f32 %v1856, %v1941
        %1946 = vst.msk [vmem:[#allocation2] sm:$0xff] %vm275, %v1944
        %1947 = vst [vmem:[#allocation2 + $0x8] sm:$0xff] %v1945
        %v1948 = vld [vmem:[#allocation2] sm:$0xff]
        %v1949 = vld [vmem:[#allocation2 + $0x8] sm:$0xff]
        %v1950 = vld [vmem:[%s280] sm:$0xff]
        %v1951 = vld [vmem:[%s1858] sm:$0xff]
        %v1952 = vld [vmem:[%s1858 + $0x8] sm:$0xff]
        %v1954 = vsel %vm188, %v1950, 0
        %1956 = vmatprep.subr.mxu0 %v1952
        %1957 = vmatpush1.msra.mxu0 %v1951
        %1958 = vmatprep.subr.mxu0 0.0
        %1959 = vmatpush1.msra.mxu0 0.0
        %1960 = vmatprep.subr.mxu0 0.0
        %1961 = vmatpush1.msra.mxu0 0.0
        %1962 = vmatprep.subr.mxu0 0.0
        %1963 = vmatpush1.msra.mxu0 0.0
        %1964 = vmatprep.subr.mxu0 0.0
        %1965 = vmatpush1.msra.mxu0 0.0
        %1966 = vmatprep.subr.mxu0 0.0
        %1967 = vmatpush1.msra.mxu0 0.0
        %1968 = vmatprep.subr.mxu0 0.0
        %1969 = vmatpush1.msra.mxu0 0.0
        %1970 = vmatprep.subr.mxu0 0.0
        %1971 = vmatpush1.msra.mxu0 0.0
        %1972 = vmatprep.subr.mxu0 0.0
        %1973 = vmatpush1.msra.mxu0 0.0
        %1974 = vmatprep.subr.mxu0 0.0
        %1975 = vmatpush1.msra.mxu0 0.0
        %1976 = vmatprep.subr.mxu0 0.0
        %1977 = vmatpush1.msra.mxu0 0.0
        %1978 = vmatprep.subr.mxu0 0.0
        %1979 = vmatpush1.msra.mxu0 0.0
        %1980 = vmatprep.subr.mxu0 0.0
        %1981 = vmatpush1.msra.mxu0 0.0
        %1982 = vmatprep.subr.mxu0 0.0
        %1983 = vmatpush1.msra.mxu0 0.0
        %1984 = vmatprep.subr.mxu0 0.0
        %1985 = vmatpush1.msra.mxu0 0.0
        %1986 = vmatprep.subr.mxu0 0.0
        %1987 = vmatpush1.msra.mxu0 0.0
        %1988 = vmatprep.subr.mxu0 0.0
        %1989 = vmatpush1.msra.mxu0 0.0
        %1990 = vmatprep.subr.mxu0 0.0
        %1991 = vmatpush1.msra.mxu0 0.0
        %1992 = vmatprep.subr.mxu0 0.0
        %1993 = vmatpush1.msra.mxu0 0.0
        %1994 = vmatprep.subr.mxu0 0.0
        %1995 = vmatpush1.msra.mxu0 0.0
        %1996 = vmatprep.subr.mxu0 0.0
        %1997 = vmatpush1.msra.mxu0 0.0
        %1998 = vmatprep.subr.mxu0 0.0
        %1999 = vmatpush1.msra.mxu0 0.0
        %2000 = vmatprep.subr.mxu0 0.0
        %2001 = vmatpush1.msra.mxu0 0.0
        %2002 = vmatprep.subr.mxu0 0.0
        %2003 = vmatpush1.msra.mxu0 0.0
        %2004 = vmatprep.subr.mxu0 0.0
        %2005 = vmatpush1.msra.mxu0 0.0
        %2006 = vmatprep.subr.mxu0 0.0
        %2007 = vmatpush1.msra.mxu0 0.0
        %2008 = vmatprep.subr.mxu0 0.0
        %2009 = vmatpush1.msra.mxu0 0.0
        %2010 = vmatprep.subr.mxu0 0.0
        %2011 = vmatpush1.msra.mxu0 0.0
        %2012 = vmatprep.subr.mxu0 0.0
        %2013 = vmatpush1.msra.mxu0 0.0
        %2014 = vmatprep.subr.mxu0 0.0
        %2015 = vmatpush1.msra.mxu0 0.0
        %2016 = vmatprep.subr.mxu0 0.0
        %2017 = vmatpush1.msra.mxu0 0.0
        %2018 = vmatprep.subr.mxu0 0.0
        %2019 = vmatpush1.msra.mxu0 0.0
        %2020 = vmatprep.mubr.f32.mxu0 0.0
        %2021 = vmatmul.mubr.f32.gmra.mrb[0].mxu0 %v1954
        %v2022 = vpop.f32.mrb[0].mxu0
        %v2023 = vadd.f32 0.0, %v2022
        %v2024 = vpop.f32.mrb[0].mxu0
        %v2025 = vadd.f32 0.0, %v2024
        %2026 = vdwg.mxu0
        %2029 = vrot.lane.b32.xlu0 %v2023, 48
        %v2030 = vpop.permute.xlu0 %2029
        %2031 = vrot.lane.b32.xlu0 %v2025, 48
        %v2032 = vpop.permute.xlu0 %2031
        %v2033 = vsel %vm364, %v2030, %v2032
        %v2036 = vadd.f32 %v1948, %v2030
        %v2037 = vadd.f32 %v1949, %v2033
        %2038 = vst.msk [vmem:[#allocation2] sm:$0xff] %vm370, %v2036
        %2039 = vst [vmem:[#allocation2 + $0x8] sm:$0xff] %v2037
        %v2040 = vld [vmem:[#allocation2] sm:$0xff]
        %v2041 = vld [vmem:[#allocation2 + $0x8] sm:$0xff]
        %v2042 = vld [vmem:[%s375] sm:$0xff]
        %v2043 = vld [vmem:[%s1858] sm:$0xff]
        %v2044 = vld [vmem:[%s1858 + $0x8] sm:$0xff]
        %v2046 = vsel %vm188, %v2042, 0
        %2048 = vmatprep.subr.mxu0 %v2044
        %2049 = vmatpush1.msra.mxu0 %v2043
        %2050 = vmatprep.subr.mxu0 0.0
        %2051 = vmatpush1.msra.mxu0 0.0
        %2052 = vmatprep.subr.mxu0 0.0
        %2053 = vmatpush1.msra.mxu0 0.0
        %2054 = vmatprep.subr.mxu0 0.0
        %2055 = vmatpush1.msra.mxu0 0.0
        %2056 = vmatprep.subr.mxu0 0.0
        %2057 = vmatpush1.msra.mxu0 0.0
        %2058 = vmatprep.subr.mxu0 0.0
        %2059 = vmatpush1.msra.mxu0 0.0
        %2060 = vmatprep.subr.mxu0 0.0
        %2061 = vmatpush1.msra.mxu0 0.0
        %2062 = vmatprep.subr.mxu0 0.0
        %2063 = vmatpush1.msra.mxu0 0.0
        %2064 = vmatprep.subr.mxu0 0.0
        %2065 = vmatpush1.msra.mxu0 0.0
        %2066 = vmatprep.subr.mxu0 0.0
        %2067 = vmatpush1.msra.mxu0 0.0
        %2068 = vmatprep.subr.mxu0 0.0
        %2069 = vmatpush1.msra.mxu0 0.0
        %2070 = vmatprep.subr.mxu0 0.0
        %2071 = vmatpush1.msra.mxu0 0.0
        %2072 = vmatprep.subr.mxu0 0.0
        %2073 = vmatpush1.msra.mxu0 0.0
        %2074 = vmatprep.subr.mxu0 0.0
        %2075 = vmatpush1.msra.mxu0 0.0
        %2076 = vmatprep.subr.mxu0 0.0
        %2077 = vmatpush1.msra.mxu0 0.0
        %2078 = vmatprep.subr.mxu0 0.0
        %2079 = vmatpush1.msra.mxu0 0.0
        %2080 = vmatprep.subr.mxu0 0.0
        %2081 = vmatpush1.msra.mxu0 0.0
        %2082 = vmatprep.subr.mxu0 0.0
        %2083 = vmatpush1.msra.mxu0 0.0
        %2084 = vmatprep.subr.mxu0 0.0
        %2085 = vmatpush1.msra.mxu0 0.0
        %2086 = vmatprep.subr.mxu0 0.0
        %2087 = vmatpush1.msra.mxu0 0.0
        %2088 = vmatprep.subr.mxu0 0.0
        %2089 = vmatpush1.msra.mxu0 0.0
        %2090 = vmatprep.subr.mxu0 0.0
        %2091 = vmatpush1.msra.mxu0 0.0
        %2092 = vmatprep.subr.mxu0 0.0
        %2093 = vmatpush1.msra.mxu0 0.0
        %2094 = vmatprep.subr.mxu0 0.0
        %2095 = vmatpush1.msra.mxu0 0.0
        %2096 = vmatprep.subr.mxu0 0.0
        %2097 = vmatpush1.msra.mxu0 0.0
        %2098 = vmatprep.subr.mxu0 0.0
        %2099 = vmatpush1.msra.mxu0 0.0
        %2100 = vmatprep.subr.mxu0 0.0
        %2101 = vmatpush1.msra.mxu0 0.0
        %2102 = vmatprep.subr.mxu0 0.0
        %2103 = vmatpush1.msra.mxu0 0.0
        %2104 = vmatprep.subr.mxu0 0.0
        %2105 = vmatpush1.msra.mxu0 0.0
        %2106 = vmatprep.subr.mxu0 0.0
        %2107 = vmatpush1.msra.mxu0 0.0
        %2108 = vmatprep.subr.mxu0 0.0
        %2109 = vmatpush1.msra.mxu0 0.0
        %2110 = vmatprep.subr.mxu0 0.0
        %2111 = vmatpush1.msra.mxu0 0.0
        %2112 = vmatprep.mubr.f32.mxu0 0.0
        %2113 = vmatmul.mubr.f32.gmra.mrb[0].mxu0 %v2046
        %v2114 = vpop.f32.mrb[0].mxu0
        %v2115 = vadd.f32 0.0, %v2114
        %v2116 = vpop.f32.mrb[0].mxu0
        %v2117 = vadd.f32 0.0, %v2116
        %2118 = vdwg.mxu0
        %2121 = vrot.lane.b32.xlu0 %v2115, 32
        %v2122 = vpop.permute.xlu0 %2121
        %2123 = vrot.lane.b32.xlu0 %v2117, 32
        %v2124 = vpop.permute.xlu0 %2123
        %v2125 = vsel %vm459, %v2122, %v2124
        %v2128 = vadd.f32 %v2040, %v2122
        %v2129 = vadd.f32 %v2041, %v2125
        %2130 = vst.msk [vmem:[#allocation2] sm:$0xff] %vm465, %v2128
        %2131 = vst [vmem:[#allocation2 + $0x8] sm:$0xff] %v2129
        %v2132 = vld [vmem:[#allocation2] sm:$0xff]
        %v2133 = vld [vmem:[#allocation2 + $0x8] sm:$0xff]
        %v2134 = vld [vmem:[%s470] sm:$0xff]
        %v2135 = vld [vmem:[%s1858] sm:$0xff]
        %v2136 = vld [vmem:[%s1858 + $0x8] sm:$0xff]
        %v2138 = vsel %vm188, %v2134, 0
        %2140 = vmatprep.subr.mxu0 %v2136
        %2141 = vmatpush1.msra.mxu0 %v2135
        %2142 = vmatprep.subr.mxu0 0.0
        %2143 = vmatpush1.msra.mxu0 0.0
        %2144 = vmatprep.subr.mxu0 0.0
        %2145 = vmatpush1.msra.mxu0 0.0
        %2146 = vmatprep.subr.mxu0 0.0
        %2147 = vmatpush1.msra.mxu0 0.0
        %2148 = vmatprep.subr.mxu0 0.0
        %2149 = vmatpush1.msra.mxu0 0.0
        %2150 = vmatprep.subr.mxu0 0.0
        %2151 = vmatpush1.msra.mxu0 0.0
        %2152 = vmatprep.subr.mxu0 0.0
        %2153 = vmatpush1.msra.mxu0 0.0
        %2154 = vmatprep.subr.mxu0 0.0
        %2155 = vmatpush1.msra.mxu0 0.0
        %2156 = vmatprep.subr.mxu0 0.0
        %2157 = vmatpush1.msra.mxu0 0.0
        %2158 = vmatprep.subr.mxu0 0.0
        %2159 = vmatpush1.msra.mxu0 0.0
        %2160 = vmatprep.subr.mxu0 0.0
        %2161 = vmatpush1.msra.mxu0 0.0
        %2162 = vmatprep.subr.mxu0 0.0
        %2163 = vmatpush1.msra.mxu0 0.0
        %2164 = vmatprep.subr.mxu0 0.0
        %2165 = vmatpush1.msra.mxu0 0.0
        %2166 = vmatprep.subr.mxu0 0.0
        %2167 = vmatpush1.msra.mxu0 0.0
        %2168 = vmatprep.subr.mxu0 0.0
        %2169 = vmatpush1.msra.mxu0 0.0
        %2170 = vmatprep.subr.mxu0 0.0
        %2171 = vmatpush1.msra.mxu0 0.0
        %2172 = vmatprep.subr.mxu0 0.0
        %2173 = vmatpush1.msra.mxu0 0.0
        %2174 = vmatprep.subr.mxu0 0.0
        %2175 = vmatpush1.msra.mxu0 0.0
        %2176 = vmatprep.subr.mxu0 0.0
        %2177 = vmatpush1.msra.mxu0 0.0
        %2178 = vmatprep.subr.mxu0 0.0
        %2179 = vmatpush1.msra.mxu0 0.0
        %2180 = vmatprep.subr.mxu0 0.0
        %2181 = vmatpush1.msra.mxu0 0.0
        %2182 = vmatprep.subr.mxu0 0.0
        %2183 = vmatpush1.msra.mxu0 0.0
        %2184 = vmatprep.subr.mxu0 0.0
        %2185 = vmatpush1.msra.mxu0 0.0
        %2186 = vmatprep.subr.mxu0 0.0
        %2187 = vmatpush1.msra.mxu0 0.0
        %2188 = vmatprep.subr.mxu0 0.0
        %2189 = vmatpush1.msra.mxu0 0.0
        %2190 = vmatprep.subr.mxu0 0.0
        %2191 = vmatpush1.msra.mxu0 0.0
        %2192 = vmatprep.subr.mxu0 0.0
        %2193 = vmatpush1.msra.mxu0 0.0
        %2194 = vmatprep.subr.mxu0 0.0
        %2195 = vmatpush1.msra.mxu0 0.0
        %2196 = vmatprep.subr.mxu0 0.0
        %2197 = vmatpush1.msra.mxu0 0.0
        %2198 = vmatprep.subr.mxu0 0.0
        %2199 = vmatpush1.msra.mxu0 0.0
        %2200 = vmatprep.subr.mxu0 0.0
        %2201 = vmatpush1.msra.mxu0 0.0
        %2202 = vmatprep.subr.mxu0 0.0
        %2203 = vmatpush1.msra.mxu0 0.0
        %2204 = vmatprep.mubr.f32.mxu0 0.0
        %2205 = vmatmul.mubr.f32.gmra.mrb[0].mxu0 %v2138
        %v2206 = vpop.f32.mrb[0].mxu0
        %v2207 = vadd.f32 0.0, %v2206
        %v2208 = vpop.f32.mrb[0].mxu0
        %v2209 = vadd.f32 0.0, %v2208
        %2210 = vdwg.mxu0
        %2213 = vrot.lane.b32.xlu0 %v2207, 16
        %v2214 = vpop.permute.xlu0 %2213
        %2215 = vrot.lane.b32.xlu0 %v2209, 16
        %v2216 = vpop.permute.xlu0 %2215
        %v2217 = vsel %vm554, %v2214, %v2216
        %v2220 = vadd.f32 %v2132, %v2214
        %v2221 = vadd.f32 %v2133, %v2217
        %2222 = vst.msk [vmem:[#allocation2] sm:$0xff] %vm560, %v2220
        %2223 = vst [vmem:[#allocation2 + $0x8] sm:$0xff] %v2221
        %v2224 = vld [vmem:[#allocation2] sm:$0xff]
        %v2225 = vld [vmem:[#allocation2 + $0x8] sm:$0xff]
        %v2226 = vld [vmem:[%s565] sm:$0xff]
        %v2227 = vld [vmem:[%s1858] sm:$0xff]
        %v2228 = vld [vmem:[%s1858 + $0x8] sm:$0xff]
        %v2230 = vsel %vm188, %v2226, 0
        %2232 = vmatprep.subr.mxu0 %v2228
        %2233 = vmatpush1.msra.mxu0 %v2227
        %2234 = vmatprep.subr.mxu0 0.0
        %2235 = vmatpush1.msra.mxu0 0.0
        %2236 = vmatprep.subr.mxu0 0.0
        %2237 = vmatpush1.msra.mxu0 0.0
        %2238 = vmatprep.subr.mxu0 0.0
        %2239 = vmatpush1.msra.mxu0 0.0
        %2240 = vmatprep.subr.mxu0 0.0
        %2241 = vmatpush1.msra.mxu0 0.0
        %2242 = vmatprep.subr.mxu0 0.0
        %2243 = vmatpush1.msra.mxu0 0.0
        %2244 = vmatprep.subr.mxu0 0.0
        %2245 = vmatpush1.msra.mxu0 0.0
        %2246 = vmatprep.subr.mxu0 0.0
        %2247 = vmatpush1.msra.mxu0 0.0
        %2248 = vmatprep.subr.mxu0 0.0
        %2249 = vmatpush1.msra.mxu0 0.0
        %2250 = vmatprep.subr.mxu0 0.0
        %2251 = vmatpush1.msra.mxu0 0.0
        %2252 = vmatprep.subr.mxu0 0.0
        %2253 = vmatpush1.msra.mxu0 0.0
        %2254 = vmatprep.subr.mxu0 0.0
        %2255 = vmatpush1.msra.mxu0 0.0
        %2256 = vmatprep.subr.mxu0 0.0
        %2257 = vmatpush1.msra.mxu0 0.0
        %2258 = vmatprep.subr.mxu0 0.0
        %2259 = vmatpush1.msra.mxu0 0.0
        %2260 = vmatprep.subr.mxu0 0.0
        %2261 = vmatpush1.msra.mxu0 0.0
        %2262 = vmatprep.subr.mxu0 0.0
        %2263 = vmatpush1.msra.mxu0 0.0
        %2264 = vmatprep.subr.mxu0 0.0
        %2265 = vmatpush1.msra.mxu0 0.0
        %2266 = vmatprep.subr.mxu0 0.0
        %2267 = vmatpush1.msra.mxu0 0.0
        %2268 = vmatprep.subr.mxu0 0.0
        %2269 = vmatpush1.msra.mxu0 0.0
        %2270 = vmatprep.subr.mxu0 0.0
        %2271 = vmatpush1.msra.mxu0 0.0
        %2272 = vmatprep.subr.mxu0 0.0
        %2273 = vmatpush1.msra.mxu0 0.0
        %2274 = vmatprep.subr.mxu0 0.0
        %2275 = vmatpush1.msra.mxu0 0.0
        %2276 = vmatprep.subr.mxu0 0.0
        %2277 = vmatpush1.msra.mxu0 0.0
        %2278 = vmatprep.subr.mxu0 0.0
        %2279 = vmatpush1.msra.mxu0 0.0
        %2280 = vmatprep.subr.mxu0 0.0
        %2281 = vmatpush1.msra.mxu0 0.0
        %2282 = vmatprep.subr.mxu0 0.0
        %2283 = vmatpush1.msra.mxu0 0.0
        %2284 = vmatprep.subr.mxu0 0.0
        %2285 = vmatpush1.msra.mxu0 0.0
        %2286 = vmatprep.subr.mxu0 0.0
        %2287 = vmatpush1.msra.mxu0 0.0
        %2288 = vmatprep.subr.mxu0 0.0
        %2289 = vmatpush1.msra.mxu0 0.0
        %2290 = vmatprep.subr.mxu0 0.0
        %2291 = vmatpush1.msra.mxu0 0.0
        %2292 = vmatprep.subr.mxu0 0.0
        %2293 = vmatpush1.msra.mxu0 0.0
        %2294 = vmatprep.subr.mxu0 0.0
        %2295 = vmatpush1.msra.mxu0 0.0
        %2296 = vmatprep.mubr.f32.mxu0 0.0
        %2297 = vmatmul.mubr.f32.gmra.mrb[0].mxu0 %v2230
        %v2298 = vpop.f32.mrb[0].mxu0
        %v2299 = vadd.f32 0.0, %v2298
        %v2300 = vpop.f32.mrb[0].mxu0
        %v2301 = vadd.f32 0.0, %v2300
        %2302 = vdwg.mxu0
        %v2303 = vadd.f32 %v2224, %v2299
        %v2304 = vadd.f32 %v2225, %v2301
        %2305 = vst [vmem:[#allocation2] sm:$0xff] %v2303
        %2306 = vst [vmem:[#allocation2 + $0x8] sm:$0xff] %v2304
        %v2307 = vld [vmem:[#allocation2] sm:$0xff]
        %v2308 = vld [vmem:[#allocation2 + $0x8] sm:$0xff]
        %v2309 = vld [vmem:[%s649] sm:$0xff]
        %v2310 = vld [vmem:[%s1858] sm:$0xff]
        %v2311 = vld [vmem:[%s1858 + $0x8] sm:$0xff]
        %2314 = vrot.lane.b32.xlu0 %v2310, 112
        %v2315 = vpop.permute.xlu0 %2314
        %2316 = vrot.lane.b32.xlu0 %v2311, 112
        %v2317 = vpop.permute.xlu0 %2316
        %v2318 = vsel %vm659, %v2315, %v2317
        %v2322 = vsel %vm188, %v2309, 0
        %2324 = vmatprep.subr.mxu0 %v2317
        %2325 = vmatpush1.msra.mxu0 %v2318
        %2326 = vmatprep.subr.mxu0 0.0
        %2327 = vmatpush1.msra.mxu0 0.0
        %2328 = vmatprep.subr.mxu0 0.0
        %2329 = vmatpush1.msra.mxu0 0.0
        %2330 = vmatprep.subr.mxu0 0.0
        %2331 = vmatpush1.msra.mxu0 0.0
        %2332 = vmatprep.subr.mxu0 0.0
        %2333 = vmatpush1.msra.mxu0 0.0
        %2334 = vmatprep.subr.mxu0 0.0
        %2335 = vmatpush1.msra.mxu0 0.0
        %2336 = vmatprep.subr.mxu0 0.0
        %2337 = vmatpush1.msra.mxu0 0.0
        %2338 = vmatprep.subr.mxu0 0.0
        %2339 = vmatpush1.msra.mxu0 0.0
        %2340 = vmatprep.subr.mxu0 0.0
        %2341 = vmatpush1.msra.mxu0 0.0
        %2342 = vmatprep.subr.mxu0 0.0
        %2343 = vmatpush1.msra.mxu0 0.0
        %2344 = vmatprep.subr.mxu0 0.0
        %2345 = vmatpush1.msra.mxu0 0.0
        %2346 = vmatprep.subr.mxu0 0.0
        %2347 = vmatpush1.msra.mxu0 0.0
        %2348 = vmatprep.subr.mxu0 0.0
        %2349 = vmatpush1.msra.mxu0 0.0
        %2350 = vmatprep.subr.mxu0 0.0
        %2351 = vmatpush1.msra.mxu0 0.0
        %2352 = vmatprep.subr.mxu0 0.0
        %2353 = vmatpush1.msra.mxu0 0.0
        %2354 = vmatprep.subr.mxu0 0.0
        %2355 = vmatpush1.msra.mxu0 0.0
        %2356 = vmatprep.subr.mxu0 0.0
        %2357 = vmatpush1.msra.mxu0 0.0
        %2358 = vmatprep.subr.mxu0 0.0
        %2359 = vmatpush1.msra.mxu0 0.0
        %2360 = vmatprep.subr.mxu0 0.0
        %2361 = vmatpush1.msra.mxu0 0.0
        %2362 = vmatprep.subr.mxu0 0.0
        %2363 = vmatpush1.msra.mxu0 0.0
        %2364 = vmatprep.subr.mxu0 0.0
        %2365 = vmatpush1.msra.mxu0 0.0
        %2366 = vmatprep.subr.mxu0 0.0
        %2367 = vmatpush1.msra.mxu0 0.0
        %2368 = vmatprep.subr.mxu0 0.0
        %2369 = vmatpush1.msra.mxu0 0.0
        %2370 = vmatprep.subr.mxu0 0.0
        %2371 = vmatpush1.msra.mxu0 0.0
        %2372 = vmatprep.subr.mxu0 0.0
        %2373 = vmatpush1.msra.mxu0 0.0
        %2374 = vmatprep.subr.mxu0 0.0
        %2375 = vmatpush1.msra.mxu0 0.0
        %2376 = vmatprep.subr.mxu0 0.0
        %2377 = vmatpush1.msra.mxu0 0.0
        %2378 = vmatprep.subr.mxu0 0.0
        %2379 = vmatpush1.msra.mxu0 0.0
        %2380 = vmatprep.subr.mxu0 0.0
        %2381 = vmatpush1.msra.mxu0 0.0
        %2382 = vmatprep.subr.mxu0 0.0
        %2383 = vmatpush1.msra.mxu0 0.0
        %2384 = vmatprep.subr.mxu0 0.0
        %2385 = vmatpush1.msra.mxu0 0.0
        %2386 = vmatprep.subr.mxu0 0.0
        %2387 = vmatpush1.msra.mxu0 0.0
        %2388 = vmatprep.mubr.f32.mxu0 0.0
        %2389 = vmatmul.mubr.f32.gmra.mrb[0].mxu0 %v2322
        %v2390 = vpop.f32.mrb[0].mxu0
        %v2391 = vadd.f32 0.0, %v2390
        %v2392 = vpop.f32.mrb[0].mxu0
        %v2393 = vadd.f32 0.0, %v2392
        %2394 = vdwg.mxu0
        %v2395 = vadd.f32 %v2307, %v2391
        %v2396 = vadd.f32 %v2308, %v2393
        %2397 = vst [vmem:[#allocation2] sm:$0xff] %v2395
        %2398 = vst.msk [vmem:[#allocation2 + $0x8] sm:$0xff] %vm659, %v2396
        %v2399 = vld [vmem:[#allocation2] sm:$0xff]
        %v2400 = vld [vmem:[#allocation2 + $0x8] sm:$0xff]
        %v2401 = vld [vmem:[%s743] sm:$0xff]
        %v2402 = vld [vmem:[%s1858] sm:$0xff]
        %v2403 = vld [vmem:[%s1858 + $0x8] sm:$0xff]
        %2406 = vrot.lane.b32.xlu0 %v2402, 96
        %v2407 = vpop.permute.xlu0 %2406
        %2408 = vrot.lane.b32.xlu0 %v2403, 96
        %v2409 = vpop.permute.xlu0 %2408
        %v2410 = vsel %vm753, %v2407, %v2409
        %v2414 = vsel %vm188, %v2401, 0
        %2416 = vmatprep.subr.mxu0 %v2409
        %2417 = vmatpush1.msra.mxu0 %v2410
        %2418 = vmatprep.subr.mxu0 0.0
        %2419 = vmatpush1.msra.mxu0 0.0
        %2420 = vmatprep.subr.mxu0 0.0
        %2421 = vmatpush1.msra.mxu0 0.0
        %2422 = vmatprep.subr.mxu0 0.0
        %2423 = vmatpush1.msra.mxu0 0.0
        %2424 = vmatprep.subr.mxu0 0.0
        %2425 = vmatpush1.msra.mxu0 0.0
        %2426 = vmatprep.subr.mxu0 0.0
        %2427 = vmatpush1.msra.mxu0 0.0
        %2428 = vmatprep.subr.mxu0 0.0
        %2429 = vmatpush1.msra.mxu0 0.0
        %2430 = vmatprep.subr.mxu0 0.0
        %2431 = vmatpush1.msra.mxu0 0.0
        %2432 = vmatprep.subr.mxu0 0.0
        %2433 = vmatpush1.msra.mxu0 0.0
        %2434 = vmatprep.subr.mxu0 0.0
        %2435 = vmatpush1.msra.mxu0 0.0
        %2436 = vmatprep.subr.mxu0 0.0
        %2437 = vmatpush1.msra.mxu0 0.0
        %2438 = vmatprep.subr.mxu0 0.0
        %2439 = vmatpush1.msra.mxu0 0.0
        %2440 = vmatprep.subr.mxu0 0.0
        %2441 = vmatpush1.msra.mxu0 0.0
        %2442 = vmatprep.subr.mxu0 0.0
        %2443 = vmatpush1.msra.mxu0 0.0
        %2444 = vmatprep.subr.mxu0 0.0
        %2445 = vmatpush1.msra.mxu0 0.0
        %2446 = vmatprep.subr.mxu0 0.0
        %2447 = vmatpush1.msra.mxu0 0.0
        %2448 = vmatprep.subr.mxu0 0.0
        %2449 = vmatpush1.msra.mxu0 0.0
        %2450 = vmatprep.subr.mxu0 0.0
        %2451 = vmatpush1.msra.mxu0 0.0
        %2452 = vmatprep.subr.mxu0 0.0
        %2453 = vmatpush1.msra.mxu0 0.0
        %2454 = vmatprep.subr.mxu0 0.0
        %2455 = vmatpush1.msra.mxu0 0.0
        %2456 = vmatprep.subr.mxu0 0.0
        %2457 = vmatpush1.msra.mxu0 0.0
        %2458 = vmatprep.subr.mxu0 0.0
        %2459 = vmatpush1.msra.mxu0 0.0
        %2460 = vmatprep.subr.mxu0 0.0
        %2461 = vmatpush1.msra.mxu0 0.0
        %2462 = vmatprep.subr.mxu0 0.0
        %2463 = vmatpush1.msra.mxu0 0.0
        %2464 = vmatprep.subr.mxu0 0.0
        %2465 = vmatpush1.msra.mxu0 0.0
        %2466 = vmatprep.subr.mxu0 0.0
        %2467 = vmatpush1.msra.mxu0 0.0
        %2468 = vmatprep.subr.mxu0 0.0
        %2469 = vmatpush1.msra.mxu0 0.0
        %2470 = vmatprep.subr.mxu0 0.0
        %2471 = vmatpush1.msra.mxu0 0.0
        %2472 = vmatprep.subr.mxu0 0.0
        %2473 = vmatpush1.msra.mxu0 0.0
        %2474 = vmatprep.subr.mxu0 0.0
        %2475 = vmatpush1.msra.mxu0 0.0
        %2476 = vmatprep.subr.mxu0 0.0
        %2477 = vmatpush1.msra.mxu0 0.0
        %2478 = vmatprep.subr.mxu0 0.0
        %2479 = vmatpush1.msra.mxu0 0.0
        %2480 = vmatprep.mubr.f32.mxu0 0.0
        %2481 = vmatmul.mubr.f32.gmra.mrb[0].mxu0 %v2414
        %v2482 = vpop.f32.mrb[0].mxu0
        %v2483 = vadd.f32 0.0, %v2482
        %v2484 = vpop.f32.mrb[0].mxu0
        %v2485 = vadd.f32 0.0, %v2484
        %2486 = vdwg.mxu0
        %v2487 = vadd.f32 %v2399, %v2483
        %v2488 = vadd.f32 %v2400, %v2485
        %2489 = vst [vmem:[#allocation2] sm:$0xff] %v2487
        %2490 = vst.msk [vmem:[#allocation2 + $0x8] sm:$0xff] %vm753, %v2488
        %v2491 = vld [vmem:[#allocation2] sm:$0xff]
        %v2492 = vld [vmem:[#allocation2 + $0x8] sm:$0xff]
        %v2493 = vld [vmem:[%s837] sm:$0xff]
        %v2494 = vld [vmem:[%s1858] sm:$0xff]
        %v2495 = vld [vmem:[%s1858 + $0x8] sm:$0xff]
        %2498 = vrot.lane.b32.xlu0 %v2494, 80
        %v2499 = vpop.permute.xlu0 %2498
        %2500 = vrot.lane.b32.xlu0 %v2495, 80
        %v2501 = vpop.permute.xlu0 %2500
        %v2502 = vsel %vm847, %v2499, %v2501
        %v2506 = vsel %vm188, %v2493, 0
        %2508 = vmatprep.subr.mxu0 %v2501
        %2509 = vmatpush1.msra.mxu0 %v2502
        %2510 = vmatprep.subr.mxu0 0.0
        %2511 = vmatpush1.msra.mxu0 0.0
        %2512 = vmatprep.subr.mxu0 0.0
        %2513 = vmatpush1.msra.mxu0 0.0
        %2514 = vmatprep.subr.mxu0 0.0
        %2515 = vmatpush1.msra.mxu0 0.0
        %2516 = vmatprep.subr.mxu0 0.0
        %2517 = vmatpush1.msra.mxu0 0.0
        %2518 = vmatprep.subr.mxu0 0.0
        %2519 = vmatpush1.msra.mxu0 0.0
        %2520 = vmatprep.subr.mxu0 0.0
        %2521 = vmatpush1.msra.mxu0 0.0
        %2522 = vmatprep.subr.mxu0 0.0
        %2523 = vmatpush1.msra.mxu0 0.0
        %2524 = vmatprep.subr.mxu0 0.0
        %2525 = vmatpush1.msra.mxu0 0.0
        %2526 = vmatprep.subr.mxu0 0.0
        %2527 = vmatpush1.msra.mxu0 0.0
        %2528 = vmatprep.subr.mxu0 0.0
        %2529 = vmatpush1.msra.mxu0 0.0
        %2530 = vmatprep.subr.mxu0 0.0
        %2531 = vmatpush1.msra.mxu0 0.0
        %2532 = vmatprep.subr.mxu0 0.0
        %2533 = vmatpush1.msra.mxu0 0.0
        %2534 = vmatprep.subr.mxu0 0.0
        %2535 = vmatpush1.msra.mxu0 0.0
        %2536 = vmatprep.subr.mxu0 0.0
        %2537 = vmatpush1.msra.mxu0 0.0
        %2538 = vmatprep.subr.mxu0 0.0
        %2539 = vmatpush1.msra.mxu0 0.0
        %2540 = vmatprep.subr.mxu0 0.0
        %2541 = vmatpush1.msra.mxu0 0.0
        %2542 = vmatprep.subr.mxu0 0.0
        %2543 = vmatpush1.msra.mxu0 0.0
        %2544 = vmatprep.subr.mxu0 0.0
        %2545 = vmatpush1.msra.mxu0 0.0
        %2546 = vmatprep.subr.mxu0 0.0
        %2547 = vmatpush1.msra.mxu0 0.0
        %2548 = vmatprep.subr.mxu0 0.0
        %2549 = vmatpush1.msra.mxu0 0.0
        %2550 = vmatprep.subr.mxu0 0.0
        %2551 = vmatpush1.msra.mxu0 0.0
        %2552 = vmatprep.subr.mxu0 0.0
        %2553 = vmatpush1.msra.mxu0 0.0
        %2554 = vmatprep.subr.mxu0 0.0
        %2555 = vmatpush1.msra.mxu0 0.0
        %2556 = vmatprep.subr.mxu0 0.0
        %2557 = vmatpush1.msra.mxu0 0.0
        %2558 = vmatprep.subr.mxu0 0.0
        %2559 = vmatpush1.msra.mxu0 0.0
        %2560 = vmatprep.subr.mxu0 0.0
        %2561 = vmatpush1.msra.mxu0 0.0
        %2562 = vmatprep.subr.mxu0 0.0
        %2563 = vmatpush1.msra.mxu0 0.0
        %2564 = vmatprep.subr.mxu0 0.0
        %2565 = vmatpush1.msra.mxu0 0.0
        %2566 = vmatprep.subr.mxu0 0.0
        %2567 = vmatpush1.msra.mxu0 0.0
        %2568 = vmatprep.subr.mxu0 0.0
        %2569 = vmatpush1.msra.mxu0 0.0
        %2570 = vmatprep.subr.mxu0 0.0
        %2571 = vmatpush1.msra.mxu0 0.0
        %2572 = vmatprep.mubr.f32.mxu0 0.0
        %2573 = vmatmul.mubr.f32.gmra.mrb[0].mxu0 %v2506
        %v2574 = vpop.f32.mrb[0].mxu0
        %v2575 = vadd.f32 0.0, %v2574
        %v2576 = vpop.f32.mrb[0].mxu0
        %v2577 = vadd.f32 0.0, %v2576
        %2578 = vdwg.mxu0
        %v2579 = vadd.f32 %v2491, %v2575
        %v2580 = vadd.f32 %v2492, %v2577
        %2581 = vst [vmem:[#allocation2] sm:$0xff] %v2579
        %2582 = vst.msk [vmem:[#allocation2 + $0x8] sm:$0xff] %vm847, %v2580
        %v2583 = vld [vmem:[#allocation2] sm:$0xff]
        %v2584 = vld [vmem:[#allocation2 + $0x8] sm:$0xff]
        %v2585 = vld [vmem:[%s931] sm:$0xff]
        %v2586 = vld [vmem:[%s1858] sm:$0xff]
        %v2587 = vld [vmem:[%s1858 + $0x8] sm:$0xff]
        %2590 = vrot.lane.b32.xlu0 %v2586, 64
        %v2591 = vpop.permute.xlu0 %2590
        %2592 = vrot.lane.b32.xlu0 %v2587, 64
        %v2593 = vpop.permute.xlu0 %2592
        %v2594 = vsel %vm269, %v2591, %v2593
        %v2598 = vsel %vm188, %v2585, 0
        %2600 = vmatprep.subr.mxu0 %v2593
        %2601 = vmatpush1.msra.mxu0 %v2594
        %2602 = vmatprep.subr.mxu0 0.0
        %2603 = vmatpush1.msra.mxu0 0.0
        %2604 = vmatprep.subr.mxu0 0.0
        %2605 = vmatpush1.msra.mxu0 0.0
        %2606 = vmatprep.subr.mxu0 0.0
        %2607 = vmatpush1.msra.mxu0 0.0
        %2608 = vmatprep.subr.mxu0 0.0
        %2609 = vmatpush1.msra.mxu0 0.0
        %2610 = vmatprep.subr.mxu0 0.0
        %2611 = vmatpush1.msra.mxu0 0.0
        %2612 = vmatprep.subr.mxu0 0.0
        %2613 = vmatpush1.msra.mxu0 0.0
        %2614 = vmatprep.subr.mxu0 0.0
        %2615 = vmatpush1.msra.mxu0 0.0
        %2616 = vmatprep.subr.mxu0 0.0
        %2617 = vmatpush1.msra.mxu0 0.0
        %2618 = vmatprep.subr.mxu0 0.0
        %2619 = vmatpush1.msra.mxu0 0.0
        %2620 = vmatprep.subr.mxu0 0.0
        %2621 = vmatpush1.msra.mxu0 0.0
        %2622 = vmatprep.subr.mxu0 0.0
        %2623 = vmatpush1.msra.mxu0 0.0
        %2624 = vmatprep.subr.mxu0 0.0
        %2625 = vmatpush1.msra.mxu0 0.0
        %2626 = vmatprep.subr.mxu0 0.0
        %2627 = vmatpush1.msra.mxu0 0.0
        %2628 = vmatprep.subr.mxu0 0.0
        %2629 = vmatpush1.msra.mxu0 0.0
        %2630 = vmatprep.subr.mxu0 0.0
        %2631 = vmatpush1.msra.mxu0 0.0
        %2632 = vmatprep.subr.mxu0 0.0
        %2633 = vmatpush1.msra.mxu0 0.0
        %2634 = vmatprep.subr.mxu0 0.0
        %2635 = vmatpush1.msra.mxu0 0.0
        %2636 = vmatprep.subr.mxu0 0.0
        %2637 = vmatpush1.msra.mxu0 0.0
        %2638 = vmatprep.subr.mxu0 0.0
        %2639 = vmatpush1.msra.mxu0 0.0
        %2640 = vmatprep.subr.mxu0 0.0
        %2641 = vmatpush1.msra.mxu0 0.0
        %2642 = vmatprep.subr.mxu0 0.0
        %2643 = vmatpush1.msra.mxu0 0.0
        %2644 = vmatprep.subr.mxu0 0.0
        %2645 = vmatpush1.msra.mxu0 0.0
        %2646 = vmatprep.subr.mxu0 0.0
        %2647 = vmatpush1.msra.mxu0 0.0
        %2648 = vmatprep.subr.mxu0 0.0
        %2649 = vmatpush1.msra.mxu0 0.0
        %2650 = vmatprep.subr.mxu0 0.0
        %2651 = vmatpush1.msra.mxu0 0.0
        %2652 = vmatprep.subr.mxu0 0.0
        %2653 = vmatpush1.msra.mxu0 0.0
        %2654 = vmatprep.subr.mxu0 0.0
        %2655 = vmatpush1.msra.mxu0 0.0
        %2656 = vmatprep.subr.mxu0 0.0
        %2657 = vmatpush1.msra.mxu0 0.0
        %2658 = vmatprep.subr.mxu0 0.0
        %2659 = vmatpush1.msra.mxu0 0.0
        %2660 = vmatprep.subr.mxu0 0.0
        %2661 = vmatpush1.msra.mxu0 0.0
        %2662 = vmatprep.subr.mxu0 0.0
        %2663 = vmatpush1.msra.mxu0 0.0
        %2664 = vmatprep.mubr.f32.mxu0 0.0
        %2665 = vmatmul.mubr.f32.gmra.mrb[0].mxu0 %v2598
        %v2666 = vpop.f32.mrb[0].mxu0
        %v2667 = vadd.f32 0.0, %v2666
        %v2668 = vpop.f32.mrb[0].mxu0
        %v2669 = vadd.f32 0.0, %v2668
        %2670 = vdwg.mxu0
        %v2671 = vadd.f32 %v2583, %v2667
        %v2672 = vadd.f32 %v2584, %v2669
        %2673 = vst [vmem:[#allocation2] sm:$0xff] %v2671
        %2674 = vst.msk [vmem:[#allocation2 + $0x8] sm:$0xff] %vm269, %v2672
        %v2675 = vld [vmem:[#allocation2] sm:$0xff]
        %v2676 = vld [vmem:[#allocation2 + $0x8] sm:$0xff]
        %s2677 = scalar_lea.vmem %s166, 32 [#allocation3]
        %2678 = vst [vmem:[%s2677] sm:$0xff] %v2675
        %2679 = vst [vmem:[%s2677 + $0x8] sm:$0xff] %v2676
        %2680 = vst [vmem:[#allocation2] sm:$0xff] %v179
        %2681 = vst [vmem:[#allocation2 + $0x8] sm:$0xff] %v179
        %v2682 = vld [vmem:[#allocation2] sm:$0xff]
        %v2683 = vld [vmem:[#allocation2 + $0x8] sm:$0xff]
        %v2684 = vld [vmem:[%s1] sm:$0xff]
        %s2685 = scalar_lea.vmem %s172, 48
        %v2686 = vld [vmem:[%s2685] sm:$0xff]
        %v2687 = vld [vmem:[%s2685 + $0x8] sm:$0xff]
        %v2689 = vsel %vm188, %v2684, 0
        %2691 = vmatprep.subr.mxu0 %v2687
        %2692 = vmatpush1.msra.mxu0 %v2686
        %2693 = vmatprep.subr.mxu0 0.0
        %2694 = vmatpush1.msra.mxu0 0.0
        %2695 = vmatprep.subr.mxu0 0.0
        %2696 = vmatpush1.msra.mxu0 0.0
        %2697 = vmatprep.subr.mxu0 0.0
        %2698 = vmatpush1.msra.mxu0 0.0
        %2699 = vmatprep.subr.mxu0 0.0
        %2700 = vmatpush1.msra.mxu0 0.0
        %2701 = vmatprep.subr.mxu0 0.0
        %2702 = vmatpush1.msra.mxu0 0.0
        %2703 = vmatprep.subr.mxu0 0.0
        %2704 = vmatpush1.msra.mxu0 0.0
        %2705 = vmatprep.subr.mxu0 0.0
        %2706 = vmatpush1.msra.mxu0 0.0
        %2707 = vmatprep.subr.mxu0 0.0
        %2708 = vmatpush1.msra.mxu0 0.0
        %2709 = vmatprep.subr.mxu0 0.0
        %2710 = vmatpush1.msra.mxu0 0.0
        %2711 = vmatprep.subr.mxu0 0.0
        %2712 = vmatpush1.msra.mxu0 0.0
        %2713 = vmatprep.subr.mxu0 0.0
        %2714 = vmatpush1.msra.mxu0 0.0
        %2715 = vmatprep.subr.mxu0 0.0
        %2716 = vmatpush1.msra.mxu0 0.0
        %2717 = vmatprep.subr.mxu0 0.0
        %2718 = vmatpush1.msra.mxu0 0.0
        %2719 = vmatprep.subr.mxu0 0.0
        %2720 = vmatpush1.msra.mxu0 0.0
        %2721 = vmatprep.subr.mxu0 0.0
        %2722 = vmatpush1.msra.mxu0 0.0
        %2723 = vmatprep.subr.mxu0 0.0
        %2724 = vmatpush1.msra.mxu0 0.0
        %2725 = vmatprep.subr.mxu0 0.0
        %2726 = vmatpush1.msra.mxu0 0.0
        %2727 = vmatprep.subr.mxu0 0.0
        %2728 = vmatpush1.msra.mxu0 0.0
        %2729 = vmatprep.subr.mxu0 0.0
        %2730 = vmatpush1.msra.mxu0 0.0
        %2731 = vmatprep.subr.mxu0 0.0
        %2732 = vmatpush1.msra.mxu0 0.0
        %2733 = vmatprep.subr.mxu0 0.0
        %2734 = vmatpush1.msra.mxu0 0.0
        %2735 = vmatprep.subr.mxu0 0.0
        %2736 = vmatpush1.msra.mxu0 0.0
        %2737 = vmatprep.subr.mxu0 0.0
        %2738 = vmatpush1.msra.mxu0 0.0
        %2739 = vmatprep.subr.mxu0 0.0
        %2740 = vmatpush1.msra.mxu0 0.0
        %2741 = vmatprep.subr.mxu0 0.0
        %2742 = vmatpush1.msra.mxu0 0.0
        %2743 = vmatprep.subr.mxu0 0.0
        %2744 = vmatpush1.msra.mxu0 0.0
        %2745 = vmatprep.subr.mxu0 0.0
        %2746 = vmatpush1.msra.mxu0 0.0
        %2747 = vmatprep.subr.mxu0 0.0
        %2748 = vmatpush1.msra.mxu0 0.0
        %2749 = vmatprep.subr.mxu0 0.0
        %2750 = vmatpush1.msra.mxu0 0.0
        %2751 = vmatprep.subr.mxu0 0.0
        %2752 = vmatpush1.msra.mxu0 0.0
        %2753 = vmatprep.subr.mxu0 0.0
        %2754 = vmatpush1.msra.mxu0 0.0
        %2755 = vmatprep.mubr.f32.mxu0 0.0
        %2756 = vmatmul.mubr.f32.gmra.mrb[0].mxu0 %v2689
        %v2757 = vpop.f32.mrb[0].mxu0
        %v2758 = vadd.f32 0.0, %v2757
        %v2759 = vpop.f32.mrb[0].mxu0
        %v2760 = vadd.f32 0.0, %v2759
        %2761 = vdwg.mxu0
        %2764 = vrot.lane.b32.xlu0 %v2758, 64
        %v2765 = vpop.permute.xlu0 %2764
        %2766 = vrot.lane.b32.xlu0 %v2760, 64
        %v2767 = vpop.permute.xlu0 %2766
        %v2768 = vsel %vm269, %v2765, %v2767
        %v2771 = vadd.f32 %v2682, %v2765
        %v2772 = vadd.f32 %v2683, %v2768
        %2773 = vst.msk [vmem:[#allocation2] sm:$0xff] %vm275, %v2771
        %2774 = vst [vmem:[#allocation2 + $0x8] sm:$0xff] %v2772
        %v2775 = vld [vmem:[#allocation2] sm:$0xff]
        %v2776 = vld [vmem:[#allocation2 + $0x8] sm:$0xff]
        %v2777 = vld [vmem:[%s280] sm:$0xff]
        %v2778 = vld [vmem:[%s2685] sm:$0xff]
        %v2779 = vld [vmem:[%s2685 + $0x8] sm:$0xff]
        %v2781 = vsel %vm188, %v2777, 0
        %2783 = vmatprep.subr.mxu0 %v2779
        %2784 = vmatpush1.msra.mxu0 %v2778
        %2785 = vmatprep.subr.mxu0 0.0
        %2786 = vmatpush1.msra.mxu0 0.0
        %2787 = vmatprep.subr.mxu0 0.0
        %2788 = vmatpush1.msra.mxu0 0.0
        %2789 = vmatprep.subr.mxu0 0.0
        %2790 = vmatpush1.msra.mxu0 0.0
        %2791 = vmatprep.subr.mxu0 0.0
        %2792 = vmatpush1.msra.mxu0 0.0
        %2793 = vmatprep.subr.mxu0 0.0
        %2794 = vmatpush1.msra.mxu0 0.0
        %2795 = vmatprep.subr.mxu0 0.0
        %2796 = vmatpush1.msra.mxu0 0.0
        %2797 = vmatprep.subr.mxu0 0.0
        %2798 = vmatpush1.msra.mxu0 0.0
        %2799 = vmatprep.subr.mxu0 0.0
        %2800 = vmatpush1.msra.mxu0 0.0
        %2801 = vmatprep.subr.mxu0 0.0
        %2802 = vmatpush1.msra.mxu0 0.0
        %2803 = vmatprep.subr.mxu0 0.0
        %2804 = vmatpush1.msra.mxu0 0.0
        %2805 = vmatprep.subr.mxu0 0.0
        %2806 = vmatpush1.msra.mxu0 0.0
        %2807 = vmatprep.subr.mxu0 0.0
        %2808 = vmatpush1.msra.mxu0 0.0
        %2809 = vmatprep.subr.mxu0 0.0
        %2810 = vmatpush1.msra.mxu0 0.0
        %2811 = vmatprep.subr.mxu0 0.0
        %2812 = vmatpush1.msra.mxu0 0.0
        %2813 = vmatprep.subr.mxu0 0.0
        %2814 = vmatpush1.msra.mxu0 0.0
        %2815 = vmatprep.subr.mxu0 0.0
        %2816 = vmatpush1.msra.mxu0 0.0
        %2817 = vmatprep.subr.mxu0 0.0
        %2818 = vmatpush1.msra.mxu0 0.0
        %2819 = vmatprep.subr.mxu0 0.0
        %2820 = vmatpush1.msra.mxu0 0.0
        %2821 = vmatprep.subr.mxu0 0.0
        %2822 = vmatpush1.msra.mxu0 0.0
        %2823 = vmatprep.subr.mxu0 0.0
        %2824 = vmatpush1.msra.mxu0 0.0
        %2825 = vmatprep.subr.mxu0 0.0
        %2826 = vmatpush1.msra.mxu0 0.0
        %2827 = vmatprep.subr.mxu0 0.0
        %2828 = vmatpush1.msra.mxu0 0.0
        %2829 = vmatprep.subr.mxu0 0.0
        %2830 = vmatpush1.msra.mxu0 0.0
        %2831 = vmatprep.subr.mxu0 0.0
        %2832 = vmatpush1.msra.mxu0 0.0
        %2833 = vmatprep.subr.mxu0 0.0
        %2834 = vmatpush1.msra.mxu0 0.0
        %2835 = vmatprep.subr.mxu0 0.0
        %2836 = vmatpush1.msra.mxu0 0.0
        %2837 = vmatprep.subr.mxu0 0.0
        %2838 = vmatpush1.msra.mxu0 0.0
        %2839 = vmatprep.subr.mxu0 0.0
        %2840 = vmatpush1.msra.mxu0 0.0
        %2841 = vmatprep.subr.mxu0 0.0
        %2842 = vmatpush1.msra.mxu0 0.0
        %2843 = vmatprep.subr.mxu0 0.0
        %2844 = vmatpush1.msra.mxu0 0.0
        %2845 = vmatprep.subr.mxu0 0.0
        %2846 = vmatpush1.msra.mxu0 0.0
        %2847 = vmatprep.mubr.f32.mxu0 0.0
        %2848 = vmatmul.mubr.f32.gmra.mrb[0].mxu0 %v2781
        %v2849 = vpop.f32.mrb[0].mxu0
        %v2850 = vadd.f32 0.0, %v2849
        %v2851 = vpop.f32.mrb[0].mxu0
        %v2852 = vadd.f32 0.0, %v2851
        %2853 = vdwg.mxu0
        %2856 = vrot.lane.b32.xlu0 %v2850, 48
        %v2857 = vpop.permute.xlu0 %2856
        %2858 = vrot.lane.b32.xlu0 %v2852, 48
        %v2859 = vpop.permute.xlu0 %2858
        %v2860 = vsel %vm364, %v2857, %v2859
        %v2863 = vadd.f32 %v2775, %v2857
        %v2864 = vadd.f32 %v2776, %v2860
        %2865 = vst.msk [vmem:[#allocation2] sm:$0xff] %vm370, %v2863
        %2866 = vst [vmem:[#allocation2 + $0x8] sm:$0xff] %v2864
        %v2867 = vld [vmem:[#allocation2] sm:$0xff]
        %v2868 = vld [vmem:[#allocation2 + $0x8] sm:$0xff]
        %v2869 = vld [vmem:[%s375] sm:$0xff]
        %v2870 = vld [vmem:[%s2685] sm:$0xff]
        %v2871 = vld [vmem:[%s2685 + $0x8] sm:$0xff]
        %v2873 = vsel %vm188, %v2869, 0
        %2875 = vmatprep.subr.mxu0 %v2871
        %2876 = vmatpush1.msra.mxu0 %v2870
        %2877 = vmatprep.subr.mxu0 0.0
        %2878 = vmatpush1.msra.mxu0 0.0
        %2879 = vmatprep.subr.mxu0 0.0
        %2880 = vmatpush1.msra.mxu0 0.0
        %2881 = vmatprep.subr.mxu0 0.0
        %2882 = vmatpush1.msra.mxu0 0.0
        %2883 = vmatprep.subr.mxu0 0.0
        %2884 = vmatpush1.msra.mxu0 0.0
        %2885 = vmatprep.subr.mxu0 0.0
        %2886 = vmatpush1.msra.mxu0 0.0
        %2887 = vmatprep.subr.mxu0 0.0
        %2888 = vmatpush1.msra.mxu0 0.0
        %2889 = vmatprep.subr.mxu0 0.0
        %2890 = vmatpush1.msra.mxu0 0.0
        %2891 = vmatprep.subr.mxu0 0.0
        %2892 = vmatpush1.msra.mxu0 0.0
        %2893 = vmatprep.subr.mxu0 0.0
        %2894 = vmatpush1.msra.mxu0 0.0
        %2895 = vmatprep.subr.mxu0 0.0
        %2896 = vmatpush1.msra.mxu0 0.0
        %2897 = vmatprep.subr.mxu0 0.0
        %2898 = vmatpush1.msra.mxu0 0.0
        %2899 = vmatprep.subr.mxu0 0.0
        %2900 = vmatpush1.msra.mxu0 0.0
        %2901 = vmatprep.subr.mxu0 0.0
        %2902 = vmatpush1.msra.mxu0 0.0
        %2903 = vmatprep.subr.mxu0 0.0
        %2904 = vmatpush1.msra.mxu0 0.0
        %2905 = vmatprep.subr.mxu0 0.0
        %2906 = vmatpush1.msra.mxu0 0.0
        %2907 = vmatprep.subr.mxu0 0.0
        %2908 = vmatpush1.msra.mxu0 0.0
        %2909 = vmatprep.subr.mxu0 0.0
        %2910 = vmatpush1.msra.mxu0 0.0
        %2911 = vmatprep.subr.mxu0 0.0
        %2912 = vmatpush1.msra.mxu0 0.0
        %2913 = vmatprep.subr.mxu0 0.0
        %2914 = vmatpush1.msra.mxu0 0.0
        %2915 = vmatprep.subr.mxu0 0.0
        %2916 = vmatpush1.msra.mxu0 0.0
        %2917 = vmatprep.subr.mxu0 0.0
        %2918 = vmatpush1.msra.mxu0 0.0
        %2919 = vmatprep.subr.mxu0 0.0
        %2920 = vmatpush1.msra.mxu0 0.0
        %2921 = vmatprep.subr.mxu0 0.0
        %2922 = vmatpush1.msra.mxu0 0.0
        %2923 = vmatprep.subr.mxu0 0.0
        %2924 = vmatpush1.msra.mxu0 0.0
        %2925 = vmatprep.subr.mxu0 0.0
        %2926 = vmatpush1.msra.mxu0 0.0
        %2927 = vmatprep.subr.mxu0 0.0
        %2928 = vmatpush1.msra.mxu0 0.0
        %2929 = vmatprep.subr.mxu0 0.0
        %2930 = vmatpush1.msra.mxu0 0.0
        %2931 = vmatprep.subr.mxu0 0.0
        %2932 = vmatpush1.msra.mxu0 0.0
        %2933 = vmatprep.subr.mxu0 0.0
        %2934 = vmatpush1.msra.mxu0 0.0
        %2935 = vmatprep.subr.mxu0 0.0
        %2936 = vmatpush1.msra.mxu0 0.0
        %2937 = vmatprep.subr.mxu0 0.0
        %2938 = vmatpush1.msra.mxu0 0.0
        %2939 = vmatprep.mubr.f32.mxu0 0.0
        %2940 = vmatmul.mubr.f32.gmra.mrb[0].mxu0 %v2873
        %v2941 = vpop.f32.mrb[0].mxu0
        %v2942 = vadd.f32 0.0, %v2941
        %v2943 = vpop.f32.mrb[0].mxu0
        %v2944 = vadd.f32 0.0, %v2943
        %2945 = vdwg.mxu0
        %2948 = vrot.lane.b32.xlu0 %v2942, 32
        %v2949 = vpop.permute.xlu0 %2948
        %2950 = vrot.lane.b32.xlu0 %v2944, 32
        %v2951 = vpop.permute.xlu0 %2950
        %v2952 = vsel %vm459, %v2949, %v2951
        %v2955 = vadd.f32 %v2867, %v2949
        %v2956 = vadd.f32 %v2868, %v2952
        %2957 = vst.msk [vmem:[#allocation2] sm:$0xff] %vm465, %v2955
        %2958 = vst [vmem:[#allocation2 + $0x8] sm:$0xff] %v2956
        %v2959 = vld [vmem:[#allocation2] sm:$0xff]
        %v2960 = vld [vmem:[#allocation2 + $0x8] sm:$0xff]
        %v2961 = vld [vmem:[%s470] sm:$0xff]
        %v2962 = vld [vmem:[%s2685] sm:$0xff]
        %v2963 = vld [vmem:[%s2685 + $0x8] sm:$0xff]
        %v2965 = vsel %vm188, %v2961, 0
        %2967 = vmatprep.subr.mxu0 %v2963
        %2968 = vmatpush1.msra.mxu0 %v2962
        %2969 = vmatprep.subr.mxu0 0.0
        %2970 = vmatpush1.msra.mxu0 0.0
        %2971 = vmatprep.subr.mxu0 0.0
        %2972 = vmatpush1.msra.mxu0 0.0
        %2973 = vmatprep.subr.mxu0 0.0
        %2974 = vmatpush1.msra.mxu0 0.0
        %2975 = vmatprep.subr.mxu0 0.0
        %2976 = vmatpush1.msra.mxu0 0.0
        %2977 = vmatprep.subr.mxu0 0.0
        %2978 = vmatpush1.msra.mxu0 0.0
        %2979 = vmatprep.subr.mxu0 0.0
        %2980 = vmatpush1.msra.mxu0 0.0
        %2981 = vmatprep.subr.mxu0 0.0
        %2982 = vmatpush1.msra.mxu0 0.0
        %2983 = vmatprep.subr.mxu0 0.0
        %2984 = vmatpush1.msra.mxu0 0.0
        %2985 = vmatprep.subr.mxu0 0.0
        %2986 = vmatpush1.msra.mxu0 0.0
        %2987 = vmatprep.subr.mxu0 0.0
        %2988 = vmatpush1.msra.mxu0 0.0
        %2989 = vmatprep.subr.mxu0 0.0
        %2990 = vmatpush1.msra.mxu0 0.0
        %2991 = vmatprep.subr.mxu0 0.0
        %2992 = vmatpush1.msra.mxu0 0.0
        %2993 = vmatprep.subr.mxu0 0.0
        %2994 = vmatpush1.msra.mxu0 0.0
        %2995 = vmatprep.subr.mxu0 0.0
        %2996 = vmatpush1.msra.mxu0 0.0
        %2997 = vmatprep.subr.mxu0 0.0
        %2998 = vmatpush1.msra.mxu0 0.0
        %2999 = vmatprep.subr.mxu0 0.0
        %3000 = vmatpush1.msra.mxu0 0.0
        %3001 = vmatprep.subr.mxu0 0.0
        %3002 = vmatpush1.msra.mxu0 0.0
        %3003 = vmatprep.subr.mxu0 0.0
        %3004 = vmatpush1.msra.mxu0 0.0
        %3005 = vmatprep.subr.mxu0 0.0
        %3006 = vmatpush1.msra.mxu0 0.0
        %3007 = vmatprep.subr.mxu0 0.0
        %3008 = vmatpush1.msra.mxu0 0.0
        %3009 = vmatprep.subr.mxu0 0.0
        %3010 = vmatpush1.msra.mxu0 0.0
        %3011 = vmatprep.subr.mxu0 0.0
        %3012 = vmatpush1.msra.mxu0 0.0
        %3013 = vmatprep.subr.mxu0 0.0
        %3014 = vmatpush1.msra.mxu0 0.0
        %3015 = vmatprep.subr.mxu0 0.0
        %3016 = vmatpush1.msra.mxu0 0.0
        %3017 = vmatprep.subr.mxu0 0.0
        %3018 = vmatpush1.msra.mxu0 0.0
        %3019 = vmatprep.subr.mxu0 0.0
        %3020 = vmatpush1.msra.mxu0 0.0
        %3021 = vmatprep.subr.mxu0 0.0
        %3022 = vmatpush1.msra.mxu0 0.0
        %3023 = vmatprep.subr.mxu0 0.0
        %3024 = vmatpush1.msra.mxu0 0.0
        %3025 = vmatprep.subr.mxu0 0.0
        %3026 = vmatpush1.msra.mxu0 0.0
        %3027 = vmatprep.subr.mxu0 0.0
        %3028 = vmatpush1.msra.mxu0 0.0
        %3029 = vmatprep.subr.mxu0 0.0
        %3030 = vmatpush1.msra.mxu0 0.0
        %3031 = vmatprep.mubr.f32.mxu0 0.0
        %3032 = vmatmul.mubr.f32.gmra.mrb[0].mxu0 %v2965
        %v3033 = vpop.f32.mrb[0].mxu0
        %v3034 = vadd.f32 0.0, %v3033
        %v3035 = vpop.f32.mrb[0].mxu0
        %v3036 = vadd.f32 0.0, %v3035
        %3037 = vdwg.mxu0
        %3040 = vrot.lane.b32.xlu0 %v3034, 16
        %v3041 = vpop.permute.xlu0 %3040
        %3042 = vrot.lane.b32.xlu0 %v3036, 16
        %v3043 = vpop.permute.xlu0 %3042
        %v3044 = vsel %vm554, %v3041, %v3043
        %v3047 = vadd.f32 %v2959, %v3041
        %v3048 = vadd.f32 %v2960, %v3044
        %3049 = vst.msk [vmem:[#allocation2] sm:$0xff] %vm560, %v3047
        %3050 = vst [vmem:[#allocation2 + $0x8] sm:$0xff] %v3048
        %v3051 = vld [vmem:[#allocation2] sm:$0xff]
        %v3052 = vld [vmem:[#allocation2 + $0x8] sm:$0xff]
        %v3053 = vld [vmem:[%s565] sm:$0xff]
        %v3054 = vld [vmem:[%s2685] sm:$0xff]
        %v3055 = vld [vmem:[%s2685 + $0x8] sm:$0xff]
        %v3057 = vsel %vm188, %v3053, 0
        %3059 = vmatprep.subr.mxu0 %v3055
        %3060 = vmatpush1.msra.mxu0 %v3054
        %3061 = vmatprep.subr.mxu0 0.0
        %3062 = vmatpush1.msra.mxu0 0.0
        %3063 = vmatprep.subr.mxu0 0.0
        %3064 = vmatpush1.msra.mxu0 0.0
        %3065 = vmatprep.subr.mxu0 0.0
        %3066 = vmatpush1.msra.mxu0 0.0
        %3067 = vmatprep.subr.mxu0 0.0
        %3068 = vmatpush1.msra.mxu0 0.0
        %3069 = vmatprep.subr.mxu0 0.0
        %3070 = vmatpush1.msra.mxu0 0.0
        %3071 = vmatprep.subr.mxu0 0.0
        %3072 = vmatpush1.msra.mxu0 0.0
        %3073 = vmatprep.subr.mxu0 0.0
        %3074 = vmatpush1.msra.mxu0 0.0
        %3075 = vmatprep.subr.mxu0 0.0
        %3076 = vmatpush1.msra.mxu0 0.0
        %3077 = vmatprep.subr.mxu0 0.0
        %3078 = vmatpush1.msra.mxu0 0.0
        %3079 = vmatprep.subr.mxu0 0.0
        %3080 = vmatpush1.msra.mxu0 0.0
        %3081 = vmatprep.subr.mxu0 0.0
        %3082 = vmatpush1.msra.mxu0 0.0
        %3083 = vmatprep.subr.mxu0 0.0
        %3084 = vmatpush1.msra.mxu0 0.0
        %3085 = vmatprep.subr.mxu0 0.0
        %3086 = vmatpush1.msra.mxu0 0.0
        %3087 = vmatprep.subr.mxu0 0.0
        %3088 = vmatpush1.msra.mxu0 0.0
        %3089 = vmatprep.subr.mxu0 0.0
        %3090 = vmatpush1.msra.mxu0 0.0
        %3091 = vmatprep.subr.mxu0 0.0
        %3092 = vmatpush1.msra.mxu0 0.0
        %3093 = vmatprep.subr.mxu0 0.0
        %3094 = vmatpush1.msra.mxu0 0.0
        %3095 = vmatprep.subr.mxu0 0.0
        %3096 = vmatpush1.msra.mxu0 0.0
        %3097 = vmatprep.subr.mxu0 0.0
        %3098 = vmatpush1.msra.mxu0 0.0
        %3099 = vmatprep.subr.mxu0 0.0
        %3100 = vmatpush1.msra.mxu0 0.0
        %3101 = vmatprep.subr.mxu0 0.0
        %3102 = vmatpush1.msra.mxu0 0.0
        %3103 = vmatprep.subr.mxu0 0.0
        %3104 = vmatpush1.msra.mxu0 0.0
        %3105 = vmatprep.subr.mxu0 0.0
        %3106 = vmatpush1.msra.mxu0 0.0
        %3107 = vmatprep.subr.mxu0 0.0
        %3108 = vmatpush1.msra.mxu0 0.0
        %3109 = vmatprep.subr.mxu0 0.0
        %3110 = vmatpush1.msra.mxu0 0.0
        %3111 = vmatprep.subr.mxu0 0.0
        %3112 = vmatpush1.msra.mxu0 0.0
        %3113 = vmatprep.subr.mxu0 0.0
        %3114 = vmatpush1.msra.mxu0 0.0
        %3115 = vmatprep.subr.mxu0 0.0
        %3116 = vmatpush1.msra.mxu0 0.0
        %3117 = vmatprep.subr.mxu0 0.0
        %3118 = vmatpush1.msra.mxu0 0.0
        %3119 = vmatprep.subr.mxu0 0.0
        %3120 = vmatpush1.msra.mxu0 0.0
        %3121 = vmatprep.subr.mxu0 0.0
        %3122 = vmatpush1.msra.mxu0 0.0
        %3123 = vmatprep.mubr.f32.mxu0 0.0
        %3124 = vmatmul.mubr.f32.gmra.mrb[0].mxu0 %v3057
        %v3125 = vpop.f32.mrb[0].mxu0
        %v3126 = vadd.f32 0.0, %v3125
        %v3127 = vpop.f32.mrb[0].mxu0
        %v3128 = vadd.f32 0.0, %v3127
        %3129 = vdwg.mxu0
        %v3130 = vadd.f32 %v3051, %v3126
        %v3131 = vadd.f32 %v3052, %v3128
        %3132 = vst [vmem:[#allocation2] sm:$0xff] %v3130
        %3133 = vst [vmem:[#allocation2 + $0x8] sm:$0xff] %v3131
        %v3134 = vld [vmem:[#allocation2] sm:$0xff]
        %v3135 = vld [vmem:[#allocation2 + $0x8] sm:$0xff]
        %v3136 = vld [vmem:[%s649] sm:$0xff]
        %v3137 = vld [vmem:[%s2685] sm:$0xff]
        %v3138 = vld [vmem:[%s2685 + $0x8] sm:$0xff]
        %3141 = vrot.lane.b32.xlu0 %v3137, 112
        %v3142 = vpop.permute.xlu0 %3141
        %3143 = vrot.lane.b32.xlu0 %v3138, 112
        %v3144 = vpop.permute.xlu0 %3143
        %v3145 = vsel %vm659, %v3142, %v3144
        %v3149 = vsel %vm188, %v3136, 0
        %3151 = vmatprep.subr.mxu0 %v3144
        %3152 = vmatpush1.msra.mxu0 %v3145
        %3153 = vmatprep.subr.mxu0 0.0
        %3154 = vmatpush1.msra.mxu0 0.0
        %3155 = vmatprep.subr.mxu0 0.0
        %3156 = vmatpush1.msra.mxu0 0.0
        %3157 = vmatprep.subr.mxu0 0.0
        %3158 = vmatpush1.msra.mxu0 0.0
        %3159 = vmatprep.subr.mxu0 0.0
        %3160 = vmatpush1.msra.mxu0 0.0
        %3161 = vmatprep.subr.mxu0 0.0
        %3162 = vmatpush1.msra.mxu0 0.0
        %3163 = vmatprep.subr.mxu0 0.0
        %3164 = vmatpush1.msra.mxu0 0.0
        %3165 = vmatprep.subr.mxu0 0.0
        %3166 = vmatpush1.msra.mxu0 0.0
        %3167 = vmatprep.subr.mxu0 0.0
        %3168 = vmatpush1.msra.mxu0 0.0
        %3169 = vmatprep.subr.mxu0 0.0
        %3170 = vmatpush1.msra.mxu0 0.0
        %3171 = vmatprep.subr.mxu0 0.0
        %3172 = vmatpush1.msra.mxu0 0.0
        %3173 = vmatprep.subr.mxu0 0.0
        %3174 = vmatpush1.msra.mxu0 0.0
        %3175 = vmatprep.subr.mxu0 0.0
        %3176 = vmatpush1.msra.mxu0 0.0
        %3177 = vmatprep.subr.mxu0 0.0
        %3178 = vmatpush1.msra.mxu0 0.0
        %3179 = vmatprep.subr.mxu0 0.0
        %3180 = vmatpush1.msra.mxu0 0.0
        %3181 = vmatprep.subr.mxu0 0.0
        %3182 = vmatpush1.msra.mxu0 0.0
        %3183 = vmatprep.subr.mxu0 0.0
        %3184 = vmatpush1.msra.mxu0 0.0
        %3185 = vmatprep.subr.mxu0 0.0
        %3186 = vmatpush1.msra.mxu0 0.0
        %3187 = vmatprep.subr.mxu0 0.0
        %3188 = vmatpush1.msra.mxu0 0.0
        %3189 = vmatprep.subr.mxu0 0.0
        %3190 = vmatpush1.msra.mxu0 0.0
        %3191 = vmatprep.subr.mxu0 0.0
        %3192 = vmatpush1.msra.mxu0 0.0
        %3193 = vmatprep.subr.mxu0 0.0
        %3194 = vmatpush1.msra.mxu0 0.0
        %3195 = vmatprep.subr.mxu0 0.0
        %3196 = vmatpush1.msra.mxu0 0.0
        %3197 = vmatprep.subr.mxu0 0.0
        %3198 = vmatpush1.msra.mxu0 0.0
        %3199 = vmatprep.subr.mxu0 0.0
        %3200 = vmatpush1.msra.mxu0 0.0
        %3201 = vmatprep.subr.mxu0 0.0
        %3202 = vmatpush1.msra.mxu0 0.0
        %3203 = vmatprep.subr.mxu0 0.0
        %3204 = vmatpush1.msra.mxu0 0.0
        %3205 = vmatprep.subr.mxu0 0.0
        %3206 = vmatpush1.msra.mxu0 0.0
        %3207 = vmatprep.subr.mxu0 0.0
        %3208 = vmatpush1.msra.mxu0 0.0
        %3209 = vmatprep.subr.mxu0 0.0
        %3210 = vmatpush1.msra.mxu0 0.0
        %3211 = vmatprep.subr.mxu0 0.0
        %3212 = vmatpush1.msra.mxu0 0.0
        %3213 = vmatprep.subr.mxu0 0.0
        %3214 = vmatpush1.msra.mxu0 0.0
        %3215 = vmatprep.mubr.f32.mxu0 0.0
        %3216 = vmatmul.mubr.f32.gmra.mrb[0].mxu0 %v3149
        %v3217 = vpop.f32.mrb[0].mxu0
        %v3218 = vadd.f32 0.0, %v3217
        %v3219 = vpop.f32.mrb[0].mxu0
        %v3220 = vadd.f32 0.0, %v3219
        %3221 = vdwg.mxu0
        %v3222 = vadd.f32 %v3134, %v3218
        %v3223 = vadd.f32 %v3135, %v3220
        %3224 = vst [vmem:[#allocation2] sm:$0xff] %v3222
        %3225 = vst.msk [vmem:[#allocation2 + $0x8] sm:$0xff] %vm659, %v3223
        %v3226 = vld [vmem:[#allocation2] sm:$0xff]
        %v3227 = vld [vmem:[#allocation2 + $0x8] sm:$0xff]
        %v3228 = vld [vmem:[%s743] sm:$0xff]
        %v3229 = vld [vmem:[%s2685] sm:$0xff]
        %v3230 = vld [vmem:[%s2685 + $0x8] sm:$0xff]
        %3233 = vrot.lane.b32.xlu0 %v3229, 96
        %v3234 = vpop.permute.xlu0 %3233
        %3235 = vrot.lane.b32.xlu0 %v3230, 96
        %v3236 = vpop.permute.xlu0 %3235
        %v3237 = vsel %vm753, %v3234, %v3236
        %v3241 = vsel %vm188, %v3228, 0
        %3243 = vmatprep.subr.mxu0 %v3236
        %3244 = vmatpush1.msra.mxu0 %v3237
        %3245 = vmatprep.subr.mxu0 0.0
        %3246 = vmatpush1.msra.mxu0 0.0
        %3247 = vmatprep.subr.mxu0 0.0
        %3248 = vmatpush1.msra.mxu0 0.0
        %3249 = vmatprep.subr.mxu0 0.0
        %3250 = vmatpush1.msra.mxu0 0.0
        %3251 = vmatprep.subr.mxu0 0.0
        %3252 = vmatpush1.msra.mxu0 0.0
        %3253 = vmatprep.subr.mxu0 0.0
        %3254 = vmatpush1.msra.mxu0 0.0
        %3255 = vmatprep.subr.mxu0 0.0
        %3256 = vmatpush1.msra.mxu0 0.0
        %3257 = vmatprep.subr.mxu0 0.0
        %3258 = vmatpush1.msra.mxu0 0.0
        %3259 = vmatprep.subr.mxu0 0.0
        %3260 = vmatpush1.msra.mxu0 0.0
        %3261 = vmatprep.subr.mxu0 0.0
        %3262 = vmatpush1.msra.mxu0 0.0
        %3263 = vmatprep.subr.mxu0 0.0
        %3264 = vmatpush1.msra.mxu0 0.0
        %3265 = vmatprep.subr.mxu0 0.0
        %3266 = vmatpush1.msra.mxu0 0.0
        %3267 = vmatprep.subr.mxu0 0.0
        %3268 = vmatpush1.msra.mxu0 0.0
        %3269 = vmatprep.subr.mxu0 0.0
        %3270 = vmatpush1.msra.mxu0 0.0
        %3271 = vmatprep.subr.mxu0 0.0
        %3272 = vmatpush1.msra.mxu0 0.0
        %3273 = vmatprep.subr.mxu0 0.0
        %3274 = vmatpush1.msra.mxu0 0.0
        %3275 = vmatprep.subr.mxu0 0.0
        %3276 = vmatpush1.msra.mxu0 0.0
        %3277 = vmatprep.subr.mxu0 0.0
        %3278 = vmatpush1.msra.mxu0 0.0
        %3279 = vmatprep.subr.mxu0 0.0
        %3280 = vmatpush1.msra.mxu0 0.0
        %3281 = vmatprep.subr.mxu0 0.0
        %3282 = vmatpush1.msra.mxu0 0.0
        %3283 = vmatprep.subr.mxu0 0.0
        %3284 = vmatpush1.msra.mxu0 0.0
        %3285 = vmatprep.subr.mxu0 0.0
        %3286 = vmatpush1.msra.mxu0 0.0
        %3287 = vmatprep.subr.mxu0 0.0
        %3288 = vmatpush1.msra.mxu0 0.0
        %3289 = vmatprep.subr.mxu0 0.0
        %3290 = vmatpush1.msra.mxu0 0.0
        %3291 = vmatprep.subr.mxu0 0.0
        %3292 = vmatpush1.msra.mxu0 0.0
        %3293 = vmatprep.subr.mxu0 0.0
        %3294 = vmatpush1.msra.mxu0 0.0
        %3295 = vmatprep.subr.mxu0 0.0
        %3296 = vmatpush1.msra.mxu0 0.0
        %3297 = vmatprep.subr.mxu0 0.0
        %3298 = vmatpush1.msra.mxu0 0.0
        %3299 = vmatprep.subr.mxu0 0.0
        %3300 = vmatpush1.msra.mxu0 0.0
        %3301 = vmatprep.subr.mxu0 0.0
        %3302 = vmatpush1.msra.mxu0 0.0
        %3303 = vmatprep.subr.mxu0 0.0
        %3304 = vmatpush1.msra.mxu0 0.0
        %3305 = vmatprep.subr.mxu0 0.0
        %3306 = vmatpush1.msra.mxu0 0.0
        %3307 = vmatprep.mubr.f32.mxu0 0.0
        %3308 = vmatmul.mubr.f32.gmra.mrb[0].mxu0 %v3241
        %v3309 = vpop.f32.mrb[0].mxu0
        %v3310 = vadd.f32 0.0, %v3309
        %v3311 = vpop.f32.mrb[0].mxu0
        %v3312 = vadd.f32 0.0, %v3311
        %3313 = vdwg.mxu0
        %v3314 = vadd.f32 %v3226, %v3310
        %v3315 = vadd.f32 %v3227, %v3312
        %3316 = vst [vmem:[#allocation2] sm:$0xff] %v3314
        %3317 = vst.msk [vmem:[#allocation2 + $0x8] sm:$0xff] %vm753, %v3315
        %v3318 = vld [vmem:[#allocation2] sm:$0xff]
        %v3319 = vld [vmem:[#allocation2 + $0x8] sm:$0xff]
        %v3320 = vld [vmem:[%s837] sm:$0xff]
        %v3321 = vld [vmem:[%s2685] sm:$0xff]
        %v3322 = vld [vmem:[%s2685 + $0x8] sm:$0xff]
        %3325 = vrot.lane.b32.xlu0 %v3321, 80
        %v3326 = vpop.permute.xlu0 %3325
        %3327 = vrot.lane.b32.xlu0 %v3322, 80
        %v3328 = vpop.permute.xlu0 %3327
        %v3329 = vsel %vm847, %v3326, %v3328
        %v3333 = vsel %vm188, %v3320, 0
        %3335 = vmatprep.subr.mxu0 %v3328
        %3336 = vmatpush1.msra.mxu0 %v3329
        %3337 = vmatprep.subr.mxu0 0.0
        %3338 = vmatpush1.msra.mxu0 0.0
        %3339 = vmatprep.subr.mxu0 0.0
        %3340 = vmatpush1.msra.mxu0 0.0
        %3341 = vmatprep.subr.mxu0 0.0
        %3342 = vmatpush1.msra.mxu0 0.0
        %3343 = vmatprep.subr.mxu0 0.0
        %3344 = vmatpush1.msra.mxu0 0.0
        %3345 = vmatprep.subr.mxu0 0.0
        %3346 = vmatpush1.msra.mxu0 0.0
        %3347 = vmatprep.subr.mxu0 0.0
        %3348 = vmatpush1.msra.mxu0 0.0
        %3349 = vmatprep.subr.mxu0 0.0
        %3350 = vmatpush1.msra.mxu0 0.0
        %3351 = vmatprep.subr.mxu0 0.0
        %3352 = vmatpush1.msra.mxu0 0.0
        %3353 = vmatprep.subr.mxu0 0.0
        %3354 = vmatpush1.msra.mxu0 0.0
        %3355 = vmatprep.subr.mxu0 0.0
        %3356 = vmatpush1.msra.mxu0 0.0
        %3357 = vmatprep.subr.mxu0 0.0
        %3358 = vmatpush1.msra.mxu0 0.0
        %3359 = vmatprep.subr.mxu0 0.0
        %3360 = vmatpush1.msra.mxu0 0.0
        %3361 = vmatprep.subr.mxu0 0.0
        %3362 = vmatpush1.msra.mxu0 0.0
        %3363 = vmatprep.subr.mxu0 0.0
        %3364 = vmatpush1.msra.mxu0 0.0
        %3365 = vmatprep.subr.mxu0 0.0
        %3366 = vmatpush1.msra.mxu0 0.0
        %3367 = vmatprep.subr.mxu0 0.0
        %3368 = vmatpush1.msra.mxu0 0.0
        %3369 = vmatprep.subr.mxu0 0.0
        %3370 = vmatpush1.msra.mxu0 0.0
        %3371 = vmatprep.subr.mxu0 0.0
        %3372 = vmatpush1.msra.mxu0 0.0
        %3373 = vmatprep.subr.mxu0 0.0
        %3374 = vmatpush1.msra.mxu0 0.0
        %3375 = vmatprep.subr.mxu0 0.0
        %3376 = vmatpush1.msra.mxu0 0.0
        %3377 = vmatprep.subr.mxu0 0.0
        %3378 = vmatpush1.msra.mxu0 0.0
        %3379 = vmatprep.subr.mxu0 0.0
        %3380 = vmatpush1.msra.mxu0 0.0
        %3381 = vmatprep.subr.mxu0 0.0
        %3382 = vmatpush1.msra.mxu0 0.0
        %3383 = vmatprep.subr.mxu0 0.0
        %3384 = vmatpush1.msra.mxu0 0.0
        %3385 = vmatprep.subr.mxu0 0.0
        %3386 = vmatpush1.msra.mxu0 0.0
        %3387 = vmatprep.subr.mxu0 0.0
        %3388 = vmatpush1.msra.mxu0 0.0
        %3389 = vmatprep.subr.mxu0 0.0
        %3390 = vmatpush1.msra.mxu0 0.0
        %3391 = vmatprep.subr.mxu0 0.0
        %3392 = vmatpush1.msra.mxu0 0.0
        %3393 = vmatprep.subr.mxu0 0.0
        %3394 = vmatpush1.msra.mxu0 0.0
        %3395 = vmatprep.subr.mxu0 0.0
        %3396 = vmatpush1.msra.mxu0 0.0
        %3397 = vmatprep.subr.mxu0 0.0
        %3398 = vmatpush1.msra.mxu0 0.0
        %3399 = vmatprep.mubr.f32.mxu0 0.0
        %3400 = vmatmul.mubr.f32.gmra.mrb[0].mxu0 %v3333
        %v3401 = vpop.f32.mrb[0].mxu0
        %v3402 = vadd.f32 0.0, %v3401
        %v3403 = vpop.f32.mrb[0].mxu0
        %v3404 = vadd.f32 0.0, %v3403
        %3405 = vdwg.mxu0
        %v3406 = vadd.f32 %v3318, %v3402
        %v3407 = vadd.f32 %v3319, %v3404
        %3408 = vst [vmem:[#allocation2] sm:$0xff] %v3406
        %3409 = vst.msk [vmem:[#allocation2 + $0x8] sm:$0xff] %vm847, %v3407
        %v3410 = vld [vmem:[#allocation2] sm:$0xff]
        %v3411 = vld [vmem:[#allocation2 + $0x8] sm:$0xff]
        %v3412 = vld [vmem:[%s931] sm:$0xff]
        %v3413 = vld [vmem:[%s2685] sm:$0xff]
        %v3414 = vld [vmem:[%s2685 + $0x8] sm:$0xff]
        %3417 = vrot.lane.b32.xlu0 %v3413, 64
        %v3418 = vpop.permute.xlu0 %3417
        %3419 = vrot.lane.b32.xlu0 %v3414, 64
        %v3420 = vpop.permute.xlu0 %3419
        %v3421 = vsel %vm269, %v3418, %v3420
        %v3425 = vsel %vm188, %v3412, 0
        %3427 = vmatprep.subr.mxu0 %v3420
        %3428 = vmatpush1.msra.mxu0 %v3421
        %3429 = vmatprep.subr.mxu0 0.0
        %3430 = vmatpush1.msra.mxu0 0.0
        %3431 = vmatprep.subr.mxu0 0.0
        %3432 = vmatpush1.msra.mxu0 0.0
        %3433 = vmatprep.subr.mxu0 0.0
        %3434 = vmatpush1.msra.mxu0 0.0
        %3435 = vmatprep.subr.mxu0 0.0
        %3436 = vmatpush1.msra.mxu0 0.0
        %3437 = vmatprep.subr.mxu0 0.0
        %3438 = vmatpush1.msra.mxu0 0.0
        %3439 = vmatprep.subr.mxu0 0.0
        %3440 = vmatpush1.msra.mxu0 0.0
        %3441 = vmatprep.subr.mxu0 0.0
        %3442 = vmatpush1.msra.mxu0 0.0
        %3443 = vmatprep.subr.mxu0 0.0
        %3444 = vmatpush1.msra.mxu0 0.0
        %3445 = vmatprep.subr.mxu0 0.0
        %3446 = vmatpush1.msra.mxu0 0.0
        %3447 = vmatprep.subr.mxu0 0.0
        %3448 = vmatpush1.msra.mxu0 0.0
        %3449 = vmatprep.subr.mxu0 0.0
        %3450 = vmatpush1.msra.mxu0 0.0
        %3451 = vmatprep.subr.mxu0 0.0
        %3452 = vmatpush1.msra.mxu0 0.0
        %3453 = vmatprep.subr.mxu0 0.0
        %3454 = vmatpush1.msra.mxu0 0.0
        %3455 = vmatprep.subr.mxu0 0.0
        %3456 = vmatpush1.msra.mxu0 0.0
        %3457 = vmatprep.subr.mxu0 0.0
        %3458 = vmatpush1.msra.mxu0 0.0
        %3459 = vmatprep.subr.mxu0 0.0
        %3460 = vmatpush1.msra.mxu0 0.0
        %3461 = vmatprep.subr.mxu0 0.0
        %3462 = vmatpush1.msra.mxu0 0.0
        %3463 = vmatprep.subr.mxu0 0.0
        %3464 = vmatpush1.msra.mxu0 0.0
        %3465 = vmatprep.subr.mxu0 0.0
        %3466 = vmatpush1.msra.mxu0 0.0
        %3467 = vmatprep.subr.mxu0 0.0
        %3468 = vmatpush1.msra.mxu0 0.0
        %3469 = vmatprep.subr.mxu0 0.0
        %3470 = vmatpush1.msra.mxu0 0.0
        %3471 = vmatprep.subr.mxu0 0.0
        %3472 = vmatpush1.msra.mxu0 0.0
        %3473 = vmatprep.subr.mxu0 0.0
        %3474 = vmatpush1.msra.mxu0 0.0
        %3475 = vmatprep.subr.mxu0 0.0
        %3476 = vmatpush1.msra.mxu0 0.0
        %3477 = vmatprep.subr.mxu0 0.0
        %3478 = vmatpush1.msra.mxu0 0.0
        %3479 = vmatprep.subr.mxu0 0.0
        %3480 = vmatpush1.msra.mxu0 0.0
        %3481 = vmatprep.subr.mxu0 0.0
        %3482 = vmatpush1.msra.mxu0 0.0
        %3483 = vmatprep.subr.mxu0 0.0
        %3484 = vmatpush1.msra.mxu0 0.0
        %3485 = vmatprep.subr.mxu0 0.0
        %3486 = vmatpush1.msra.mxu0 0.0
        %3487 = vmatprep.subr.mxu0 0.0
        %3488 = vmatpush1.msra.mxu0 0.0
        %3489 = vmatprep.subr.mxu0 0.0
        %3490 = vmatpush1.msra.mxu0 0.0
        %3491 = vmatprep.mubr.f32.mxu0 0.0
        %3492 = vmatmul.mubr.f32.gmra.mrb[0].mxu0 %v3425
        %v3493 = vpop.f32.mrb[0].mxu0
        %v3494 = vadd.f32 0.0, %v3493
        %v3495 = vpop.f32.mrb[0].mxu0
        %v3496 = vadd.f32 0.0, %v3495
        %3497 = vdwg.mxu0
        %v3498 = vadd.f32 %v3410, %v3494
        %v3499 = vadd.f32 %v3411, %v3496
        %3500 = vst [vmem:[#allocation2] sm:$0xff] %v3498
        %3501 = vst.msk [vmem:[#allocation2 + $0x8] sm:$0xff] %vm269, %v3499
        %v3502 = vld [vmem:[#allocation2] sm:$0xff]
        %v3503 = vld [vmem:[#allocation2 + $0x8] sm:$0xff]
        %s3504 = scalar_lea.vmem %s166, 48 [#allocation3]
        %3505 = vst [vmem:[%s3504] sm:$0xff] %v3502
        %3506 = vst [vmem:[%s3504 + $0x8] sm:$0xff] %v3503
        %s3507 = sand.u32 %s93, 1
        %s3508 = scalar_lea.sflag [#allocation4], %s3507
        %s3509 = sand.u32 %s93, 1
        %s3510 = smul.addr %s3509, 64
        %s3511 = scalar_lea.vmem [#allocation3], %s3510
        // Predicated region
        $region33: #{tpu_custom_call.1} parent=31 // pred_check
          %p3512 = pneg %p103
        $region34: #{tpu_custom_call.1} parent=31 // pred_check_branch
          %3514 = sbr.rel (%p3512) target = $region36
        $region35: #{tpu_custom_call.1} parent=31 // pred_region
          %s3515 = smul.u32 4, %s17
          %s3517 = ssub.s32 1024, 1024
          %3518 = vsyncadd %s3508, %s3517
          %s3519 = smul.addr %s3515, 2
          %s3520 = smul.addr %s3519, 128
          %s3521 = scalar_lea.hbm %s3, %s3520
          %s3522 = sshll.u32 %s3511, 4
          %s3523 = int_to_ptr.vmem [resolvable:$true] %s3522
          %3528 = dma.vmem_to_hbm [thread:$0]  %s3523, 1024, %s3521, %s3508, 256, 256, 16
        $region36: #{tpu_custom_call.1} parent=31 // pred_fallthru
          _
      $region32: #{tpu_custom_call.1} parent=5 // pred_fallthru
        _
      %p3529 = scmp.le.s32.totalorder 2, %s12
      // Predicated region
      $region37: #{tpu_custom_call.1} parent=5 // pred_check
        %p3530 = pneg %p3529
      $region38: #{tpu_custom_call.1} parent=5 // pred_check_branch
        %3532 = sbr.rel (%p3530) target = $region40
      $region39: #{tpu_custom_call.1} parent=5 // pred_region
        %s3533 = ssub.s32 %s12, 2
        // Predicated region
        $region41: #{tpu_custom_call.1} parent=39 // pred_check
          %p3534 = pneg %p109
        $region42: #{tpu_custom_call.1} parent=39 // pred_check_branch
          %3536 = sbr.rel (%p3534) target = $region44
        $region43: #{tpu_custom_call.1} parent=39 // pred_region
          %s3537 = sand.u32 %s94, 1
          %s3538 = scalar_lea.sflag [#allocation4], %s3537
          %s3539 = sand.u32 %s94, 1
          %s3540 = smul.addr %s3539, 64
          %s3541 = scalar_lea.vmem [#allocation3], %s3540
          %3542 = dma.done %s3538, 1024
        $region44: #{tpu_custom_call.1} parent=39 // pred_fallthru
          _
      $region40: #{tpu_custom_call.1} parent=5 // pred_fallthru
        _
    $region6: #{tpu_custom_call.1} parent=1 // loop_footer
      %s16 = sadd.s32 1, %s12
    $region7: #{tpu_custom_call.1} parent=1 // loop_footer_branch
      %11 = sbr.rel target = $region3
    $region8: #{tpu_custom_call.1} parent=1 // loop_exit
      _
    %3543 = vsyncpa [#allocation4], 1
    %s3544 = scalar_lea.sflag [#allocation4], 1
    %3545 = vsyncpa %s3544, 1

</llo_original>
